<compile_context>
chip_gen: v7x
topology: tpu7x:2x2x1
jax: 0.10.0
libtpu: 0.0.40
codegen_flags: <defaults>
</compile_context>

<pallas_src>
import functools
import math

import jax
import jax.numpy as jnp
from jax.experimental import pallas as pl
from jax.experimental.pallas import tpu as pltpu


def mla_kernel(x_ref, wl_ref, bl_ref, wqkv_ref, bqkv_ref, wout_ref, bout_ref,
               out_ref, *, seq_len, num_heads):
    rows = x_ref.shape[0]            # rows = batch_tile * seq_len
    H = num_heads
    S = seq_len
    bt = rows // S

    f32 = jnp.float32
    bf16 = jnp.bfloat16

    # Latent projection (bf16 MXU operands, f32 accumulation + f32 bias).
    x = x_ref[...].astype(bf16)                                        # (rows, E)
    latent = jnp.dot(x, wl_ref[...], preferred_element_type=f32) + bl_ref[...]
    lat3 = jnp.broadcast_to(latent.astype(bf16)[None], (H,) + latent.shape)

    # Per-head Q/K/V projections as ONE batched dot_general each (head is the
    # leading batch dim; weights are already head-major so no in-kernel
    # reshapes / lane slices).  q is pre-scaled by 1/sqrt(hd) via its weights.
    def proj(idx):
        w = wqkv_ref[idx]            # (H, latent_dim, hd)  bf16
        b = bqkv_ref[idx]            # (H, 1, hd)           f32
        return jnp.einsum('hrl,hld->hrd', lat3, w,
                          preferred_element_type=f32) + b
    q3 = proj(0)                                                       # (H, rows, hd)
    k3 = proj(1)
    v3 = proj(2)

    # Scores for every (head, query-row, key-row) triple; rows belonging to a
    # different batch element are masked to -inf BEFORE max/exp so they
    # contribute exactly zero to the softmax denominator.
    s3 = jnp.einsum('hqd,hkd->hqk', q3.astype(bf16), k3.astype(bf16),
                    preferred_element_type=f32)                        # (H, rows, rows)
    if bt > 1:
        r_ids = jax.lax.broadcasted_iota(jnp.int32, (rows, rows), 0)
        c_ids = jax.lax.broadcasted_iota(jnp.int32, (rows, rows), 1)
        same_batch = (r_ids // S) == (c_ids // S)
        s3 = jnp.where(same_batch[None], s3, jnp.float32(-1e30))

    s3 = s3 - jnp.max(s3, axis=-1, keepdims=True)
    p3 = jnp.exp(s3)
    p3 = p3 / jnp.sum(p3, axis=-1, keepdims=True)      # exact reciprocal

    ctx3 = jnp.einsum('hqk,hkd->hqd', p3.astype(bf16), v3.astype(bf16),
                      preferred_element_type=f32)                      # (H, rows, hd)

    # Head-merge + (folded attn-out_proj @ final out_proj): batched matmul
    # over heads followed by a leading-axis sum.  The weight is zero-padded to
    # 128 output lanes so the store below is a full-lane (unmasked) store.
    out3 = jnp.einsum('hrd,hde->hre', ctx3.astype(bf16), wout_ref[...],
                      preferred_element_type=f32)                      # (H, rows, E_pad)
    out = jnp.sum(out3, axis=0) + bout_ref[...]
    out_ref[...] = out.astype(out_ref.dtype)


def mla_forward(x, params, *, num_heads, batch_tile=None):
    B, S, E = x.shape
    L = params["wl"].shape[0]        # latent_dim
    H = num_heads
    assert L % H == 0, "latent_dim must be divisible by num_heads"
    hd = L // H
    if batch_tile is None:
        # >= 2 grid steps so the ("parallel",) batch axis can be split across
        # both TensorCores on v7x; each step still feeds full matmuls.
        batch_tile = max(1, B // 2)
    assert B % batch_tile == 0
    steps = B // batch_tile
    rows = batch_tile * S
    E_pad = ((E + 127) // 128) * 128         # lane-dense output store

    f32, bf16 = jnp.float32, jnp.bfloat16
    scale = 1.0 / math.sqrt(hd)

    # ---- one-time wrapper-side weight prep ---------------------------------
    wl_t = params["wl"].T.astype(bf16)                       # (E, L)
    bl = params["bl"].astype(f32)[None, :]                   # (1, L)

    # Head-major Q/K/V weights (1/sqrt(hd) folded into q), stacked so the
    # kernel only indexes the leading dim.
    def head_major(w):                                       # (L, L) -> (H, L, hd)
        return w.reshape(H, hd, L).transpose(0, 2, 1)
    wqkv3 = jnp.stack([head_major(params["wq"] * scale),
                       head_major(params["wk"]),
                       head_major(params["wv"])], axis=0).astype(bf16)      # (3, H, L, hd)
    bqkv3 = jnp.stack([(params["bq"] * scale).reshape(H, 1, hd),
                       params["bk"].reshape(H, 1, hd),
                       params["bv"].reshape(H, 1, hd)], axis=0).astype(f32)  # (3, H, 1, hd)

    # Fold attn.out_proj into the final out_proj (exact):
    #   (ctx @ WaoT + bao) @ WoT + bo == ctx @ (WaoT @ WoT) + (bao @ WoT + bo)
    w_comb = params["wao"].T @ params["wo"].T                # (L, E) f32
    b_comb = params["bao"] @ params["wo"].T + params["bo"]   # (E,)  f32
    wout3 = jnp.zeros((H, hd, E_pad), f32).at[:, :, :E].set(
        w_comb.reshape(H, hd, E)).astype(bf16)               # (H, hd, E_pad)
    bout = jnp.zeros((1, E_pad), f32).at[:, :E].set(b_comb[None, :])

    # x stays f32 at the call boundary ((rows, E) f32 blocks map exactly onto
    # the (8, 128) tile); it is cast to bf16 in-kernel before the first MXU op.
    x2 = x.reshape(B * S, E).astype(f32)

    def invariant(shape):
        zeros = (0,) * len(shape)
        return pl.BlockSpec(shape, lambda i, _z=zeros: _z)

    kernel = functools.partial(mla_kernel, seq_len=S, num_heads=H)

    # Advisory cost hint for the XLA scheduler.
    flops = 2 * steps * (rows * E * L + 3 * H * rows * L * hd
                         + 2 * H * rows * rows * hd + H * rows * hd * E_pad)
    transcendentals = steps * H * rows * rows
    bytes_accessed = (x2.size * 4 + B * S * E_pad * 4
                      + 2 * (wl_t.size + wqkv3.size + wout3.size)
                      + 4 * (bl.size + bqkv3.size + bout.size))

    # Explicit scoped-VMEM budget: defaults are only 16 / 32 MiB on v5e / v6e;
    # cap at half the physical capacity so the same setting stays safe on
    # v7x's 64 MiB VMEM.  (Actual usage here is well under 1 MiB.)
    try:
        vmem_cap = pltpu.get_tpu_info().vmem_capacity_bytes
    except Exception:
        vmem_cap = 64 * 1024 * 1024
    vmem_limit = int(min(64 * 1024 * 1024, vmem_cap // 2))

    out_padded = pl.pallas_call(
        kernel,
        out_shape=jax.ShapeDtypeStruct((B * S, E_pad), f32),
        grid_spec=pltpu.PrefetchScalarGridSpec(
            num_scalar_prefetch=0,
            grid=(steps,),
            in_specs=[
                pl.BlockSpec((rows, E), lambda i: (i, 0)),            # x rows of this step
                invariant((E, L)), invariant((1, L)),                 # latent projection
                invariant((3, H, L, hd)), invariant((3, H, 1, hd)),   # head-major QKV
                invariant((H, hd, E_pad)), invariant((1, E_pad)),     # folded out proj
            ],
            out_specs=pl.BlockSpec((rows, E_pad), lambda i: (i, 0)),
        ),
        compiler_params=pltpu.CompilerParams(
            dimension_semantics=("parallel",),
            vmem_limit_bytes=vmem_limit),
        cost_estimate=pl.CostEstimate(
            flops=int(flops),
            transcendentals=int(transcendentals),
            bytes_accessed=int(bytes_accessed)),
    )(x2, wl_t, bl, wqkv3, bqkv3, wout3, bout)

    return out_padded[:, :E].reshape(B, S, E)


def mla_reference(x, params, *, num_heads):
    """Pure-JAX reference matching the PyTorch module (f32 end to end)."""
    B, S, E = x.shape
    L = params["wl"].shape[0]
    hd = L // num_heads
    latent = x @ params["wl"].T + params["bl"]
    q = latent @ params["wq"].T + params["bq"]
    k = latent @ params["wk"].T + params["bk"]
    v = latent @ params["wv"].T + params["bv"]
    qh = q.reshape(B, S, num_heads, hd).transpose(0, 2, 1, 3)
    kh = k.reshape(B, S, num_heads, hd).transpose(0, 2, 1, 3)
    vh = v.reshape(B, S, num_heads, hd).transpose(0, 2, 1, 3)
    scores = jnp.einsum("bhqd,bhkd->bhqk", qh, kh) / jnp.sqrt(jnp.float32(hd))
    p = jax.nn.softmax(scores, axis=-1)
    ctx = jnp.einsum("bhqk,bhkd->bhqd", p, vh)
    ctx = ctx.transpose(0, 2, 1, 3).reshape(B, S, L)
    attn_out = ctx @ params["wao"].T + params["bao"]
    return attn_out @ params["wo"].T + params["bo"]


def init_params(key, embed_dim, latent_dim):
    ks = jax.random.split(key, 7)
    scale = 0.05

    def w(k, shape):
        return (scale * jax.random.normal(k, shape)).astype(jnp.float32)

    in_proj = w(ks[1], (3 * latent_dim, latent_dim))
    in_bias = w(ks[2], (3 * latent_dim,))
    return {
        "wl": w(ks[0], (latent_dim, embed_dim)),
        "bl": w(ks[6], (latent_dim,)),
        "wq": in_proj[:latent_dim],
        "bq": in_bias[:latent_dim],
        "wk": in_proj[latent_dim:2 * latent_dim],
        "bk": in_bias[latent_dim:2 * latent_dim],
        "wv": in_proj[2 * latent_dim:],
        "bv": in_bias[2 * latent_dim:],
        "wao": w(ks[3], (latent_dim, latent_dim)),
        "bao": w(ks[4], (latent_dim,)),
        "wo": w(ks[5], (embed_dim, latent_dim)),
        "bo": jnp.zeros((embed_dim,), jnp.float32),
    }


if __name__ == "__main__":
    batch, seq, embed_dim = 2, 8, 32
    latent_dim, num_heads = 64, 8

    key = jax.random.PRNGKey(0)
    kx, kp = jax.random.split(key)
    x = jax.random.normal(kx, (batch, seq, embed_dim), dtype=jnp.float32)
    params = init_params(kp, embed_dim, latent_dim)

    out = mla_forward(x, params, num_heads=num_heads)
    out = jax.block_until_ready(out)

    ref = mla_reference(x, params, num_heads=num_heads)
    assert out.shape == (batch, seq, embed_dim)
    max_err = float(jnp.max(jnp.abs(out - ref)))
    # bf16 MXU operands (f32 accumulation / f32 softmax) vs. an f32 reference:
    # observed error is a few 1e-4 at these magnitudes; 1e-2 gives wide margin.
    assert jnp.allclose(out, ref, atol=1e-2, rtol=1e-2), f"max_err={max_err}"

    print("KERNEL_OK")
</pallas_src>

<mosaic_0001>
module attributes {stable_mosaic.version = 11 : i64} {
  func.func @mla_kernel(%arg0: i32, %arg1: memref<8x32xf32, #tpu.memory_space<vmem>>, %arg2: memref<32x64xbf16, #tpu.memory_space<vmem>>, %arg3: memref<1x64xf32, #tpu.memory_space<vmem>>, %arg4: memref<3x8x64x8xbf16, #tpu.memory_space<vmem>>, %arg5: memref<3x8x1x8xf32, #tpu.memory_space<vmem>>, %arg6: memref<8x8x128xbf16, #tpu.memory_space<vmem>>, %arg7: memref<1x128xf32, #tpu.memory_space<vmem>>, %arg8: memref<8x128xf32, #tpu.memory_space<vmem>>) attributes {dimension_semantics = [#tpu.dimension_semantics<parallel>], iteration_bounds = array<i64: 2>, scalar_prefetch = 0 : i64, scratch_operands = 0 : i64, tpu.core_type = #tpu.core_type<tc>, window_params = [{transform_indices = @transform_0, window_bounds = array<i64: 8, 32>}, {pipeline_mode = #tpu.pipeline_mode<synchronous>, transform_indices = @transform_1, window_bounds = array<i64: 32, 64>}, {pipeline_mode = #tpu.pipeline_mode<synchronous>, transform_indices = @transform_2, window_bounds = array<i64: 1, 64>}, {pipeline_mode = #tpu.pipeline_mode<synchronous>, transform_indices = @transform_3, window_bounds = array<i64: 3, 8, 64, 8>}, {pipeline_mode = #tpu.pipeline_mode<synchronous>, transform_indices = @transform_4, window_bounds = array<i64: 3, 8, 1, 8>}, {pipeline_mode = #tpu.pipeline_mode<synchronous>, transform_indices = @transform_5, window_bounds = array<i64: 8, 8, 128>}, {pipeline_mode = #tpu.pipeline_mode<synchronous>, transform_indices = @transform_6, window_bounds = array<i64: 1, 128>}, {transform_indices = @transform_7, window_bounds = array<i64: 8, 128>}]} {
    %c0 = arith.constant 0 : index
    %c0_0 = arith.constant 0 : index
    %0 = vector.load %arg1[%c0, %c0_0] : memref<8x32xf32, #tpu.memory_space<vmem>>, vector<8x32xf32>
    %1 = arith.truncf %0 : vector<8x32xf32> to vector<8x32xbf16>
    %c0_1 = arith.constant 0 : index
    %c0_2 = arith.constant 0 : index
    %2 = vector.load %arg2[%c0_1, %c0_2] : memref<32x64xbf16, #tpu.memory_space<vmem>>, vector<32x64xbf16>
    %cst = arith.constant dense<0.000000e+00> : vector<8x64xf32>
    %3 = tpu.matmul %1, %2, %cst {dimension_numbers = #tpu.dot_dimension_numbers<[1], [0], [0], [1], [0, 0, 1, 1], [], []>} : vector<8x32xbf16>, vector<32x64xbf16>, vector<8x64xf32> -> vector<8x64xf32>
    %c0_3 = arith.constant 0 : index
    %c0_4 = arith.constant 0 : index
    %4 = vector.load %arg3[%c0_3, %c0_4] : memref<1x64xf32, #tpu.memory_space<vmem>>, vector<1x64xf32>
    %5 = vector.broadcast %4 : vector<1x64xf32> to vector<8x64xf32>
    %6 = arith.addf %3, %5 : vector<8x64xf32>
    %7 = arith.truncf %6 : vector<8x64xf32> to vector<8x64xbf16>
    %8 = vector.shape_cast %7 : vector<8x64xbf16> to vector<1x8x64xbf16>
    %9 = vector.shape_cast %8 : vector<1x8x64xbf16> to vector<1x8x64xbf16>
    %10 = vector.broadcast %9 : vector<1x8x64xbf16> to vector<8x8x64xbf16>
    %c0_5 = arith.constant 0 : index
    %c0_6 = arith.constant 0 : index
    %c0_7 = arith.constant 0 : index
    %c0_8 = arith.constant 0 : index
    %11 = vector.load %arg4[%c0_5, %c0_6, %c0_7, %c0_8] : memref<3x8x64x8xbf16, #tpu.memory_space<vmem>>, vector<1x8x64x8xbf16>
    %12 = vector.shape_cast %11 : vector<1x8x64x8xbf16> to vector<8x64x8xbf16>
    %c0_9 = arith.constant 0 : index
    %c0_10 = arith.constant 0 : index
    %c0_11 = arith.constant 0 : index
    %c0_12 = arith.constant 0 : index
    %13 = vector.load %arg5[%c0_9, %c0_10, %c0_11, %c0_12] : memref<3x8x1x8xf32, #tpu.memory_space<vmem>>, vector<1x8x1x8xf32>
    %14 = vector.shape_cast %13 : vector<1x8x1x8xf32> to vector<8x1x8xf32>
    "tpu.trace_start"() <{level = 10 : i32, message = "hrl,hld->hrd"}> : () -> ()
    %cst_13 = arith.constant dense<0.000000e+00> : vector<8x8x8xf32>
    %15 = tpu.matmul %10, %12, %cst_13 {dimension_numbers = #tpu.dot_dimension_numbers<[2], [1], [1], [2], [0, 0, 0, 1, 1, 2], [0], [0]>} : vector<8x8x64xbf16>, vector<8x64x8xbf16>, vector<8x8x8xf32> -> vector<8x8x8xf32>
    "tpu.trace_stop"() : () -> ()
    %16 = vector.broadcast %14 : vector<8x1x8xf32> to vector<8x8x8xf32>
    %17 = arith.addf %15, %16 : vector<8x8x8xf32>
    %c1 = arith.constant 1 : index
    %c0_14 = arith.constant 0 : index
    %c0_15 = arith.constant 0 : index
    %c0_16 = arith.constant 0 : index
    %18 = vector.load %arg4[%c1, %c0_14, %c0_15, %c0_16] : memref<3x8x64x8xbf16, #tpu.memory_space<vmem>>, vector<1x8x64x8xbf16>
    %19 = vector.shape_cast %18 : vector<1x8x64x8xbf16> to vector<8x64x8xbf16>
    %c1_17 = arith.constant 1 : index
    %c0_18 = arith.constant 0 : index
    %c0_19 = arith.constant 0 : index
    %c0_20 = arith.constant 0 : index
    %20 = vector.load %arg5[%c1_17, %c0_18, %c0_19, %c0_20] : memref<3x8x1x8xf32, #tpu.memory_space<vmem>>, vector<1x8x1x8xf32>
    %21 = vector.shape_cast %20 : vector<1x8x1x8xf32> to vector<8x1x8xf32>
    "tpu.trace_start"() <{level = 10 : i32, message = "hrl,hld->hrd"}> : () -> ()
    %cst_21 = arith.constant dense<0.000000e+00> : vector<8x8x8xf32>
    %22 = tpu.matmul %10, %19, %cst_21 {dimension_numbers = #tpu.dot_dimension_numbers<[2], [1], [1], [2], [0, 0, 0, 1, 1, 2], [0], [0]>} : vector<8x8x64xbf16>, vector<8x64x8xbf16>, vector<8x8x8xf32> -> vector<8x8x8xf32>
    "tpu.trace_stop"() : () -> ()
    %23 = vector.broadcast %21 : vector<8x1x8xf32> to vector<8x8x8xf32>
    %24 = arith.addf %22, %23 : vector<8x8x8xf32>
    %c2 = arith.constant 2 : index
    %c0_22 = arith.constant 0 : index
    %c0_23 = arith.constant 0 : index
    %c0_24 = arith.constant 0 : index
    %25 = vector.load %arg4[%c2, %c0_22, %c0_23, %c0_24] : memref<3x8x64x8xbf16, #tpu.memory_space<vmem>>, vector<1x8x64x8xbf16>
    %26 = vector.shape_cast %25 : vector<1x8x64x8xbf16> to vector<8x64x8xbf16>
    %c2_25 = arith.constant 2 : index
    %c0_26 = arith.constant 0 : index
    %c0_27 = arith.constant 0 : index
    %c0_28 = arith.constant 0 : index
    %27 = vector.load %arg5[%c2_25, %c0_26, %c0_27, %c0_28] : memref<3x8x1x8xf32, #tpu.memory_space<vmem>>, vector<1x8x1x8xf32>
    %28 = vector.shape_cast %27 : vector<1x8x1x8xf32> to vector<8x1x8xf32>
    "tpu.trace_start"() <{level = 10 : i32, message = "hrl,hld->hrd"}> : () -> ()
    %cst_29 = arith.constant dense<0.000000e+00> : vector<8x8x8xf32>
    %29 = tpu.matmul %10, %26, %cst_29 {dimension_numbers = #tpu.dot_dimension_numbers<[2], [1], [1], [2], [0, 0, 0, 1, 1, 2], [0], [0]>} : vector<8x8x64xbf16>, vector<8x64x8xbf16>, vector<8x8x8xf32> -> vector<8x8x8xf32>
    "tpu.trace_stop"() : () -> ()
    %30 = vector.broadcast %28 : vector<8x1x8xf32> to vector<8x8x8xf32>
    %31 = arith.addf %29, %30 : vector<8x8x8xf32>
    %32 = arith.truncf %17 : vector<8x8x8xf32> to vector<8x8x8xbf16>
    %33 = arith.truncf %24 : vector<8x8x8xf32> to vector<8x8x8xbf16>
    "tpu.trace_start"() <{level = 10 : i32, message = "hqd,hkd->hqk"}> : () -> ()
    %cst_30 = arith.constant dense<0.000000e+00> : vector<8x8x8xf32>
    %34 = tpu.matmul %32, %33, %cst_30 {dimension_numbers = #tpu.dot_dimension_numbers<[2], [2], [1], [1], [0, 0, 0, 1, 1, 1], [0], [0]>} : vector<8x8x8xbf16>, vector<8x8x8xbf16>, vector<8x8x8xf32> -> vector<8x8x8xf32>
    "tpu.trace_stop"() : () -> ()
    %cst_31 = arith.constant dense<0xFF800000> : vector<8x8xf32>
    %35 = vector.multi_reduction <maximumf>, %34, %cst_31 [2] : vector<8x8x8xf32> to vector<8x8xf32>
    %36 = vector.shape_cast %35 : vector<8x8xf32> to vector<8x8x1xf32>
    %37 = vector.broadcast %36 : vector<8x8x1xf32> to vector<8x8x8xf32>
    %38 = arith.subf %34, %37 : vector<8x8x8xf32>
    %39 = math.exp %38 : vector<8x8x8xf32>
    %cst_32 = arith.constant dense<0.000000e+00> : vector<8x8xf32>
    %40 = vector.multi_reduction <add>, %39, %cst_32 [2] : vector<8x8x8xf32> to vector<8x8xf32>
    %41 = vector.shape_cast %40 : vector<8x8xf32> to vector<8x8x1xf32>
    %42 = vector.broadcast %41 : vector<8x8x1xf32> to vector<8x8x8xf32>
    %43 = arith.divf %39, %42 : vector<8x8x8xf32>
    %44 = arith.truncf %43 : vector<8x8x8xf32> to vector<8x8x8xbf16>
    %45 = arith.truncf %31 : vector<8x8x8xf32> to vector<8x8x8xbf16>
    "tpu.trace_start"() <{level = 10 : i32, message = "hqk,hkd->hqd"}> : () -> ()
    %cst_33 = arith.constant dense<0.000000e+00> : vector<8x8x8xf32>
    %46 = tpu.matmul %44, %45, %cst_33 {dimension_numbers = #tpu.dot_dimension_numbers<[2], [1], [1], [2], [0, 0, 0, 1, 1, 2], [0], [0]>} : vector<8x8x8xbf16>, vector<8x8x8xbf16>, vector<8x8x8xf32> -> vector<8x8x8xf32>
    "tpu.trace_stop"() : () -> ()
    %47 = arith.truncf %46 : vector<8x8x8xf32> to vector<8x8x8xbf16>
    %c0_34 = arith.constant 0 : index
    %c0_35 = arith.constant 0 : index
    %c0_36 = arith.constant 0 : index
    %48 = vector.load %arg6[%c0_34, %c0_35, %c0_36] : memref<8x8x128xbf16, #tpu.memory_space<vmem>>, vector<8x8x128xbf16>
    "tpu.trace_start"() <{level = 10 : i32, message = "hrd,hde->hre"}> : () -> ()
    %cst_37 = arith.constant dense<0.000000e+00> : vector<8x8x128xf32>
    %49 = tpu.matmul %47, %48, %cst_37 {dimension_numbers = #tpu.dot_dimension_numbers<[2], [1], [1], [2], [0, 0, 0, 1, 1, 2], [0], [0]>} : vector<8x8x8xbf16>, vector<8x8x128xbf16>, vector<8x8x128xf32> -> vector<8x8x128xf32>
    "tpu.trace_stop"() : () -> ()
    %cst_38 = arith.constant dense<0.000000e+00> : vector<8x128xf32>
    %50 = vector.multi_reduction <add>, %49, %cst_38 [0] : vector<8x8x128xf32> to vector<8x128xf32>
    %c0_39 = arith.constant 0 : index
    %c0_40 = arith.constant 0 : index
    %51 = vector.load %arg7[%c0_39, %c0_40] : memref<1x128xf32, #tpu.memory_space<vmem>>, vector<1x128xf32>
    %52 = vector.broadcast %51 : vector<1x128xf32> to vector<8x128xf32>
    %53 = arith.addf %50, %52 : vector<8x128xf32>
    %c0_41 = arith.constant 0 : index
    %c0_42 = arith.constant 0 : index
    %54 = vector.load %arg8[%c0_41, %c0_42] : memref<8x128xf32, #tpu.memory_space<vmem>>, vector<8x128xf32>
    tpu.vector_store %arg8[%c0_41, %c0_42], %53 {strides = array<i32>} : memref<8x128xf32, #tpu.memory_space<vmem>>, vector<8x128xf32>,
    return
  }
  func.func @transform_0(%arg0: i32) -> (i32, i32) {
    %c0_i32 = arith.constant 0 : i32
    %c0_i32_0 = arith.constant 0 : i32
    return %arg0, %c0_i32 : i32, i32
  }
  func.func @transform_1(%arg0: i32) -> (i32, i32) {
    %c0_i32 = arith.constant 0 : i32
    %c0_i32_0 = arith.constant 0 : i32
    %c0_i32_1 = arith.constant 0 : i32
    return %c0_i32, %c0_i32_0 : i32, i32
  }
  func.func @transform_2(%arg0: i32) -> (i32, i32) {
    %c0_i32 = arith.constant 0 : i32
    %c0_i32_0 = arith.constant 0 : i32
    %c0_i32_1 = arith.constant 0 : i32
    return %c0_i32, %c0_i32_0 : i32, i32
  }
  func.func @transform_3(%arg0: i32) -> (i32, i32, i32, i32) {
    %c0_i32 = arith.constant 0 : i32
    %c0_i32_0 = arith.constant 0 : i32
    %c0_i32_1 = arith.constant 0 : i32
    %c0_i32_2 = arith.constant 0 : i32
    %c0_i32_3 = arith.constant 0 : i32
    return %c0_i32, %c0_i32_0, %c0_i32_1, %c0_i32_2 : i32, i32, i32, i32
  }
  func.func @transform_4(%arg0: i32) -> (i32, i32, i32, i32) {
    %c0_i32 = arith.constant 0 : i32
    %c0_i32_0 = arith.constant 0 : i32
    %c0_i32_1 = arith.constant 0 : i32
    %c0_i32_2 = arith.constant 0 : i32
    %c0_i32_3 = arith.constant 0 : i32
    return %c0_i32, %c0_i32_0, %c0_i32_1, %c0_i32_2 : i32, i32, i32, i32
  }
  func.func @transform_5(%arg0: i32) -> (i32, i32, i32) {
    %c0_i32 = arith.constant 0 : i32
    %c0_i32_0 = arith.constant 0 : i32
    %c0_i32_1 = arith.constant 0 : i32
    %c0_i32_2 = arith.constant 0 : i32
    return %c0_i32, %c0_i32_0, %c0_i32_1 : i32, i32, i32
  }
  func.func @transform_6(%arg0: i32) -> (i32, i32) {
    %c0_i32 = arith.constant 0 : i32
    %c0_i32_0 = arith.constant 0 : i32
    %c0_i32_1 = arith.constant 0 : i32
    return %c0_i32, %c0_i32_0 : i32, i32
  }
  func.func @transform_7(%arg0: i32) -> (i32, i32) {
    %c0_i32 = arith.constant 0 : i32
    %c0_i32_0 = arith.constant 0 : i32
    return %arg0, %c0_i32 : i32, i32
  }
}

</mosaic_0001>

<llo_original>
// kernel: tpu_custom_call.1
$region0: #{tpu_custom_call.1}
  #allocation0 [shape = 'u32[]', space=smem, size = 0x4, offset = 0x4, fixed_abs, tag = 'smem constant byte address 0x4 - core index']
  #allocation1 [shape = 'u32[144,128]{1,0:T(1,128)}', space=vmem, size = 0x12000, scoped, tag = 'internal scratch']
  %s0 = inlined_call_operand.vmem [shape: f32[16,32], index: 0, kind: input, shape index: {}]
  %s1 = inlined_call_operand.vmem [shape: bf16[32,64], index: 1, kind: input, shape index: {}]
  %s2 = inlined_call_operand.vmem [shape: f32[1,64], index: 2, kind: input, shape index: {}]
  %s3 = inlined_call_operand.vmem [shape: bf16[3,8,64,8], index: 3, kind: input, shape index: {}]
  %s4 = inlined_call_operand.vmem [shape: f32[3,8,1,8], index: 4, kind: input, shape index: {}]
  %s5 = inlined_call_operand.vmem [shape: bf16[8,8,128], index: 5, kind: input, shape index: {}]
  %s6 = inlined_call_operand.vmem [shape: f32[1,128], index: 6, kind: input, shape index: {}]
  %s7 = inlined_call_operand.hbm [shape: f32[16,128], index: 7, kind: output, shape index: {}]
  %s8 = sld [smem:[#allocation0]]
  $region61: #{tpu_custom_call.1} parent=0
    _
  %s10 = ssub.s32 1, %s8
  %s11 = scalar_select 0, %s10, %s8
  $region1: #{tpu_custom_call.1} parent=0
    #allocation2 [shape = 'u8[8192]{0}', space=vmem, size = 0x2000, scoped, tag = 'output window, operand 0']
    #allocation3 [shape = 's32[2]{0}', space=sflag, size = 0x8, scoped, tag = 'scoped memory for tpu_custom_call.1']
    %12 = vsyncpa [#allocation3], 0
    %s13 = scalar_lea.sflag [#allocation3], 1
    %14 = vsyncpa %s13, 0
    loop: start=0, step=1, limit=4
    $region2: #{tpu_custom_call.1} parent=1 // loop_pre_header
      _
    $region3: #{tpu_custom_call.1} parent=1 // loop_header
      %s16 = sphi 0, %s20
      %p17 = scmp.ge.s32.totalorder %s16, 4
      %s26 = sphi 0, %s28
      %s29 = sphi 0, %s26
      %s30 = sphi 0, %s29
      %s46 = sphi 0, %s30
      %s50 = sphi 0, %s50
      %s52 = sphi 0, %s50
      %s53 = sphi 0, %s52
      %s67 = sphi 0, %s53
      %s71 = sphi 0, %s71
      %s73 = sphi 0, %s71
      %s74 = sphi 0, %s73
      %s88 = sphi 0, %s74
      %s92 = sphi 0, %s92
      %s94 = sphi 0, %s92
      %s95 = sphi 0, %s94
      %s109 = sphi 0, %s95
      %s113 = sphi 0, %s113
      %s115 = sphi 0, %s113
      %s116 = sphi 0, %s115
      %s130 = sphi 0, %s116
      %s134 = sphi 0, %s134
      %s136 = sphi 0, %s134
      %s137 = sphi 0, %s136
      %s151 = sphi 0, %s137
      %s155 = sphi 0, %s155
      %s157 = sphi 0, %s155
      %s158 = sphi 0, %s157
      %s172 = sphi 0, %s158
      %s178 = sphi 0, %s180
      %s181 = sphi 0, %s178
      %s182 = sphi 0, %s181
      %s198 = sphi 0, %s182
    $region4: #{tpu_custom_call.1} parent=1 // loop_header_branch
      %19 = sbr.rel (%p17) target = $region8
    $region5: #{tpu_custom_call.1} parent=1 // loop_body
      %s21 = ssub.s32 %s16, 1
      %s22 = ssub.s32 %s16, 2
      %s23 = sadd.s32 %s16, 1
      %s24 = ssub.s32 %s16, %s23
      %p25 = scmp.eq.s32.totalorder %s24, 0
      %s27 = sadd.s32 %s26, 1
      %s28 = scalar_select %p25, %s26, %s27
      %p31 = pneg %p25
      %p32 = scmp.eq.s32.totalorder %s16, 1
      %p33 = por %p31, %p32
      %p34 = scmp.ne.s32.totalorder %s26, %s29
      %p35 = scmp.eq.s32.totalorder %s16, 0
      %p36 = por %p34, %p35
      %p37 = scmp.ne.s32.totalorder %s26, %s29
      %p38 = scmp.eq.s32.totalorder %s21, 1
      %p39 = por %p37, %p38
      %p40 = scmp.ne.s32.totalorder %s29, %s30
      %p41 = scmp.eq.s32.totalorder %s21, 0
      %p42 = por %p40, %p41
      %p43 = scmp.ne.s32.totalorder %s29, %s30
      %p44 = scmp.eq.s32.totalorder %s22, 1
      %p45 = por %p43, %p44
      %p47 = scmp.ne.s32.totalorder %s30, %s46
      %p48 = scmp.eq.s32.totalorder %s22, 0
      %p49 = por %p47, %p48
      %s51 = sadd.s32 %s50, 1
      %p54 = scmp.eq.s32.totalorder %s16, 1
      %p55 = scmp.ne.s32.totalorder %s50, %s52
      %p56 = scmp.eq.s32.totalorder %s16, 0
      %p57 = por %p55, %p56
      %p58 = scmp.ne.s32.totalorder %s50, %s52
      %p59 = scmp.eq.s32.totalorder %s21, 1
      %p60 = por %p58, %p59
      %p61 = scmp.ne.s32.totalorder %s52, %s53
      %p62 = scmp.eq.s32.totalorder %s21, 0
      %p63 = por %p61, %p62
      %p64 = scmp.ne.s32.totalorder %s52, %s53
      %p65 = scmp.eq.s32.totalorder %s22, 1
      %p66 = por %p64, %p65
      %p68 = scmp.ne.s32.totalorder %s53, %s67
      %p69 = scmp.eq.s32.totalorder %s22, 0
      %p70 = por %p68, %p69
      %s72 = sadd.s32 %s71, 1
      %p75 = scmp.eq.s32.totalorder %s16, 1
      %p76 = scmp.ne.s32.totalorder %s71, %s73
      %p77 = scmp.eq.s32.totalorder %s16, 0
      %p78 = por %p76, %p77
      %p79 = scmp.ne.s32.totalorder %s71, %s73
      %p80 = scmp.eq.s32.totalorder %s21, 1
      %p81 = por %p79, %p80
      %p82 = scmp.ne.s32.totalorder %s73, %s74
      %p83 = scmp.eq.s32.totalorder %s21, 0
      %p84 = por %p82, %p83
      %p85 = scmp.ne.s32.totalorder %s73, %s74
      %p86 = scmp.eq.s32.totalorder %s22, 1
      %p87 = por %p85, %p86
      %p89 = scmp.ne.s32.totalorder %s74, %s88
      %p90 = scmp.eq.s32.totalorder %s22, 0
      %p91 = por %p89, %p90
      %s93 = sadd.s32 %s92, 1
      %p96 = scmp.eq.s32.totalorder %s16, 1
      %p97 = scmp.ne.s32.totalorder %s92, %s94
      %p98 = scmp.eq.s32.totalorder %s16, 0
      %p99 = por %p97, %p98
      %p100 = scmp.ne.s32.totalorder %s92, %s94
      %p101 = scmp.eq.s32.totalorder %s21, 1
      %p102 = por %p100, %p101
      %p103 = scmp.ne.s32.totalorder %s94, %s95
      %p104 = scmp.eq.s32.totalorder %s21, 0
      %p105 = por %p103, %p104
      %p106 = scmp.ne.s32.totalorder %s94, %s95
      %p107 = scmp.eq.s32.totalorder %s22, 1
      %p108 = por %p106, %p107
      %p110 = scmp.ne.s32.totalorder %s95, %s109
      %p111 = scmp.eq.s32.totalorder %s22, 0
      %p112 = por %p110, %p111
      %s114 = sadd.s32 %s113, 1
      %p117 = scmp.eq.s32.totalorder %s16, 1
      %p118 = scmp.ne.s32.totalorder %s113, %s115
      %p119 = scmp.eq.s32.totalorder %s16, 0
      %p120 = por %p118, %p119
      %p121 = scmp.ne.s32.totalorder %s113, %s115
      %p122 = scmp.eq.s32.totalorder %s21, 1
      %p123 = por %p121, %p122
      %p124 = scmp.ne.s32.totalorder %s115, %s116
      %p125 = scmp.eq.s32.totalorder %s21, 0
      %p126 = por %p124, %p125
      %p127 = scmp.ne.s32.totalorder %s115, %s116
      %p128 = scmp.eq.s32.totalorder %s22, 1
      %p129 = por %p127, %p128
      %p131 = scmp.ne.s32.totalorder %s116, %s130
      %p132 = scmp.eq.s32.totalorder %s22, 0
      %p133 = por %p131, %p132
      %s135 = sadd.s32 %s134, 1
      %p138 = scmp.eq.s32.totalorder %s16, 1
      %p139 = scmp.ne.s32.totalorder %s134, %s136
      %p140 = scmp.eq.s32.totalorder %s16, 0
      %p141 = por %p139, %p140
      %p142 = scmp.ne.s32.totalorder %s134, %s136
      %p143 = scmp.eq.s32.totalorder %s21, 1
      %p144 = por %p142, %p143
      %p145 = scmp.ne.s32.totalorder %s136, %s137
      %p146 = scmp.eq.s32.totalorder %s21, 0
      %p147 = por %p145, %p146
      %p148 = scmp.ne.s32.totalorder %s136, %s137
      %p149 = scmp.eq.s32.totalorder %s22, 1
      %p150 = por %p148, %p149
      %p152 = scmp.ne.s32.totalorder %s137, %s151
      %p153 = scmp.eq.s32.totalorder %s22, 0
      %p154 = por %p152, %p153
      %s156 = sadd.s32 %s155, 1
      %p159 = scmp.eq.s32.totalorder %s16, 1
      %p160 = scmp.ne.s32.totalorder %s155, %s157
      %p161 = scmp.eq.s32.totalorder %s16, 0
      %p162 = por %p160, %p161
      %p163 = scmp.ne.s32.totalorder %s155, %s157
      %p164 = scmp.eq.s32.totalorder %s21, 1
      %p165 = por %p163, %p164
      %p166 = scmp.ne.s32.totalorder %s157, %s158
      %p167 = scmp.eq.s32.totalorder %s21, 0
      %p168 = por %p166, %p167
      %p169 = scmp.ne.s32.totalorder %s157, %s158
      %p170 = scmp.eq.s32.totalorder %s22, 1
      %p171 = por %p169, %p170
      %p173 = scmp.ne.s32.totalorder %s158, %s172
      %p174 = scmp.eq.s32.totalorder %s22, 0
      %p175 = por %p173, %p174
      %s176 = ssub.s32 %s16, %s23
      %p177 = scmp.eq.s32.totalorder %s176, 0
      %s179 = sadd.s32 %s178, 1
      %s180 = scalar_select %p177, %s178, %s179
      %p183 = pneg %p177
      %p184 = scmp.eq.s32.totalorder %s16, 1
      %p185 = por %p183, %p184
      %p186 = scmp.ne.s32.totalorder %s178, %s181
      %p187 = scmp.eq.s32.totalorder %s16, 0
      %p188 = por %p186, %p187
      %p189 = scmp.ne.s32.totalorder %s178, %s181
      %p190 = scmp.eq.s32.totalorder %s21, 1
      %p191 = por %p189, %p190
      %p192 = scmp.ne.s32.totalorder %s181, %s182
      %p193 = scmp.eq.s32.totalorder %s21, 0
      %p194 = por %p192, %p193
      %p195 = scmp.ne.s32.totalorder %s181, %s182
      %p196 = scmp.eq.s32.totalorder %s22, 1
      %p197 = por %p195, %p196
      %p199 = scmp.ne.s32.totalorder %s182, %s198
      %p200 = scmp.eq.s32.totalorder %s22, 0
      %p201 = por %p199, %p200
      %p202 = scmp.le.s32.totalorder 1, %s16
      %p203 = scmp.lt.s32.totalorder %s16, 3
      %p204 = pnand %p202, %p203
      %p205 = pneg %p204
      // Predicated region
      $region9: #{tpu_custom_call.1} parent=5 // pred_check
        _
      $region10: #{tpu_custom_call.1} parent=5 // pred_check_branch
        %207 = sbr.rel (%p204) target = $region12
      $region11: #{tpu_custom_call.1} parent=5 // pred_region
        %s208 = ssub.s32 %s16, 1
        // Predicated region
        $region13: #{tpu_custom_call.1} parent=11 // pred_check
          %p209 = pneg %p63
        $region14: #{tpu_custom_call.1} parent=11 // pred_check_branch
          %211 = sbr.rel (%p209) target = $region16
        $region15: #{tpu_custom_call.1} parent=11 // pred_region
          _
        $region16: #{tpu_custom_call.1} parent=11 // pred_fallthru
          _
        // Predicated region
        $region17: #{tpu_custom_call.1} parent=11 // pred_check
          %p212 = pneg %p84
        $region18: #{tpu_custom_call.1} parent=11 // pred_check_branch
          %214 = sbr.rel (%p212) target = $region20
        $region19: #{tpu_custom_call.1} parent=11 // pred_region
          _
        $region20: #{tpu_custom_call.1} parent=11 // pred_fallthru
          _
        // Predicated region
        $region21: #{tpu_custom_call.1} parent=11 // pred_check
          %p215 = pneg %p105
        $region22: #{tpu_custom_call.1} parent=11 // pred_check_branch
          %217 = sbr.rel (%p215) target = $region24
        $region23: #{tpu_custom_call.1} parent=11 // pred_region
          _
        $region24: #{tpu_custom_call.1} parent=11 // pred_fallthru
          _
        // Predicated region
        $region25: #{tpu_custom_call.1} parent=11 // pred_check
          %p218 = pneg %p126
        $region26: #{tpu_custom_call.1} parent=11 // pred_check_branch
          %220 = sbr.rel (%p218) target = $region28
        $region27: #{tpu_custom_call.1} parent=11 // pred_region
          _
        $region28: #{tpu_custom_call.1} parent=11 // pred_fallthru
          _
        // Predicated region
        $region29: #{tpu_custom_call.1} parent=11 // pred_check
          %p221 = pneg %p147
        $region30: #{tpu_custom_call.1} parent=11 // pred_check_branch
          %223 = sbr.rel (%p221) target = $region32
        $region31: #{tpu_custom_call.1} parent=11 // pred_region
          _
        $region32: #{tpu_custom_call.1} parent=11 // pred_fallthru
          _
        // Predicated region
        $region33: #{tpu_custom_call.1} parent=11 // pred_check
          %p224 = pneg %p168
        $region34: #{tpu_custom_call.1} parent=11 // pred_check_branch
          %226 = sbr.rel (%p224) target = $region36
        $region35: #{tpu_custom_call.1} parent=11 // pred_region
          _
        $region36: #{tpu_custom_call.1} parent=11 // pred_fallthru
          _
      $region12: #{tpu_custom_call.1} parent=5 // pred_fallthru
        _
      %p227 = scmp.lt.s32.totalorder %s16, 2
      // Predicated region
      $region37: #{tpu_custom_call.1} parent=5 // pred_check
        %p228 = pneg %p227
      $region38: #{tpu_custom_call.1} parent=5 // pred_check_branch
        %230 = sbr.rel (%p228) target = $region40
      $region39: #{tpu_custom_call.1} parent=5 // pred_region
        // Predicated region
        $region41: #{tpu_custom_call.1} parent=39 // pred_check
          %p231 = pneg %p36
        $region42: #{tpu_custom_call.1} parent=39 // pred_check_branch
          %233 = sbr.rel (%p231) target = $region44
        $region43: #{tpu_custom_call.1} parent=39 // pred_region
          %p234 = scmp.lt.s32.totalorder %s16, 1
          %s235 = scalar_select %p234, %s16, 1
          %s236 = smul.addr %s235, 8
          %s237 = scalar_lea.vmem %s0, %s236
        $region44: #{tpu_custom_call.1} parent=39 // pred_fallthru
          _
      $region40: #{tpu_custom_call.1} parent=5 // pred_fallthru
        _
      %p238 = scmp.le.s32.totalorder 1, %s16
      %p239 = scmp.lt.s32.totalorder %s16, 3
      %p240 = pnand %p238, %p239
      %p241 = pneg %p240
      // Predicated region
      $region45: #{tpu_custom_call.1} parent=5 // pred_check
        _
      $region46: #{tpu_custom_call.1} parent=5 // pred_check_branch
        %243 = sbr.rel (%p240) target = $region48
      $region47: #{tpu_custom_call.1} parent=5 // pred_region
        %s244 = ssub.s32 %s16, 1
        %p245 = scmp.lt.s32.totalorder %s21, 1
        %s246 = scalar_select %p245, %s21, 1
        %s247 = smul.addr %s246, 8
        %s248 = scalar_lea.vmem %s0, %s247
        %p249 = pneg %p42
        %p250 = pneg %p39
        %p251 = pneg %p63
        %p252 = pneg %p60
        %p253 = pneg %p84
        %p254 = pneg %p81
        %p255 = pneg %p105
        %p256 = pneg %p102
        %p257 = pneg %p126
        %p258 = pneg %p123
        %p259 = pneg %p147
        %p260 = pneg %p144
        %p261 = pneg %p168
        %p262 = pneg %p165
        %p263 = pneg %p194
        %p264 = pneg %p191
        %s265 = sand.u32 %s181, 1
        %s266 = scalar_lea.sflag [#allocation3], %s265
        %s267 = sand.u32 %s181, 1
        %s268 = smul.addr %s267, 8
        %s269 = scalar_lea.vmem [#allocation2], %s268
        %p270 = scmp.lt.s32.totalorder %s21, 1
        %s271 = scalar_select %p270, %s21, 1
        %s272 = smul.addr %s271, 8
        %s273 = scalar_lea.vmem %s0, %s272
        %v275 = vld [vmem:[%s273] sm:$0xff]
        %v276 = vpack.c.bf16 %v275, %v275
        %v277 = vld [vmem:[%s1] sm:$0xf]
        %v278 = vld [vmem:[%s1 + $0x4] sm:$0xf]
        %v279 = vld [vmem:[%s1 + $0x8] sm:$0xf]
        %v280 = vld [vmem:[%s1 + $0xc] sm:$0xf]
        %v281 = vld [vmem:[%s2] sm:$0x1]
        %v283 = vlaneseq
        %v284 = vshrl.u32 %v283, 7
        %v285 = vsub.s32 0, %v284
        %v286 = vrot.slane %v281, %v285
        %v292 = vunpack.c.l.b16 %v277
        %v293 = vunpack.c.l.b16 %v278
        %v294 = vunpack.c.l.b16 %v279
        %v295 = vunpack.c.l.b16 %v280
        %v296 = vpack.c.b16 %v293, %v292
        %v297 = vpack.c.b16 %v295, %v294
        %vm300 = vcmask 261120
        %v302 = vsel %vm300, %v276, 0
        %304 = vmatprep.subr.bf16.mxu0 0
        %305 = vmatpush1.bf16.msra.mxu0 %v296
        %306 = vmatprep.subr.bf16.mxu0 0
        %307 = vmatpush1.bf16.msra.mxu0 %v297
        %308 = vmatprep.subr.bf16.mxu0 0
        %309 = vmatpush1.bf16.msra.mxu0 0
        %310 = vmatprep.subr.bf16.mxu0 0
        %311 = vmatpush1.bf16.msra.mxu0 0
        %312 = vmatprep.subr.bf16.mxu0 0
        %313 = vmatpush1.bf16.msra.mxu0 0
        %314 = vmatprep.subr.bf16.mxu0 0
        %315 = vmatpush1.bf16.msra.mxu0 0
        %316 = vmatprep.subr.bf16.mxu0 0
        %317 = vmatpush1.bf16.msra.mxu0 0
        %318 = vmatprep.subr.bf16.mxu0 0
        %319 = vmatpush1.bf16.msra.mxu0 0
        %320 = vmatprep.subr.bf16.mxu0 0
        %321 = vmatpush1.bf16.msra.mxu0 0
        %322 = vmatprep.subr.bf16.mxu0 0
        %323 = vmatpush1.bf16.msra.mxu0 0
        %324 = vmatprep.subr.bf16.mxu0 0
        %325 = vmatpush1.bf16.msra.mxu0 0
        %326 = vmatprep.subr.bf16.mxu0 0
        %327 = vmatpush1.bf16.msra.mxu0 0
        %328 = vmatprep.subr.bf16.mxu0 0
        %329 = vmatpush1.bf16.msra.mxu0 0
        %330 = vmatprep.subr.bf16.mxu0 0
        %331 = vmatpush1.bf16.msra.mxu0 0
        %332 = vmatprep.subr.bf16.mxu0 0
        %333 = vmatpush1.bf16.msra.mxu0 0
        %334 = vmatprep.subr.bf16.mxu0 0
        %335 = vmatpush1.bf16.msra.mxu0 0
        %336 = vmatprep.mubr.bf16.mxu0 0
        %337 = vmatmul.mubr.bf16.gmra.mrb[0].mxu0 %v302
        %v338 = vpop.f32.mrb[0].mxu0
        %v339 = vadd.f32 %v286, %v338
        %v340 = vpop.f32.mrb[0].mxu0
        %v341 = vpop.f32.mrb[0].mxu0
        %v342 = vpop.f32.mrb[0].mxu0
        %343 = vdwg.mxu0
        %v344 = vpack.c.bf16 %v339, %v339
        %v345 = vld [vmem:[%s3] sm:$0xf]
        %v346 = vld [vmem:[%s3 + $0x4] sm:$0xf]
        %v347 = vld [vmem:[%s3 + $0x8] sm:$0xf]
        %v348 = vld [vmem:[%s3 + $0xc] sm:$0xf]
        %v349 = vld [vmem:[%s3 + $0x10] sm:$0xf]
        %v350 = vld [vmem:[%s3 + $0x14] sm:$0xf]
        %v351 = vld [vmem:[%s3 + $0x18] sm:$0xf]
        %v352 = vld [vmem:[%s3 + $0x1c] sm:$0xf]
        %v353 = vld [vmem:[%s3 + $0x20] sm:$0xf]
        %v354 = vld [vmem:[%s3 + $0x24] sm:$0xf]
        %v355 = vld [vmem:[%s3 + $0x28] sm:$0xf]
        %v356 = vld [vmem:[%s3 + $0x2c] sm:$0xf]
        %v357 = vld [vmem:[%s3 + $0x30] sm:$0xf]
        %v358 = vld [vmem:[%s3 + $0x34] sm:$0xf]
        %v359 = vld [vmem:[%s3 + $0x38] sm:$0xf]
        %v360 = vld [vmem:[%s3 + $0x3c] sm:$0xf]
        %v361 = vld [vmem:[%s3 + $0x40] sm:$0xf]
        %v362 = vld [vmem:[%s3 + $0x44] sm:$0xf]
        %v363 = vld [vmem:[%s3 + $0x48] sm:$0xf]
        %v364 = vld [vmem:[%s3 + $0x4c] sm:$0xf]
        %v365 = vld [vmem:[%s3 + $0x50] sm:$0xf]
        %v366 = vld [vmem:[%s3 + $0x54] sm:$0xf]
        %v367 = vld [vmem:[%s3 + $0x58] sm:$0xf]
        %v368 = vld [vmem:[%s3 + $0x5c] sm:$0xf]
        %v369 = vld [vmem:[%s3 + $0x60] sm:$0xf]
        %v370 = vld [vmem:[%s3 + $0x64] sm:$0xf]
        %v371 = vld [vmem:[%s3 + $0x68] sm:$0xf]
        %v372 = vld [vmem:[%s3 + $0x6c] sm:$0xf]
        %v373 = vld [vmem:[%s3 + $0x70] sm:$0xf]
        %v374 = vld [vmem:[%s3 + $0x74] sm:$0xf]
        %v375 = vld [vmem:[%s3 + $0x78] sm:$0xf]
        %v376 = vld [vmem:[%s3 + $0x7c] sm:$0xf]
        %v377 = vld [vmem:[%s3 + $0x80] sm:$0xf]
        %v378 = vld [vmem:[%s3 + $0x84] sm:$0xf]
        %v379 = vld [vmem:[%s3 + $0x88] sm:$0xf]
        %v380 = vld [vmem:[%s3 + $0x8c] sm:$0xf]
        %v381 = vld [vmem:[%s3 + $0x90] sm:$0xf]
        %v382 = vld [vmem:[%s3 + $0x94] sm:$0xf]
        %v383 = vld [vmem:[%s3 + $0x98] sm:$0xf]
        %v384 = vld [vmem:[%s3 + $0x9c] sm:$0xf]
        %v385 = vld [vmem:[%s3 + $0xa0] sm:$0xf]
        %v386 = vld [vmem:[%s3 + $0xa4] sm:$0xf]
        %v387 = vld [vmem:[%s3 + $0xa8] sm:$0xf]
        %v388 = vld [vmem:[%s3 + $0xac] sm:$0xf]
        %v389 = vld [vmem:[%s3 + $0xb0] sm:$0xf]
        %v390 = vld [vmem:[%s3 + $0xb4] sm:$0xf]
        %v391 = vld [vmem:[%s3 + $0xb8] sm:$0xf]
        %v392 = vld [vmem:[%s3 + $0xbc] sm:$0xf]
        %v393 = vld [vmem:[%s3 + $0xc0] sm:$0xf]
        %v394 = vld [vmem:[%s3 + $0xc4] sm:$0xf]
        %v395 = vld [vmem:[%s3 + $0xc8] sm:$0xf]
        %v396 = vld [vmem:[%s3 + $0xcc] sm:$0xf]
        %v397 = vld [vmem:[%s3 + $0xd0] sm:$0xf]
        %v398 = vld [vmem:[%s3 + $0xd4] sm:$0xf]
        %v399 = vld [vmem:[%s3 + $0xd8] sm:$0xf]
        %v400 = vld [vmem:[%s3 + $0xdc] sm:$0xf]
        %v401 = vld [vmem:[%s3 + $0xe0] sm:$0xf]
        %v402 = vld [vmem:[%s3 + $0xe4] sm:$0xf]
        %v403 = vld [vmem:[%s3 + $0xe8] sm:$0xf]
        %v404 = vld [vmem:[%s3 + $0xec] sm:$0xf]
        %v405 = vld [vmem:[%s3 + $0xf0] sm:$0xf]
        %v406 = vld [vmem:[%s3 + $0xf4] sm:$0xf]
        %v407 = vld [vmem:[%s3 + $0xf8] sm:$0xf]
        %v408 = vld [vmem:[%s3 + $0xfc] sm:$0xf]
        %v409 = vld [vmem:[%s4] sm:$0x1]
        %v410 = vld [vmem:[%s4 + $0x1] sm:$0x1]
        %v411 = vld [vmem:[%s4 + $0x2] sm:$0x1]
        %v412 = vld [vmem:[%s4 + $0x3] sm:$0x1]
        %v413 = vld [vmem:[%s4 + $0x4] sm:$0x1]
        %v414 = vld [vmem:[%s4 + $0x5] sm:$0x1]
        %v415 = vld [vmem:[%s4 + $0x6] sm:$0x1]
        %v416 = vld [vmem:[%s4 + $0x7] sm:$0x1]
        %v425 = vlaneseq
        %v426 = vshrl.u32 %v425, 7
        %v427 = vsub.s32 0, %v426
        %v428 = vrot.slane %v409, %v427
        %v429 = vlaneseq
        %v430 = vshrl.u32 %v429, 7
        %v431 = vsub.s32 0, %v430
        %v432 = vrot.slane %v410, %v431
        %v433 = vlaneseq
        %v434 = vshrl.u32 %v433, 7
        %v435 = vsub.s32 0, %v434
        %v436 = vrot.slane %v411, %v435
        %v437 = vlaneseq
        %v438 = vshrl.u32 %v437, 7
        %v439 = vsub.s32 0, %v438
        %v440 = vrot.slane %v412, %v439
        %v441 = vlaneseq
        %v442 = vshrl.u32 %v441, 7
        %v443 = vsub.s32 0, %v442
        %v444 = vrot.slane %v413, %v443
        %v445 = vlaneseq
        %v446 = vshrl.u32 %v445, 7
        %v447 = vsub.s32 0, %v446
        %v448 = vrot.slane %v414, %v447
        %v449 = vlaneseq
        %v450 = vshrl.u32 %v449, 7
        %v451 = vsub.s32 0, %v450
        %v452 = vrot.slane %v415, %v451
        %v453 = vlaneseq
        %v454 = vshrl.u32 %v453, 7
        %v455 = vsub.s32 0, %v454
        %v456 = vrot.slane %v416, %v455
        %v473 = vunpack.c.l.b16 %v345
        %v474 = vunpack.c.l.b16 %v346
        %v475 = vunpack.c.l.b16 %v347
        %v476 = vunpack.c.l.b16 %v348
        %v477 = vunpack.c.l.b16 %v349
        %v478 = vunpack.c.l.b16 %v350
        %v479 = vunpack.c.l.b16 %v351
        %v480 = vunpack.c.l.b16 %v352
        %v481 = vpack.c.b16 %v474, %v473
        %v482 = vpack.c.b16 %v476, %v475
        %v483 = vpack.c.b16 %v478, %v477
        %v484 = vpack.c.b16 %v480, %v479
        %vm489 = vcmask 523264
        %v491 = vsel %vm489, %v344, 0
        %493 = vmatprep.subr.bf16.mxu0 0
        %494 = vmatpush1.bf16.msra.mxu0 %v481
        %495 = vmatprep.subr.bf16.mxu0 0
        %496 = vmatpush1.bf16.msra.mxu0 %v482
        %497 = vmatprep.subr.bf16.mxu0 0
        %498 = vmatpush1.bf16.msra.mxu0 %v483
        %499 = vmatprep.subr.bf16.mxu0 0
        %500 = vmatpush1.bf16.msra.mxu0 %v484
        %501 = vmatprep.subr.bf16.mxu0 0
        %502 = vmatpush1.bf16.msra.mxu0 0
        %503 = vmatprep.subr.bf16.mxu0 0
        %504 = vmatpush1.bf16.msra.mxu0 0
        %505 = vmatprep.subr.bf16.mxu0 0
        %506 = vmatpush1.bf16.msra.mxu0 0
        %507 = vmatprep.subr.bf16.mxu0 0
        %508 = vmatpush1.bf16.msra.mxu0 0
        %509 = vmatprep.subr.bf16.mxu0 0
        %510 = vmatpush1.bf16.msra.mxu0 0
        %511 = vmatprep.subr.bf16.mxu0 0
        %512 = vmatpush1.bf16.msra.mxu0 0
        %513 = vmatprep.subr.bf16.mxu0 0
        %514 = vmatpush1.bf16.msra.mxu0 0
        %515 = vmatprep.subr.bf16.mxu0 0
        %516 = vmatpush1.bf16.msra.mxu0 0
        %517 = vmatprep.subr.bf16.mxu0 0
        %518 = vmatpush1.bf16.msra.mxu0 0
        %519 = vmatprep.subr.bf16.mxu0 0
        %520 = vmatpush1.bf16.msra.mxu0 0
        %521 = vmatprep.subr.bf16.mxu0 0
        %522 = vmatpush1.bf16.msra.mxu0 0
        %523 = vmatprep.subr.bf16.mxu0 0
        %524 = vmatpush1.bf16.msra.mxu0 0
        %525 = vmatprep.mubr.bf16.mxu0 0
        %526 = vmatmul.mubr.bf16.gmra.mrb[0].mxu0 %v491
        %v527 = vpop.f32.mrb[0].mxu0
        %v528 = vadd.f32 %v428, %v527
        %v529 = vpop.f32.mrb[0].mxu0
        %v530 = vpop.f32.mrb[0].mxu0
        %v531 = vpop.f32.mrb[0].mxu0
        %532 = vdwg.mxu0
        %v541 = vunpack.c.l.b16 %v353
        %v542 = vunpack.c.l.b16 %v354
        %v543 = vunpack.c.l.b16 %v355
        %v544 = vunpack.c.l.b16 %v356
        %v545 = vunpack.c.l.b16 %v357
        %v546 = vunpack.c.l.b16 %v358
        %v547 = vunpack.c.l.b16 %v359
        %v548 = vunpack.c.l.b16 %v360
        %v549 = vpack.c.b16 %v542, %v541
        %v550 = vpack.c.b16 %v544, %v543
        %v551 = vpack.c.b16 %v546, %v545
        %v552 = vpack.c.b16 %v548, %v547
        %557 = vmatprep.subr.bf16.mxu0 0
        %558 = vmatpush1.bf16.msra.mxu0 %v549
        %559 = vmatprep.subr.bf16.mxu0 0
        %560 = vmatpush1.bf16.msra.mxu0 %v550
        %561 = vmatprep.subr.bf16.mxu0 0
        %562 = vmatpush1.bf16.msra.mxu0 %v551
        %563 = vmatprep.subr.bf16.mxu0 0
        %564 = vmatpush1.bf16.msra.mxu0 %v552
        %565 = vmatprep.subr.bf16.mxu0 0
        %566 = vmatpush1.bf16.msra.mxu0 0
        %567 = vmatprep.subr.bf16.mxu0 0
        %568 = vmatpush1.bf16.msra.mxu0 0
        %569 = vmatprep.subr.bf16.mxu0 0
        %570 = vmatpush1.bf16.msra.mxu0 0
        %571 = vmatprep.subr.bf16.mxu0 0
        %572 = vmatpush1.bf16.msra.mxu0 0
        %573 = vmatprep.subr.bf16.mxu0 0
        %574 = vmatpush1.bf16.msra.mxu0 0
        %575 = vmatprep.subr.bf16.mxu0 0
        %576 = vmatpush1.bf16.msra.mxu0 0
        %577 = vmatprep.subr.bf16.mxu0 0
        %578 = vmatpush1.bf16.msra.mxu0 0
        %579 = vmatprep.subr.bf16.mxu0 0
        %580 = vmatpush1.bf16.msra.mxu0 0
        %581 = vmatprep.subr.bf16.mxu0 0
        %582 = vmatpush1.bf16.msra.mxu0 0
        %583 = vmatprep.subr.bf16.mxu0 0
        %584 = vmatpush1.bf16.msra.mxu0 0
        %585 = vmatprep.subr.bf16.mxu0 0
        %586 = vmatpush1.bf16.msra.mxu0 0
        %587 = vmatprep.subr.bf16.mxu0 0
        %588 = vmatpush1.bf16.msra.mxu0 0
        %589 = vmatprep.mubr.bf16.mxu0 0
        %590 = vmatmul.mubr.bf16.gmra.mrb[0].mxu0 %v491
        %v591 = vpop.f32.mrb[0].mxu0
        %v592 = vadd.f32 %v432, %v591
        %v593 = vpop.f32.mrb[0].mxu0
        %v594 = vpop.f32.mrb[0].mxu0
        %v595 = vpop.f32.mrb[0].mxu0
        %596 = vdwg.mxu0
        %v605 = vunpack.c.l.b16 %v361
        %v606 = vunpack.c.l.b16 %v362
        %v607 = vunpack.c.l.b16 %v363
        %v608 = vunpack.c.l.b16 %v364
        %v609 = vunpack.c.l.b16 %v365
        %v610 = vunpack.c.l.b16 %v366
        %v611 = vunpack.c.l.b16 %v367
        %v612 = vunpack.c.l.b16 %v368
        %v613 = vpack.c.b16 %v606, %v605
        %v614 = vpack.c.b16 %v608, %v607
        %v615 = vpack.c.b16 %v610, %v609
        %v616 = vpack.c.b16 %v612, %v611
        %621 = vmatprep.subr.bf16.mxu0 0
        %622 = vmatpush1.bf16.msra.mxu0 %v613
        %623 = vmatprep.subr.bf16.mxu0 0
        %624 = vmatpush1.bf16.msra.mxu0 %v614
        %625 = vmatprep.subr.bf16.mxu0 0
        %626 = vmatpush1.bf16.msra.mxu0 %v615
        %627 = vmatprep.subr.bf16.mxu0 0
        %628 = vmatpush1.bf16.msra.mxu0 %v616
        %629 = vmatprep.subr.bf16.mxu0 0
        %630 = vmatpush1.bf16.msra.mxu0 0
        %631 = vmatprep.subr.bf16.mxu0 0
        %632 = vmatpush1.bf16.msra.mxu0 0
        %633 = vmatprep.subr.bf16.mxu0 0
        %634 = vmatpush1.bf16.msra.mxu0 0
        %635 = vmatprep.subr.bf16.mxu0 0
        %636 = vmatpush1.bf16.msra.mxu0 0
        %637 = vmatprep.subr.bf16.mxu0 0
        %638 = vmatpush1.bf16.msra.mxu0 0
        %639 = vmatprep.subr.bf16.mxu0 0
        %640 = vmatpush1.bf16.msra.mxu0 0
        %641 = vmatprep.subr.bf16.mxu0 0
        %642 = vmatpush1.bf16.msra.mxu0 0
        %643 = vmatprep.subr.bf16.mxu0 0
        %644 = vmatpush1.bf16.msra.mxu0 0
        %645 = vmatprep.subr.bf16.mxu0 0
        %646 = vmatpush1.bf16.msra.mxu0 0
        %647 = vmatprep.subr.bf16.mxu0 0
        %648 = vmatpush1.bf16.msra.mxu0 0
        %649 = vmatprep.subr.bf16.mxu0 0
        %650 = vmatpush1.bf16.msra.mxu0 0
        %651 = vmatprep.subr.bf16.mxu0 0
        %652 = vmatpush1.bf16.msra.mxu0 0
        %653 = vmatprep.mubr.bf16.mxu0 0
        %654 = vmatmul.mubr.bf16.gmra.mrb[0].mxu0 %v491
        %v655 = vpop.f32.mrb[0].mxu0
        %v656 = vadd.f32 %v436, %v655
        %v657 = vpop.f32.mrb[0].mxu0
        %v658 = vpop.f32.mrb[0].mxu0
        %v659 = vpop.f32.mrb[0].mxu0
        %660 = vdwg.mxu0
        %v669 = vunpack.c.l.b16 %v369
        %v670 = vunpack.c.l.b16 %v370
        %v671 = vunpack.c.l.b16 %v371
        %v672 = vunpack.c.l.b16 %v372
        %v673 = vunpack.c.l.b16 %v373
        %v674 = vunpack.c.l.b16 %v374
        %v675 = vunpack.c.l.b16 %v375
        %v676 = vunpack.c.l.b16 %v376
        %v677 = vpack.c.b16 %v670, %v669
        %v678 = vpack.c.b16 %v672, %v671
        %v679 = vpack.c.b16 %v674, %v673
        %v680 = vpack.c.b16 %v676, %v675
        %685 = vmatprep.subr.bf16.mxu0 0
        %686 = vmatpush1.bf16.msra.mxu0 %v677
        %687 = vmatprep.subr.bf16.mxu0 0
        %688 = vmatpush1.bf16.msra.mxu0 %v678
        %689 = vmatprep.subr.bf16.mxu0 0
        %690 = vmatpush1.bf16.msra.mxu0 %v679
        %691 = vmatprep.subr.bf16.mxu0 0
        %692 = vmatpush1.bf16.msra.mxu0 %v680
        %693 = vmatprep.subr.bf16.mxu0 0
        %694 = vmatpush1.bf16.msra.mxu0 0
        %695 = vmatprep.subr.bf16.mxu0 0
        %696 = vmatpush1.bf16.msra.mxu0 0
        %697 = vmatprep.subr.bf16.mxu0 0
        %698 = vmatpush1.bf16.msra.mxu0 0
        %699 = vmatprep.subr.bf16.mxu0 0
        %700 = vmatpush1.bf16.msra.mxu0 0
        %701 = vmatprep.subr.bf16.mxu0 0
        %702 = vmatpush1.bf16.msra.mxu0 0
        %703 = vmatprep.subr.bf16.mxu0 0
        %704 = vmatpush1.bf16.msra.mxu0 0
        %705 = vmatprep.subr.bf16.mxu0 0
        %706 = vmatpush1.bf16.msra.mxu0 0
        %707 = vmatprep.subr.bf16.mxu0 0
        %708 = vmatpush1.bf16.msra.mxu0 0
        %709 = vmatprep.subr.bf16.mxu0 0
        %710 = vmatpush1.bf16.msra.mxu0 0
        %711 = vmatprep.subr.bf16.mxu0 0
        %712 = vmatpush1.bf16.msra.mxu0 0
        %713 = vmatprep.subr.bf16.mxu0 0
        %714 = vmatpush1.bf16.msra.mxu0 0
        %715 = vmatprep.subr.bf16.mxu0 0
        %716 = vmatpush1.bf16.msra.mxu0 0
        %717 = vmatprep.mubr.bf16.mxu0 0
        %718 = vmatmul.mubr.bf16.gmra.mrb[0].mxu0 %v491
        %v719 = vpop.f32.mrb[0].mxu0
        %v720 = vadd.f32 %v440, %v719
        %v721 = vpop.f32.mrb[0].mxu0
        %v722 = vpop.f32.mrb[0].mxu0
        %v723 = vpop.f32.mrb[0].mxu0
        %724 = vdwg.mxu0
        %v733 = vunpack.c.l.b16 %v377
        %v734 = vunpack.c.l.b16 %v378
        %v735 = vunpack.c.l.b16 %v379
        %v736 = vunpack.c.l.b16 %v380
        %v737 = vunpack.c.l.b16 %v381
        %v738 = vunpack.c.l.b16 %v382
        %v739 = vunpack.c.l.b16 %v383
        %v740 = vunpack.c.l.b16 %v384
        %v741 = vpack.c.b16 %v734, %v733
        %v742 = vpack.c.b16 %v736, %v735
        %v743 = vpack.c.b16 %v738, %v737
        %v744 = vpack.c.b16 %v740, %v739
        %749 = vmatprep.subr.bf16.mxu0 0
        %750 = vmatpush1.bf16.msra.mxu0 %v741
        %751 = vmatprep.subr.bf16.mxu0 0
        %752 = vmatpush1.bf16.msra.mxu0 %v742
        %753 = vmatprep.subr.bf16.mxu0 0
        %754 = vmatpush1.bf16.msra.mxu0 %v743
        %755 = vmatprep.subr.bf16.mxu0 0
        %756 = vmatpush1.bf16.msra.mxu0 %v744
        %757 = vmatprep.subr.bf16.mxu0 0
        %758 = vmatpush1.bf16.msra.mxu0 0
        %759 = vmatprep.subr.bf16.mxu0 0
        %760 = vmatpush1.bf16.msra.mxu0 0
        %761 = vmatprep.subr.bf16.mxu0 0
        %762 = vmatpush1.bf16.msra.mxu0 0
        %763 = vmatprep.subr.bf16.mxu0 0
        %764 = vmatpush1.bf16.msra.mxu0 0
        %765 = vmatprep.subr.bf16.mxu0 0
        %766 = vmatpush1.bf16.msra.mxu0 0
        %767 = vmatprep.subr.bf16.mxu0 0
        %768 = vmatpush1.bf16.msra.mxu0 0
        %769 = vmatprep.subr.bf16.mxu0 0
        %770 = vmatpush1.bf16.msra.mxu0 0
        %771 = vmatprep.subr.bf16.mxu0 0
        %772 = vmatpush1.bf16.msra.mxu0 0
        %773 = vmatprep.subr.bf16.mxu0 0
        %774 = vmatpush1.bf16.msra.mxu0 0
        %775 = vmatprep.subr.bf16.mxu0 0
        %776 = vmatpush1.bf16.msra.mxu0 0
        %777 = vmatprep.subr.bf16.mxu0 0
        %778 = vmatpush1.bf16.msra.mxu0 0
        %779 = vmatprep.subr.bf16.mxu0 0
        %780 = vmatpush1.bf16.msra.mxu0 0
        %781 = vmatprep.mubr.bf16.mxu0 0
        %782 = vmatmul.mubr.bf16.gmra.mrb[0].mxu0 %v491
        %v783 = vpop.f32.mrb[0].mxu0
        %v784 = vadd.f32 %v444, %v783
        %v785 = vpop.f32.mrb[0].mxu0
        %v786 = vpop.f32.mrb[0].mxu0
        %v787 = vpop.f32.mrb[0].mxu0
        %788 = vdwg.mxu0
        %v797 = vunpack.c.l.b16 %v385
        %v798 = vunpack.c.l.b16 %v386
        %v799 = vunpack.c.l.b16 %v387
        %v800 = vunpack.c.l.b16 %v388
        %v801 = vunpack.c.l.b16 %v389
        %v802 = vunpack.c.l.b16 %v390
        %v803 = vunpack.c.l.b16 %v391
        %v804 = vunpack.c.l.b16 %v392
        %v805 = vpack.c.b16 %v798, %v797
        %v806 = vpack.c.b16 %v800, %v799
        %v807 = vpack.c.b16 %v802, %v801
        %v808 = vpack.c.b16 %v804, %v803
        %813 = vmatprep.subr.bf16.mxu0 0
        %814 = vmatpush1.bf16.msra.mxu0 %v805
        %815 = vmatprep.subr.bf16.mxu0 0
        %816 = vmatpush1.bf16.msra.mxu0 %v806
        %817 = vmatprep.subr.bf16.mxu0 0
        %818 = vmatpush1.bf16.msra.mxu0 %v807
        %819 = vmatprep.subr.bf16.mxu0 0
        %820 = vmatpush1.bf16.msra.mxu0 %v808
        %821 = vmatprep.subr.bf16.mxu0 0
        %822 = vmatpush1.bf16.msra.mxu0 0
        %823 = vmatprep.subr.bf16.mxu0 0
        %824 = vmatpush1.bf16.msra.mxu0 0
        %825 = vmatprep.subr.bf16.mxu0 0
        %826 = vmatpush1.bf16.msra.mxu0 0
        %827 = vmatprep.subr.bf16.mxu0 0
        %828 = vmatpush1.bf16.msra.mxu0 0
        %829 = vmatprep.subr.bf16.mxu0 0
        %830 = vmatpush1.bf16.msra.mxu0 0
        %831 = vmatprep.subr.bf16.mxu0 0
        %832 = vmatpush1.bf16.msra.mxu0 0
        %833 = vmatprep.subr.bf16.mxu0 0
        %834 = vmatpush1.bf16.msra.mxu0 0
        %835 = vmatprep.subr.bf16.mxu0 0
        %836 = vmatpush1.bf16.msra.mxu0 0
        %837 = vmatprep.subr.bf16.mxu0 0
        %838 = vmatpush1.bf16.msra.mxu0 0
        %839 = vmatprep.subr.bf16.mxu0 0
        %840 = vmatpush1.bf16.msra.mxu0 0
        %841 = vmatprep.subr.bf16.mxu0 0
        %842 = vmatpush1.bf16.msra.mxu0 0
        %843 = vmatprep.subr.bf16.mxu0 0
        %844 = vmatpush1.bf16.msra.mxu0 0
        %845 = vmatprep.mubr.bf16.mxu0 0
        %846 = vmatmul.mubr.bf16.gmra.mrb[0].mxu0 %v491
        %v847 = vpop.f32.mrb[0].mxu0
        %v848 = vadd.f32 %v448, %v847
        %v849 = vpop.f32.mrb[0].mxu0
        %v850 = vpop.f32.mrb[0].mxu0
        %v851 = vpop.f32.mrb[0].mxu0
        %852 = vdwg.mxu0
        %v861 = vunpack.c.l.b16 %v393
        %v862 = vunpack.c.l.b16 %v394
        %v863 = vunpack.c.l.b16 %v395
        %v864 = vunpack.c.l.b16 %v396
        %v865 = vunpack.c.l.b16 %v397
        %v866 = vunpack.c.l.b16 %v398
        %v867 = vunpack.c.l.b16 %v399
        %v868 = vunpack.c.l.b16 %v400
        %v869 = vpack.c.b16 %v862, %v861
        %v870 = vpack.c.b16 %v864, %v863
        %v871 = vpack.c.b16 %v866, %v865
        %v872 = vpack.c.b16 %v868, %v867
        %877 = vmatprep.subr.bf16.mxu0 0
        %878 = vmatpush1.bf16.msra.mxu0 %v869
        %879 = vmatprep.subr.bf16.mxu0 0
        %880 = vmatpush1.bf16.msra.mxu0 %v870
        %881 = vmatprep.subr.bf16.mxu0 0
        %882 = vmatpush1.bf16.msra.mxu0 %v871
        %883 = vmatprep.subr.bf16.mxu0 0
        %884 = vmatpush1.bf16.msra.mxu0 %v872
        %885 = vmatprep.subr.bf16.mxu0 0
        %886 = vmatpush1.bf16.msra.mxu0 0
        %887 = vmatprep.subr.bf16.mxu0 0
        %888 = vmatpush1.bf16.msra.mxu0 0
        %889 = vmatprep.subr.bf16.mxu0 0
        %890 = vmatpush1.bf16.msra.mxu0 0
        %891 = vmatprep.subr.bf16.mxu0 0
        %892 = vmatpush1.bf16.msra.mxu0 0
        %893 = vmatprep.subr.bf16.mxu0 0
        %894 = vmatpush1.bf16.msra.mxu0 0
        %895 = vmatprep.subr.bf16.mxu0 0
        %896 = vmatpush1.bf16.msra.mxu0 0
        %897 = vmatprep.subr.bf16.mxu0 0
        %898 = vmatpush1.bf16.msra.mxu0 0
        %899 = vmatprep.subr.bf16.mxu0 0
        %900 = vmatpush1.bf16.msra.mxu0 0
        %901 = vmatprep.subr.bf16.mxu0 0
        %902 = vmatpush1.bf16.msra.mxu0 0
        %903 = vmatprep.subr.bf16.mxu0 0
        %904 = vmatpush1.bf16.msra.mxu0 0
        %905 = vmatprep.subr.bf16.mxu0 0
        %906 = vmatpush1.bf16.msra.mxu0 0
        %907 = vmatprep.subr.bf16.mxu0 0
        %908 = vmatpush1.bf16.msra.mxu0 0
        %909 = vmatprep.mubr.bf16.mxu0 0
        %910 = vmatmul.mubr.bf16.gmra.mrb[0].mxu0 %v491
        %v911 = vpop.f32.mrb[0].mxu0
        %v912 = vadd.f32 %v452, %v911
        %v913 = vpop.f32.mrb[0].mxu0
        %v914 = vpop.f32.mrb[0].mxu0
        %v915 = vpop.f32.mrb[0].mxu0
        %916 = vdwg.mxu0
        %v925 = vunpack.c.l.b16 %v401
        %v926 = vunpack.c.l.b16 %v402
        %v927 = vunpack.c.l.b16 %v403
        %v928 = vunpack.c.l.b16 %v404
        %v929 = vunpack.c.l.b16 %v405
        %v930 = vunpack.c.l.b16 %v406
        %v931 = vunpack.c.l.b16 %v407
        %v932 = vunpack.c.l.b16 %v408
        %v933 = vpack.c.b16 %v926, %v925
        %v934 = vpack.c.b16 %v928, %v927
        %v935 = vpack.c.b16 %v930, %v929
        %v936 = vpack.c.b16 %v932, %v931
        %941 = vmatprep.subr.bf16.mxu0 0
        %942 = vmatpush1.bf16.msra.mxu0 %v933
        %943 = vmatprep.subr.bf16.mxu0 0
        %944 = vmatpush1.bf16.msra.mxu0 %v934
        %945 = vmatprep.subr.bf16.mxu0 0
        %946 = vmatpush1.bf16.msra.mxu0 %v935
        %947 = vmatprep.subr.bf16.mxu0 0
        %948 = vmatpush1.bf16.msra.mxu0 %v936
        %949 = vmatprep.subr.bf16.mxu0 0
        %950 = vmatpush1.bf16.msra.mxu0 0
        %951 = vmatprep.subr.bf16.mxu0 0
        %952 = vmatpush1.bf16.msra.mxu0 0
        %953 = vmatprep.subr.bf16.mxu0 0
        %954 = vmatpush1.bf16.msra.mxu0 0
        %955 = vmatprep.subr.bf16.mxu0 0
        %956 = vmatpush1.bf16.msra.mxu0 0
        %957 = vmatprep.subr.bf16.mxu0 0
        %958 = vmatpush1.bf16.msra.mxu0 0
        %959 = vmatprep.subr.bf16.mxu0 0
        %960 = vmatpush1.bf16.msra.mxu0 0
        %961 = vmatprep.subr.bf16.mxu0 0
        %962 = vmatpush1.bf16.msra.mxu0 0
        %963 = vmatprep.subr.bf16.mxu0 0
        %964 = vmatpush1.bf16.msra.mxu0 0
        %965 = vmatprep.subr.bf16.mxu0 0
        %966 = vmatpush1.bf16.msra.mxu0 0
        %967 = vmatprep.subr.bf16.mxu0 0
        %968 = vmatpush1.bf16.msra.mxu0 0
        %969 = vmatprep.subr.bf16.mxu0 0
        %970 = vmatpush1.bf16.msra.mxu0 0
        %971 = vmatprep.subr.bf16.mxu0 0
        %972 = vmatpush1.bf16.msra.mxu0 0
        %973 = vmatprep.mubr.bf16.mxu0 0
        %974 = vmatmul.mubr.bf16.gmra.mrb[0].mxu0 %v491
        %v975 = vpop.f32.mrb[0].mxu0
        %v976 = vadd.f32 %v456, %v975
        %v977 = vpop.f32.mrb[0].mxu0
        %v978 = vpop.f32.mrb[0].mxu0
        %v979 = vpop.f32.mrb[0].mxu0
        %980 = vdwg.mxu0
        %s981 = scalar_lea.vmem %s3, 256
        %v982 = vld [vmem:[%s981] sm:$0xf]
        %v983 = vld [vmem:[%s981 + $0x4] sm:$0xf]
        %v984 = vld [vmem:[%s981 + $0x8] sm:$0xf]
        %v985 = vld [vmem:[%s981 + $0xc] sm:$0xf]
        %v986 = vld [vmem:[%s981 + $0x10] sm:$0xf]
        %v987 = vld [vmem:[%s981 + $0x14] sm:$0xf]
        %v988 = vld [vmem:[%s981 + $0x18] sm:$0xf]
        %v989 = vld [vmem:[%s981 + $0x1c] sm:$0xf]
        %v990 = vld [vmem:[%s981 + $0x20] sm:$0xf]
        %v991 = vld [vmem:[%s981 + $0x24] sm:$0xf]
        %v992 = vld [vmem:[%s981 + $0x28] sm:$0xf]
        %v993 = vld [vmem:[%s981 + $0x2c] sm:$0xf]
        %v994 = vld [vmem:[%s981 + $0x30] sm:$0xf]
        %v995 = vld [vmem:[%s981 + $0x34] sm:$0xf]
        %v996 = vld [vmem:[%s981 + $0x38] sm:$0xf]
        %v997 = vld [vmem:[%s981 + $0x3c] sm:$0xf]
        %v998 = vld [vmem:[%s981 + $0x40] sm:$0xf]
        %v999 = vld [vmem:[%s981 + $0x44] sm:$0xf]
        %v1000 = vld [vmem:[%s981 + $0x48] sm:$0xf]
        %v1001 = vld [vmem:[%s981 + $0x4c] sm:$0xf]
        %v1002 = vld [vmem:[%s981 + $0x50] sm:$0xf]
        %v1003 = vld [vmem:[%s981 + $0x54] sm:$0xf]
        %v1004 = vld [vmem:[%s981 + $0x58] sm:$0xf]
        %v1005 = vld [vmem:[%s981 + $0x5c] sm:$0xf]
        %v1006 = vld [vmem:[%s981 + $0x60] sm:$0xf]
        %v1007 = vld [vmem:[%s981 + $0x64] sm:$0xf]
        %v1008 = vld [vmem:[%s981 + $0x68] sm:$0xf]
        %v1009 = vld [vmem:[%s981 + $0x6c] sm:$0xf]
        %v1010 = vld [vmem:[%s981 + $0x70] sm:$0xf]
        %v1011 = vld [vmem:[%s981 + $0x74] sm:$0xf]
        %v1012 = vld [vmem:[%s981 + $0x78] sm:$0xf]
        %v1013 = vld [vmem:[%s981 + $0x7c] sm:$0xf]
        %v1014 = vld [vmem:[%s981 + $0x80] sm:$0xf]
        %v1015 = vld [vmem:[%s981 + $0x84] sm:$0xf]
        %v1016 = vld [vmem:[%s981 + $0x88] sm:$0xf]
        %v1017 = vld [vmem:[%s981 + $0x8c] sm:$0xf]
        %v1018 = vld [vmem:[%s981 + $0x90] sm:$0xf]
        %v1019 = vld [vmem:[%s981 + $0x94] sm:$0xf]
        %v1020 = vld [vmem:[%s981 + $0x98] sm:$0xf]
        %v1021 = vld [vmem:[%s981 + $0x9c] sm:$0xf]
        %v1022 = vld [vmem:[%s981 + $0xa0] sm:$0xf]
        %v1023 = vld [vmem:[%s981 + $0xa4] sm:$0xf]
        %v1024 = vld [vmem:[%s981 + $0xa8] sm:$0xf]
        %v1025 = vld [vmem:[%s981 + $0xac] sm:$0xf]
        %v1026 = vld [vmem:[%s981 + $0xb0] sm:$0xf]
        %v1027 = vld [vmem:[%s981 + $0xb4] sm:$0xf]
        %v1028 = vld [vmem:[%s981 + $0xb8] sm:$0xf]
        %v1029 = vld [vmem:[%s981 + $0xbc] sm:$0xf]
        %v1030 = vld [vmem:[%s981 + $0xc0] sm:$0xf]
        %v1031 = vld [vmem:[%s981 + $0xc4] sm:$0xf]
        %v1032 = vld [vmem:[%s981 + $0xc8] sm:$0xf]
        %v1033 = vld [vmem:[%s981 + $0xcc] sm:$0xf]
        %v1034 = vld [vmem:[%s981 + $0xd0] sm:$0xf]
        %v1035 = vld [vmem:[%s981 + $0xd4] sm:$0xf]
        %v1036 = vld [vmem:[%s981 + $0xd8] sm:$0xf]
        %v1037 = vld [vmem:[%s981 + $0xdc] sm:$0xf]
        %v1038 = vld [vmem:[%s981 + $0xe0] sm:$0xf]
        %v1039 = vld [vmem:[%s981 + $0xe4] sm:$0xf]
        %v1040 = vld [vmem:[%s981 + $0xe8] sm:$0xf]
        %v1041 = vld [vmem:[%s981 + $0xec] sm:$0xf]
        %v1042 = vld [vmem:[%s981 + $0xf0] sm:$0xf]
        %v1043 = vld [vmem:[%s981 + $0xf4] sm:$0xf]
        %v1044 = vld [vmem:[%s981 + $0xf8] sm:$0xf]
        %v1045 = vld [vmem:[%s981 + $0xfc] sm:$0xf]
        %s1046 = scalar_lea.vmem %s4, 8
        %v1047 = vld [vmem:[%s1046] sm:$0x1]
        %v1048 = vld [vmem:[%s1046 + $0x1] sm:$0x1]
        %v1049 = vld [vmem:[%s1046 + $0x2] sm:$0x1]
        %v1050 = vld [vmem:[%s1046 + $0x3] sm:$0x1]
        %v1051 = vld [vmem:[%s1046 + $0x4] sm:$0x1]
        %v1052 = vld [vmem:[%s1046 + $0x5] sm:$0x1]
        %v1053 = vld [vmem:[%s1046 + $0x6] sm:$0x1]
        %v1054 = vld [vmem:[%s1046 + $0x7] sm:$0x1]
        %v1063 = vlaneseq
        %v1064 = vshrl.u32 %v1063, 7
        %v1065 = vsub.s32 0, %v1064
        %v1066 = vrot.slane %v1047, %v1065
        %v1067 = vlaneseq
        %v1068 = vshrl.u32 %v1067, 7
        %v1069 = vsub.s32 0, %v1068
        %v1070 = vrot.slane %v1048, %v1069
        %v1071 = vlaneseq
        %v1072 = vshrl.u32 %v1071, 7
        %v1073 = vsub.s32 0, %v1072
        %v1074 = vrot.slane %v1049, %v1073
        %v1075 = vlaneseq
        %v1076 = vshrl.u32 %v1075, 7
        %v1077 = vsub.s32 0, %v1076
        %v1078 = vrot.slane %v1050, %v1077
        %v1079 = vlaneseq
        %v1080 = vshrl.u32 %v1079, 7
        %v1081 = vsub.s32 0, %v1080
        %v1082 = vrot.slane %v1051, %v1081
        %v1083 = vlaneseq
        %v1084 = vshrl.u32 %v1083, 7
        %v1085 = vsub.s32 0, %v1084
        %v1086 = vrot.slane %v1052, %v1085
        %v1087 = vlaneseq
        %v1088 = vshrl.u32 %v1087, 7
        %v1089 = vsub.s32 0, %v1088
        %v1090 = vrot.slane %v1053, %v1089
        %v1091 = vlaneseq
        %v1092 = vshrl.u32 %v1091, 7
        %v1093 = vsub.s32 0, %v1092
        %v1094 = vrot.slane %v1054, %v1093
        %v1111 = vunpack.c.l.b16 %v982
        %v1112 = vunpack.c.l.b16 %v983
        %v1113 = vunpack.c.l.b16 %v984
        %v1114 = vunpack.c.l.b16 %v985
        %v1115 = vunpack.c.l.b16 %v986
        %v1116 = vunpack.c.l.b16 %v987
        %v1117 = vunpack.c.l.b16 %v988
        %v1118 = vunpack.c.l.b16 %v989
        %v1119 = vpack.c.b16 %v1112, %v1111
        %v1120 = vpack.c.b16 %v1114, %v1113
        %v1121 = vpack.c.b16 %v1116, %v1115
        %v1122 = vpack.c.b16 %v1118, %v1117
        %1127 = vmatprep.subr.bf16.mxu0 0
        %1128 = vmatpush1.bf16.msra.mxu0 %v1119
        %1129 = vmatprep.subr.bf16.mxu0 0
        %1130 = vmatpush1.bf16.msra.mxu0 %v1120
        %1131 = vmatprep.subr.bf16.mxu0 0
        %1132 = vmatpush1.bf16.msra.mxu0 %v1121
        %1133 = vmatprep.subr.bf16.mxu0 0
        %1134 = vmatpush1.bf16.msra.mxu0 %v1122
        %1135 = vmatprep.subr.bf16.mxu0 0
        %1136 = vmatpush1.bf16.msra.mxu0 0
        %1137 = vmatprep.subr.bf16.mxu0 0
        %1138 = vmatpush1.bf16.msra.mxu0 0
        %1139 = vmatprep.subr.bf16.mxu0 0
        %1140 = vmatpush1.bf16.msra.mxu0 0
        %1141 = vmatprep.subr.bf16.mxu0 0
        %1142 = vmatpush1.bf16.msra.mxu0 0
        %1143 = vmatprep.subr.bf16.mxu0 0
        %1144 = vmatpush1.bf16.msra.mxu0 0
        %1145 = vmatprep.subr.bf16.mxu0 0
        %1146 = vmatpush1.bf16.msra.mxu0 0
        %1147 = vmatprep.subr.bf16.mxu0 0
        %1148 = vmatpush1.bf16.msra.mxu0 0
        %1149 = vmatprep.subr.bf16.mxu0 0
        %1150 = vmatpush1.bf16.msra.mxu0 0
        %1151 = vmatprep.subr.bf16.mxu0 0
        %1152 = vmatpush1.bf16.msra.mxu0 0
        %1153 = vmatprep.subr.bf16.mxu0 0
        %1154 = vmatpush1.bf16.msra.mxu0 0
        %1155 = vmatprep.subr.bf16.mxu0 0
        %1156 = vmatpush1.bf16.msra.mxu0 0
        %1157 = vmatprep.subr.bf16.mxu0 0
        %1158 = vmatpush1.bf16.msra.mxu0 0
        %1159 = vmatprep.mubr.bf16.mxu0 0
        %1160 = vmatmul.mubr.bf16.gmra.mrb[0].mxu0 %v491
        %v1161 = vpop.f32.mrb[0].mxu0
        %v1162 = vadd.f32 %v1066, %v1161
        %v1163 = vpop.f32.mrb[0].mxu0
        %v1164 = vpop.f32.mrb[0].mxu0
        %v1165 = vpop.f32.mrb[0].mxu0
        %1166 = vdwg.mxu0
        %v1175 = vunpack.c.l.b16 %v990
        %v1176 = vunpack.c.l.b16 %v991
        %v1177 = vunpack.c.l.b16 %v992
        %v1178 = vunpack.c.l.b16 %v993
        %v1179 = vunpack.c.l.b16 %v994
        %v1180 = vunpack.c.l.b16 %v995
        %v1181 = vunpack.c.l.b16 %v996
        %v1182 = vunpack.c.l.b16 %v997
        %v1183 = vpack.c.b16 %v1176, %v1175
        %v1184 = vpack.c.b16 %v1178, %v1177
        %v1185 = vpack.c.b16 %v1180, %v1179
        %v1186 = vpack.c.b16 %v1182, %v1181
        %1191 = vmatprep.subr.bf16.mxu0 0
        %1192 = vmatpush1.bf16.msra.mxu0 %v1183
        %1193 = vmatprep.subr.bf16.mxu0 0
        %1194 = vmatpush1.bf16.msra.mxu0 %v1184
        %1195 = vmatprep.subr.bf16.mxu0 0
        %1196 = vmatpush1.bf16.msra.mxu0 %v1185
        %1197 = vmatprep.subr.bf16.mxu0 0
        %1198 = vmatpush1.bf16.msra.mxu0 %v1186
        %1199 = vmatprep.subr.bf16.mxu0 0
        %1200 = vmatpush1.bf16.msra.mxu0 0
        %1201 = vmatprep.subr.bf16.mxu0 0
        %1202 = vmatpush1.bf16.msra.mxu0 0
        %1203 = vmatprep.subr.bf16.mxu0 0
        %1204 = vmatpush1.bf16.msra.mxu0 0
        %1205 = vmatprep.subr.bf16.mxu0 0
        %1206 = vmatpush1.bf16.msra.mxu0 0
        %1207 = vmatprep.subr.bf16.mxu0 0
        %1208 = vmatpush1.bf16.msra.mxu0 0
        %1209 = vmatprep.subr.bf16.mxu0 0
        %1210 = vmatpush1.bf16.msra.mxu0 0
        %1211 = vmatprep.subr.bf16.mxu0 0
        %1212 = vmatpush1.bf16.msra.mxu0 0
        %1213 = vmatprep.subr.bf16.mxu0 0
        %1214 = vmatpush1.bf16.msra.mxu0 0
        %1215 = vmatprep.subr.bf16.mxu0 0
        %1216 = vmatpush1.bf16.msra.mxu0 0
        %1217 = vmatprep.subr.bf16.mxu0 0
        %1218 = vmatpush1.bf16.msra.mxu0 0
        %1219 = vmatprep.subr.bf16.mxu0 0
        %1220 = vmatpush1.bf16.msra.mxu0 0
        %1221 = vmatprep.subr.bf16.mxu0 0
        %1222 = vmatpush1.bf16.msra.mxu0 0
        %1223 = vmatprep.mubr.bf16.mxu0 0
        %1224 = vmatmul.mubr.bf16.gmra.mrb[0].mxu0 %v491
        %v1225 = vpop.f32.mrb[0].mxu0
        %v1226 = vadd.f32 %v1070, %v1225
        %v1227 = vpop.f32.mrb[0].mxu0
        %v1228 = vpop.f32.mrb[0].mxu0
        %v1229 = vpop.f32.mrb[0].mxu0
        %1230 = vdwg.mxu0
        %v1239 = vunpack.c.l.b16 %v998
        %v1240 = vunpack.c.l.b16 %v999
        %v1241 = vunpack.c.l.b16 %v1000
        %v1242 = vunpack.c.l.b16 %v1001
        %v1243 = vunpack.c.l.b16 %v1002
        %v1244 = vunpack.c.l.b16 %v1003
        %v1245 = vunpack.c.l.b16 %v1004
        %v1246 = vunpack.c.l.b16 %v1005
        %v1247 = vpack.c.b16 %v1240, %v1239
        %v1248 = vpack.c.b16 %v1242, %v1241
        %v1249 = vpack.c.b16 %v1244, %v1243
        %v1250 = vpack.c.b16 %v1246, %v1245
        %1255 = vmatprep.subr.bf16.mxu0 0
        %1256 = vmatpush1.bf16.msra.mxu0 %v1247
        %1257 = vmatprep.subr.bf16.mxu0 0
        %1258 = vmatpush1.bf16.msra.mxu0 %v1248
        %1259 = vmatprep.subr.bf16.mxu0 0
        %1260 = vmatpush1.bf16.msra.mxu0 %v1249
        %1261 = vmatprep.subr.bf16.mxu0 0
        %1262 = vmatpush1.bf16.msra.mxu0 %v1250
        %1263 = vmatprep.subr.bf16.mxu0 0
        %1264 = vmatpush1.bf16.msra.mxu0 0
        %1265 = vmatprep.subr.bf16.mxu0 0
        %1266 = vmatpush1.bf16.msra.mxu0 0
        %1267 = vmatprep.subr.bf16.mxu0 0
        %1268 = vmatpush1.bf16.msra.mxu0 0
        %1269 = vmatprep.subr.bf16.mxu0 0
        %1270 = vmatpush1.bf16.msra.mxu0 0
        %1271 = vmatprep.subr.bf16.mxu0 0
        %1272 = vmatpush1.bf16.msra.mxu0 0
        %1273 = vmatprep.subr.bf16.mxu0 0
        %1274 = vmatpush1.bf16.msra.mxu0 0
        %1275 = vmatprep.subr.bf16.mxu0 0
        %1276 = vmatpush1.bf16.msra.mxu0 0
        %1277 = vmatprep.subr.bf16.mxu0 0
        %1278 = vmatpush1.bf16.msra.mxu0 0
        %1279 = vmatprep.subr.bf16.mxu0 0
        %1280 = vmatpush1.bf16.msra.mxu0 0
        %1281 = vmatprep.subr.bf16.mxu0 0
        %1282 = vmatpush1.bf16.msra.mxu0 0
        %1283 = vmatprep.subr.bf16.mxu0 0
        %1284 = vmatpush1.bf16.msra.mxu0 0
        %1285 = vmatprep.subr.bf16.mxu0 0
        %1286 = vmatpush1.bf16.msra.mxu0 0
        %1287 = vmatprep.mubr.bf16.mxu0 0
        %1288 = vmatmul.mubr.bf16.gmra.mrb[0].mxu0 %v491
        %v1289 = vpop.f32.mrb[0].mxu0
        %v1290 = vadd.f32 %v1074, %v1289
        %v1291 = vpop.f32.mrb[0].mxu0
        %v1292 = vpop.f32.mrb[0].mxu0
        %v1293 = vpop.f32.mrb[0].mxu0
        %1294 = vdwg.mxu0
        %v1303 = vunpack.c.l.b16 %v1006
        %v1304 = vunpack.c.l.b16 %v1007
        %v1305 = vunpack.c.l.b16 %v1008
        %v1306 = vunpack.c.l.b16 %v1009
        %v1307 = vunpack.c.l.b16 %v1010
        %v1308 = vunpack.c.l.b16 %v1011
        %v1309 = vunpack.c.l.b16 %v1012
        %v1310 = vunpack.c.l.b16 %v1013
        %v1311 = vpack.c.b16 %v1304, %v1303
        %v1312 = vpack.c.b16 %v1306, %v1305
        %v1313 = vpack.c.b16 %v1308, %v1307
        %v1314 = vpack.c.b16 %v1310, %v1309
        %1319 = vmatprep.subr.bf16.mxu0 0
        %1320 = vmatpush1.bf16.msra.mxu0 %v1311
        %1321 = vmatprep.subr.bf16.mxu0 0
        %1322 = vmatpush1.bf16.msra.mxu0 %v1312
        %1323 = vmatprep.subr.bf16.mxu0 0
        %1324 = vmatpush1.bf16.msra.mxu0 %v1313
        %1325 = vmatprep.subr.bf16.mxu0 0
        %1326 = vmatpush1.bf16.msra.mxu0 %v1314
        %1327 = vmatprep.subr.bf16.mxu0 0
        %1328 = vmatpush1.bf16.msra.mxu0 0
        %1329 = vmatprep.subr.bf16.mxu0 0
        %1330 = vmatpush1.bf16.msra.mxu0 0
        %1331 = vmatprep.subr.bf16.mxu0 0
        %1332 = vmatpush1.bf16.msra.mxu0 0
        %1333 = vmatprep.subr.bf16.mxu0 0
        %1334 = vmatpush1.bf16.msra.mxu0 0
        %1335 = vmatprep.subr.bf16.mxu0 0
        %1336 = vmatpush1.bf16.msra.mxu0 0
        %1337 = vmatprep.subr.bf16.mxu0 0
        %1338 = vmatpush1.bf16.msra.mxu0 0
        %1339 = vmatprep.subr.bf16.mxu0 0
        %1340 = vmatpush1.bf16.msra.mxu0 0
        %1341 = vmatprep.subr.bf16.mxu0 0
        %1342 = vmatpush1.bf16.msra.mxu0 0
        %1343 = vmatprep.subr.bf16.mxu0 0
        %1344 = vmatpush1.bf16.msra.mxu0 0
        %1345 = vmatprep.subr.bf16.mxu0 0
        %1346 = vmatpush1.bf16.msra.mxu0 0
        %1347 = vmatprep.subr.bf16.mxu0 0
        %1348 = vmatpush1.bf16.msra.mxu0 0
        %1349 = vmatprep.subr.bf16.mxu0 0
        %1350 = vmatpush1.bf16.msra.mxu0 0
        %1351 = vmatprep.mubr.bf16.mxu0 0
        %1352 = vmatmul.mubr.bf16.gmra.mrb[0].mxu0 %v491
        %v1353 = vpop.f32.mrb[0].mxu0
        %v1354 = vadd.f32 %v1078, %v1353
        %v1355 = vpop.f32.mrb[0].mxu0
        %v1356 = vpop.f32.mrb[0].mxu0
        %v1357 = vpop.f32.mrb[0].mxu0
        %1358 = vdwg.mxu0
        %v1367 = vunpack.c.l.b16 %v1014
        %v1368 = vunpack.c.l.b16 %v1015
        %v1369 = vunpack.c.l.b16 %v1016
        %v1370 = vunpack.c.l.b16 %v1017
        %v1371 = vunpack.c.l.b16 %v1018
        %v1372 = vunpack.c.l.b16 %v1019
        %v1373 = vunpack.c.l.b16 %v1020
        %v1374 = vunpack.c.l.b16 %v1021
        %v1375 = vpack.c.b16 %v1368, %v1367
        %v1376 = vpack.c.b16 %v1370, %v1369
        %v1377 = vpack.c.b16 %v1372, %v1371
        %v1378 = vpack.c.b16 %v1374, %v1373
        %1383 = vmatprep.subr.bf16.mxu0 0
        %1384 = vmatpush1.bf16.msra.mxu0 %v1375
        %1385 = vmatprep.subr.bf16.mxu0 0
        %1386 = vmatpush1.bf16.msra.mxu0 %v1376
        %1387 = vmatprep.subr.bf16.mxu0 0
        %1388 = vmatpush1.bf16.msra.mxu0 %v1377
        %1389 = vmatprep.subr.bf16.mxu0 0
        %1390 = vmatpush1.bf16.msra.mxu0 %v1378
        %1391 = vmatprep.subr.bf16.mxu0 0
        %1392 = vmatpush1.bf16.msra.mxu0 0
        %1393 = vmatprep.subr.bf16.mxu0 0
        %1394 = vmatpush1.bf16.msra.mxu0 0
        %1395 = vmatprep.subr.bf16.mxu0 0
        %1396 = vmatpush1.bf16.msra.mxu0 0
        %1397 = vmatprep.subr.bf16.mxu0 0
        %1398 = vmatpush1.bf16.msra.mxu0 0
        %1399 = vmatprep.subr.bf16.mxu0 0
        %1400 = vmatpush1.bf16.msra.mxu0 0
        %1401 = vmatprep.subr.bf16.mxu0 0
        %1402 = vmatpush1.bf16.msra.mxu0 0
        %1403 = vmatprep.subr.bf16.mxu0 0
        %1404 = vmatpush1.bf16.msra.mxu0 0
        %1405 = vmatprep.subr.bf16.mxu0 0
        %1406 = vmatpush1.bf16.msra.mxu0 0
        %1407 = vmatprep.subr.bf16.mxu0 0
        %1408 = vmatpush1.bf16.msra.mxu0 0
        %1409 = vmatprep.subr.bf16.mxu0 0
        %1410 = vmatpush1.bf16.msra.mxu0 0
        %1411 = vmatprep.subr.bf16.mxu0 0
        %1412 = vmatpush1.bf16.msra.mxu0 0
        %1413 = vmatprep.subr.bf16.mxu0 0
        %1414 = vmatpush1.bf16.msra.mxu0 0
        %1415 = vmatprep.mubr.bf16.mxu0 0
        %1416 = vmatmul.mubr.bf16.gmra.mrb[0].mxu0 %v491
        %v1417 = vpop.f32.mrb[0].mxu0
        %v1418 = vadd.f32 %v1082, %v1417
        %v1419 = vpop.f32.mrb[0].mxu0
        %v1420 = vpop.f32.mrb[0].mxu0
        %v1421 = vpop.f32.mrb[0].mxu0
        %1422 = vdwg.mxu0
        %v1431 = vunpack.c.l.b16 %v1022
        %v1432 = vunpack.c.l.b16 %v1023
        %v1433 = vunpack.c.l.b16 %v1024
        %v1434 = vunpack.c.l.b16 %v1025
        %v1435 = vunpack.c.l.b16 %v1026
        %v1436 = vunpack.c.l.b16 %v1027
        %v1437 = vunpack.c.l.b16 %v1028
        %v1438 = vunpack.c.l.b16 %v1029
        %v1439 = vpack.c.b16 %v1432, %v1431
        %v1440 = vpack.c.b16 %v1434, %v1433
        %v1441 = vpack.c.b16 %v1436, %v1435
        %v1442 = vpack.c.b16 %v1438, %v1437
        %1447 = vmatprep.subr.bf16.mxu0 0
        %1448 = vmatpush1.bf16.msra.mxu0 %v1439
        %1449 = vmatprep.subr.bf16.mxu0 0
        %1450 = vmatpush1.bf16.msra.mxu0 %v1440
        %1451 = vmatprep.subr.bf16.mxu0 0
        %1452 = vmatpush1.bf16.msra.mxu0 %v1441
        %1453 = vmatprep.subr.bf16.mxu0 0
        %1454 = vmatpush1.bf16.msra.mxu0 %v1442
        %1455 = vmatprep.subr.bf16.mxu0 0
        %1456 = vmatpush1.bf16.msra.mxu0 0
        %1457 = vmatprep.subr.bf16.mxu0 0
        %1458 = vmatpush1.bf16.msra.mxu0 0
        %1459 = vmatprep.subr.bf16.mxu0 0
        %1460 = vmatpush1.bf16.msra.mxu0 0
        %1461 = vmatprep.subr.bf16.mxu0 0
        %1462 = vmatpush1.bf16.msra.mxu0 0
        %1463 = vmatprep.subr.bf16.mxu0 0
        %1464 = vmatpush1.bf16.msra.mxu0 0
        %1465 = vmatprep.subr.bf16.mxu0 0
        %1466 = vmatpush1.bf16.msra.mxu0 0
        %1467 = vmatprep.subr.bf16.mxu0 0
        %1468 = vmatpush1.bf16.msra.mxu0 0
        %1469 = vmatprep.subr.bf16.mxu0 0
        %1470 = vmatpush1.bf16.msra.mxu0 0
        %1471 = vmatprep.subr.bf16.mxu0 0
        %1472 = vmatpush1.bf16.msra.mxu0 0
        %1473 = vmatprep.subr.bf16.mxu0 0
        %1474 = vmatpush1.bf16.msra.mxu0 0
        %1475 = vmatprep.subr.bf16.mxu0 0
        %1476 = vmatpush1.bf16.msra.mxu0 0
        %1477 = vmatprep.subr.bf16.mxu0 0
        %1478 = vmatpush1.bf16.msra.mxu0 0
        %1479 = vmatprep.mubr.bf16.mxu0 0
        %1480 = vmatmul.mubr.bf16.gmra.mrb[0].mxu0 %v491
        %v1481 = vpop.f32.mrb[0].mxu0
        %v1482 = vadd.f32 %v1086, %v1481
        %v1483 = vpop.f32.mrb[0].mxu0
        %v1484 = vpop.f32.mrb[0].mxu0
        %v1485 = vpop.f32.mrb[0].mxu0
        %1486 = vdwg.mxu0
        %v1495 = vunpack.c.l.b16 %v1030
        %v1496 = vunpack.c.l.b16 %v1031
        %v1497 = vunpack.c.l.b16 %v1032
        %v1498 = vunpack.c.l.b16 %v1033
        %v1499 = vunpack.c.l.b16 %v1034
        %v1500 = vunpack.c.l.b16 %v1035
        %v1501 = vunpack.c.l.b16 %v1036
        %v1502 = vunpack.c.l.b16 %v1037
        %v1503 = vpack.c.b16 %v1496, %v1495
        %v1504 = vpack.c.b16 %v1498, %v1497
        %v1505 = vpack.c.b16 %v1500, %v1499
        %v1506 = vpack.c.b16 %v1502, %v1501
        %1511 = vmatprep.subr.bf16.mxu0 0
        %1512 = vmatpush1.bf16.msra.mxu0 %v1503
        %1513 = vmatprep.subr.bf16.mxu0 0
        %1514 = vmatpush1.bf16.msra.mxu0 %v1504
        %1515 = vmatprep.subr.bf16.mxu0 0
        %1516 = vmatpush1.bf16.msra.mxu0 %v1505
        %1517 = vmatprep.subr.bf16.mxu0 0
        %1518 = vmatpush1.bf16.msra.mxu0 %v1506
        %1519 = vmatprep.subr.bf16.mxu0 0
        %1520 = vmatpush1.bf16.msra.mxu0 0
        %1521 = vmatprep.subr.bf16.mxu0 0
        %1522 = vmatpush1.bf16.msra.mxu0 0
        %1523 = vmatprep.subr.bf16.mxu0 0
        %1524 = vmatpush1.bf16.msra.mxu0 0
        %1525 = vmatprep.subr.bf16.mxu0 0
        %1526 = vmatpush1.bf16.msra.mxu0 0
        %1527 = vmatprep.subr.bf16.mxu0 0
        %1528 = vmatpush1.bf16.msra.mxu0 0
        %1529 = vmatprep.subr.bf16.mxu0 0
        %1530 = vmatpush1.bf16.msra.mxu0 0
        %1531 = vmatprep.subr.bf16.mxu0 0
        %1532 = vmatpush1.bf16.msra.mxu0 0
        %1533 = vmatprep.subr.bf16.mxu0 0
        %1534 = vmatpush1.bf16.msra.mxu0 0
        %1535 = vmatprep.subr.bf16.mxu0 0
        %1536 = vmatpush1.bf16.msra.mxu0 0
        %1537 = vmatprep.subr.bf16.mxu0 0
        %1538 = vmatpush1.bf16.msra.mxu0 0
        %1539 = vmatprep.subr.bf16.mxu0 0
        %1540 = vmatpush1.bf16.msra.mxu0 0
        %1541 = vmatprep.subr.bf16.mxu0 0
        %1542 = vmatpush1.bf16.msra.mxu0 0
        %1543 = vmatprep.mubr.bf16.mxu0 0
        %1544 = vmatmul.mubr.bf16.gmra.mrb[0].mxu0 %v491
        %v1545 = vpop.f32.mrb[0].mxu0
        %v1546 = vadd.f32 %v1090, %v1545
        %v1547 = vpop.f32.mrb[0].mxu0
        %v1548 = vpop.f32.mrb[0].mxu0
        %v1549 = vpop.f32.mrb[0].mxu0
        %1550 = vdwg.mxu0
        %v1559 = vunpack.c.l.b16 %v1038
        %v1560 = vunpack.c.l.b16 %v1039
        %v1561 = vunpack.c.l.b16 %v1040
        %v1562 = vunpack.c.l.b16 %v1041
        %v1563 = vunpack.c.l.b16 %v1042
        %v1564 = vunpack.c.l.b16 %v1043
        %v1565 = vunpack.c.l.b16 %v1044
        %v1566 = vunpack.c.l.b16 %v1045
        %v1567 = vpack.c.b16 %v1560, %v1559
        %v1568 = vpack.c.b16 %v1562, %v1561
        %v1569 = vpack.c.b16 %v1564, %v1563
        %v1570 = vpack.c.b16 %v1566, %v1565
        %1575 = vmatprep.subr.bf16.mxu0 0
        %1576 = vmatpush1.bf16.msra.mxu0 %v1567
        %1577 = vmatprep.subr.bf16.mxu0 0
        %1578 = vmatpush1.bf16.msra.mxu0 %v1568
        %1579 = vmatprep.subr.bf16.mxu0 0
        %1580 = vmatpush1.bf16.msra.mxu0 %v1569
        %1581 = vmatprep.subr.bf16.mxu0 0
        %1582 = vmatpush1.bf16.msra.mxu0 %v1570
        %1583 = vmatprep.subr.bf16.mxu0 0
        %1584 = vmatpush1.bf16.msra.mxu0 0
        %1585 = vmatprep.subr.bf16.mxu0 0
        %1586 = vmatpush1.bf16.msra.mxu0 0
        %1587 = vmatprep.subr.bf16.mxu0 0
        %1588 = vmatpush1.bf16.msra.mxu0 0
        %1589 = vmatprep.subr.bf16.mxu0 0
        %1590 = vmatpush1.bf16.msra.mxu0 0
        %1591 = vmatprep.subr.bf16.mxu0 0
        %1592 = vmatpush1.bf16.msra.mxu0 0
        %1593 = vmatprep.subr.bf16.mxu0 0
        %1594 = vmatpush1.bf16.msra.mxu0 0
        %1595 = vmatprep.subr.bf16.mxu0 0
        %1596 = vmatpush1.bf16.msra.mxu0 0
        %1597 = vmatprep.subr.bf16.mxu0 0
        %1598 = vmatpush1.bf16.msra.mxu0 0
        %1599 = vmatprep.subr.bf16.mxu0 0
        %1600 = vmatpush1.bf16.msra.mxu0 0
        %1601 = vmatprep.subr.bf16.mxu0 0
        %1602 = vmatpush1.bf16.msra.mxu0 0
        %1603 = vmatprep.subr.bf16.mxu0 0
        %1604 = vmatpush1.bf16.msra.mxu0 0
        %1605 = vmatprep.subr.bf16.mxu0 0
        %1606 = vmatpush1.bf16.msra.mxu0 0
        %1607 = vmatprep.mubr.bf16.mxu0 0
        %1608 = vmatmul.mubr.bf16.gmra.mrb[0].mxu0 %v491
        %v1609 = vpop.f32.mrb[0].mxu0
        %v1610 = vadd.f32 %v1094, %v1609
        %v1611 = vpop.f32.mrb[0].mxu0
        %v1612 = vpop.f32.mrb[0].mxu0
        %v1613 = vpop.f32.mrb[0].mxu0
        %1614 = vdwg.mxu0
        %s1615 = scalar_lea.vmem %s3, 512
        %v1616 = vld [vmem:[%s1615] sm:$0xf]
        %v1617 = vld [vmem:[%s1615 + $0x4] sm:$0xf]
        %v1618 = vld [vmem:[%s1615 + $0x8] sm:$0xf]
        %v1619 = vld [vmem:[%s1615 + $0xc] sm:$0xf]
        %v1620 = vld [vmem:[%s1615 + $0x10] sm:$0xf]
        %v1621 = vld [vmem:[%s1615 + $0x14] sm:$0xf]
        %v1622 = vld [vmem:[%s1615 + $0x18] sm:$0xf]
        %v1623 = vld [vmem:[%s1615 + $0x1c] sm:$0xf]
        %v1624 = vld [vmem:[%s1615 + $0x20] sm:$0xf]
        %v1625 = vld [vmem:[%s1615 + $0x24] sm:$0xf]
        %v1626 = vld [vmem:[%s1615 + $0x28] sm:$0xf]
        %v1627 = vld [vmem:[%s1615 + $0x2c] sm:$0xf]
        %v1628 = vld [vmem:[%s1615 + $0x30] sm:$0xf]
        %v1629 = vld [vmem:[%s1615 + $0x34] sm:$0xf]
        %v1630 = vld [vmem:[%s1615 + $0x38] sm:$0xf]
        %v1631 = vld [vmem:[%s1615 + $0x3c] sm:$0xf]
        %v1632 = vld [vmem:[%s1615 + $0x40] sm:$0xf]
        %v1633 = vld [vmem:[%s1615 + $0x44] sm:$0xf]
        %v1634 = vld [vmem:[%s1615 + $0x48] sm:$0xf]
        %v1635 = vld [vmem:[%s1615 + $0x4c] sm:$0xf]
        %v1636 = vld [vmem:[%s1615 + $0x50] sm:$0xf]
        %v1637 = vld [vmem:[%s1615 + $0x54] sm:$0xf]
        %v1638 = vld [vmem:[%s1615 + $0x58] sm:$0xf]
        %v1639 = vld [vmem:[%s1615 + $0x5c] sm:$0xf]
        %v1640 = vld [vmem:[%s1615 + $0x60] sm:$0xf]
        %v1641 = vld [vmem:[%s1615 + $0x64] sm:$0xf]
        %v1642 = vld [vmem:[%s1615 + $0x68] sm:$0xf]
        %v1643 = vld [vmem:[%s1615 + $0x6c] sm:$0xf]
        %v1644 = vld [vmem:[%s1615 + $0x70] sm:$0xf]
        %v1645 = vld [vmem:[%s1615 + $0x74] sm:$0xf]
        %v1646 = vld [vmem:[%s1615 + $0x78] sm:$0xf]
        %v1647 = vld [vmem:[%s1615 + $0x7c] sm:$0xf]
        %v1648 = vld [vmem:[%s1615 + $0x80] sm:$0xf]
        %v1649 = vld [vmem:[%s1615 + $0x84] sm:$0xf]
        %v1650 = vld [vmem:[%s1615 + $0x88] sm:$0xf]
        %v1651 = vld [vmem:[%s1615 + $0x8c] sm:$0xf]
        %v1652 = vld [vmem:[%s1615 + $0x90] sm:$0xf]
        %v1653 = vld [vmem:[%s1615 + $0x94] sm:$0xf]
        %v1654 = vld [vmem:[%s1615 + $0x98] sm:$0xf]
        %v1655 = vld [vmem:[%s1615 + $0x9c] sm:$0xf]
        %v1656 = vld [vmem:[%s1615 + $0xa0] sm:$0xf]
        %v1657 = vld [vmem:[%s1615 + $0xa4] sm:$0xf]
        %v1658 = vld [vmem:[%s1615 + $0xa8] sm:$0xf]
        %v1659 = vld [vmem:[%s1615 + $0xac] sm:$0xf]
        %v1660 = vld [vmem:[%s1615 + $0xb0] sm:$0xf]
        %v1661 = vld [vmem:[%s1615 + $0xb4] sm:$0xf]
        %v1662 = vld [vmem:[%s1615 + $0xb8] sm:$0xf]
        %v1663 = vld [vmem:[%s1615 + $0xbc] sm:$0xf]
        %v1664 = vld [vmem:[%s1615 + $0xc0] sm:$0xf]
        %v1665 = vld [vmem:[%s1615 + $0xc4] sm:$0xf]
        %v1666 = vld [vmem:[%s1615 + $0xc8] sm:$0xf]
        %v1667 = vld [vmem:[%s1615 + $0xcc] sm:$0xf]
        %v1668 = vld [vmem:[%s1615 + $0xd0] sm:$0xf]
        %v1669 = vld [vmem:[%s1615 + $0xd4] sm:$0xf]
        %v1670 = vld [vmem:[%s1615 + $0xd8] sm:$0xf]
        %v1671 = vld [vmem:[%s1615 + $0xdc] sm:$0xf]
        %v1672 = vld [vmem:[%s1615 + $0xe0] sm:$0xf]
        %v1673 = vld [vmem:[%s1615 + $0xe4] sm:$0xf]
        %v1674 = vld [vmem:[%s1615 + $0xe8] sm:$0xf]
        %v1675 = vld [vmem:[%s1615 + $0xec] sm:$0xf]
        %v1676 = vld [vmem:[%s1615 + $0xf0] sm:$0xf]
        %v1677 = vld [vmem:[%s1615 + $0xf4] sm:$0xf]
        %v1678 = vld [vmem:[%s1615 + $0xf8] sm:$0xf]
        %v1679 = vld [vmem:[%s1615 + $0xfc] sm:$0xf]
        %s1680 = scalar_lea.vmem %s4, 16
        %v1681 = vld [vmem:[%s1680] sm:$0x1]
        %v1682 = vld [vmem:[%s1680 + $0x1] sm:$0x1]
        %v1683 = vld [vmem:[%s1680 + $0x2] sm:$0x1]
        %v1684 = vld [vmem:[%s1680 + $0x3] sm:$0x1]
        %v1685 = vld [vmem:[%s1680 + $0x4] sm:$0x1]
        %v1686 = vld [vmem:[%s1680 + $0x5] sm:$0x1]
        %v1687 = vld [vmem:[%s1680 + $0x6] sm:$0x1]
        %v1688 = vld [vmem:[%s1680 + $0x7] sm:$0x1]
        %v1697 = vlaneseq
        %v1698 = vshrl.u32 %v1697, 7
        %v1699 = vsub.s32 0, %v1698
        %v1700 = vrot.slane %v1681, %v1699
        %v1701 = vlaneseq
        %v1702 = vshrl.u32 %v1701, 7
        %v1703 = vsub.s32 0, %v1702
        %v1704 = vrot.slane %v1682, %v1703
        %v1705 = vlaneseq
        %v1706 = vshrl.u32 %v1705, 7
        %v1707 = vsub.s32 0, %v1706
        %v1708 = vrot.slane %v1683, %v1707
        %v1709 = vlaneseq
        %v1710 = vshrl.u32 %v1709, 7
        %v1711 = vsub.s32 0, %v1710
        %v1712 = vrot.slane %v1684, %v1711
        %v1713 = vlaneseq
        %v1714 = vshrl.u32 %v1713, 7
        %v1715 = vsub.s32 0, %v1714
        %v1716 = vrot.slane %v1685, %v1715
        %v1717 = vlaneseq
        %v1718 = vshrl.u32 %v1717, 7
        %v1719 = vsub.s32 0, %v1718
        %v1720 = vrot.slane %v1686, %v1719
        %v1721 = vlaneseq
        %v1722 = vshrl.u32 %v1721, 7
        %v1723 = vsub.s32 0, %v1722
        %v1724 = vrot.slane %v1687, %v1723
        %v1725 = vlaneseq
        %v1726 = vshrl.u32 %v1725, 7
        %v1727 = vsub.s32 0, %v1726
        %v1728 = vrot.slane %v1688, %v1727
        %v1745 = vunpack.c.l.b16 %v1616
        %v1746 = vunpack.c.l.b16 %v1617
        %v1747 = vunpack.c.l.b16 %v1618
        %v1748 = vunpack.c.l.b16 %v1619
        %v1749 = vunpack.c.l.b16 %v1620
        %v1750 = vunpack.c.l.b16 %v1621
        %v1751 = vunpack.c.l.b16 %v1622
        %v1752 = vunpack.c.l.b16 %v1623
        %v1753 = vpack.c.b16 %v1746, %v1745
        %v1754 = vpack.c.b16 %v1748, %v1747
        %v1755 = vpack.c.b16 %v1750, %v1749
        %v1756 = vpack.c.b16 %v1752, %v1751
        %1761 = vmatprep.subr.bf16.mxu0 0
        %1762 = vmatpush1.bf16.msra.mxu0 %v1753
        %1763 = vmatprep.subr.bf16.mxu0 0
        %1764 = vmatpush1.bf16.msra.mxu0 %v1754
        %1765 = vmatprep.subr.bf16.mxu0 0
        %1766 = vmatpush1.bf16.msra.mxu0 %v1755
        %1767 = vmatprep.subr.bf16.mxu0 0
        %1768 = vmatpush1.bf16.msra.mxu0 %v1756
        %1769 = vmatprep.subr.bf16.mxu0 0
        %1770 = vmatpush1.bf16.msra.mxu0 0
        %1771 = vmatprep.subr.bf16.mxu0 0
        %1772 = vmatpush1.bf16.msra.mxu0 0
        %1773 = vmatprep.subr.bf16.mxu0 0
        %1774 = vmatpush1.bf16.msra.mxu0 0
        %1775 = vmatprep.subr.bf16.mxu0 0
        %1776 = vmatpush1.bf16.msra.mxu0 0
        %1777 = vmatprep.subr.bf16.mxu0 0
        %1778 = vmatpush1.bf16.msra.mxu0 0
        %1779 = vmatprep.subr.bf16.mxu0 0
        %1780 = vmatpush1.bf16.msra.mxu0 0
        %1781 = vmatprep.subr.bf16.mxu0 0
        %1782 = vmatpush1.bf16.msra.mxu0 0
        %1783 = vmatprep.subr.bf16.mxu0 0
        %1784 = vmatpush1.bf16.msra.mxu0 0
        %1785 = vmatprep.subr.bf16.mxu0 0
        %1786 = vmatpush1.bf16.msra.mxu0 0
        %1787 = vmatprep.subr.bf16.mxu0 0
        %1788 = vmatpush1.bf16.msra.mxu0 0
        %1789 = vmatprep.subr.bf16.mxu0 0
        %1790 = vmatpush1.bf16.msra.mxu0 0
        %1791 = vmatprep.subr.bf16.mxu0 0
        %1792 = vmatpush1.bf16.msra.mxu0 0
        %1793 = vmatprep.mubr.bf16.mxu0 0
        %1794 = vmatmul.mubr.bf16.gmra.mrb[0].mxu0 %v491
        %v1795 = vpop.f32.mrb[0].mxu0
        %v1796 = vadd.f32 %v1700, %v1795
        %v1797 = vpop.f32.mrb[0].mxu0
        %v1798 = vpop.f32.mrb[0].mxu0
        %v1799 = vpop.f32.mrb[0].mxu0
        %1800 = vdwg.mxu0
        %v1809 = vunpack.c.l.b16 %v1624
        %v1810 = vunpack.c.l.b16 %v1625
        %v1811 = vunpack.c.l.b16 %v1626
        %v1812 = vunpack.c.l.b16 %v1627
        %v1813 = vunpack.c.l.b16 %v1628
        %v1814 = vunpack.c.l.b16 %v1629
        %v1815 = vunpack.c.l.b16 %v1630
        %v1816 = vunpack.c.l.b16 %v1631
        %v1817 = vpack.c.b16 %v1810, %v1809
        %v1818 = vpack.c.b16 %v1812, %v1811
        %v1819 = vpack.c.b16 %v1814, %v1813
        %v1820 = vpack.c.b16 %v1816, %v1815
        %1825 = vmatprep.subr.bf16.mxu0 0
        %1826 = vmatpush1.bf16.msra.mxu0 %v1817
        %1827 = vmatprep.subr.bf16.mxu0 0
        %1828 = vmatpush1.bf16.msra.mxu0 %v1818
        %1829 = vmatprep.subr.bf16.mxu0 0
        %1830 = vmatpush1.bf16.msra.mxu0 %v1819
        %1831 = vmatprep.subr.bf16.mxu0 0
        %1832 = vmatpush1.bf16.msra.mxu0 %v1820
        %1833 = vmatprep.subr.bf16.mxu0 0
        %1834 = vmatpush1.bf16.msra.mxu0 0
        %1835 = vmatprep.subr.bf16.mxu0 0
        %1836 = vmatpush1.bf16.msra.mxu0 0
        %1837 = vmatprep.subr.bf16.mxu0 0
        %1838 = vmatpush1.bf16.msra.mxu0 0
        %1839 = vmatprep.subr.bf16.mxu0 0
        %1840 = vmatpush1.bf16.msra.mxu0 0
        %1841 = vmatprep.subr.bf16.mxu0 0
        %1842 = vmatpush1.bf16.msra.mxu0 0
        %1843 = vmatprep.subr.bf16.mxu0 0
        %1844 = vmatpush1.bf16.msra.mxu0 0
        %1845 = vmatprep.subr.bf16.mxu0 0
        %1846 = vmatpush1.bf16.msra.mxu0 0
        %1847 = vmatprep.subr.bf16.mxu0 0
        %1848 = vmatpush1.bf16.msra.mxu0 0
        %1849 = vmatprep.subr.bf16.mxu0 0
        %1850 = vmatpush1.bf16.msra.mxu0 0
        %1851 = vmatprep.subr.bf16.mxu0 0
        %1852 = vmatpush1.bf16.msra.mxu0 0
        %1853 = vmatprep.subr.bf16.mxu0 0
        %1854 = vmatpush1.bf16.msra.mxu0 0
        %1855 = vmatprep.subr.bf16.mxu0 0
        %1856 = vmatpush1.bf16.msra.mxu0 0
        %1857 = vmatprep.mubr.bf16.mxu0 0
        %1858 = vmatmul.mubr.bf16.gmra.mrb[0].mxu0 %v491
        %v1859 = vpop.f32.mrb[0].mxu0
        %v1860 = vadd.f32 %v1704, %v1859
        %v1861 = vpop.f32.mrb[0].mxu0
        %v1862 = vpop.f32.mrb[0].mxu0
        %v1863 = vpop.f32.mrb[0].mxu0
        %1864 = vdwg.mxu0
        %v1873 = vunpack.c.l.b16 %v1632
        %v1874 = vunpack.c.l.b16 %v1633
        %v1875 = vunpack.c.l.b16 %v1634
        %v1876 = vunpack.c.l.b16 %v1635
        %v1877 = vunpack.c.l.b16 %v1636
        %v1878 = vunpack.c.l.b16 %v1637
        %v1879 = vunpack.c.l.b16 %v1638
        %v1880 = vunpack.c.l.b16 %v1639
        %v1881 = vpack.c.b16 %v1874, %v1873
        %v1882 = vpack.c.b16 %v1876, %v1875
        %v1883 = vpack.c.b16 %v1878, %v1877
        %v1884 = vpack.c.b16 %v1880, %v1879
        %1889 = vmatprep.subr.bf16.mxu0 0
        %1890 = vmatpush1.bf16.msra.mxu0 %v1881
        %1891 = vmatprep.subr.bf16.mxu0 0
        %1892 = vmatpush1.bf16.msra.mxu0 %v1882
        %1893 = vmatprep.subr.bf16.mxu0 0
        %1894 = vmatpush1.bf16.msra.mxu0 %v1883
        %1895 = vmatprep.subr.bf16.mxu0 0
        %1896 = vmatpush1.bf16.msra.mxu0 %v1884
        %1897 = vmatprep.subr.bf16.mxu0 0
        %1898 = vmatpush1.bf16.msra.mxu0 0
        %1899 = vmatprep.subr.bf16.mxu0 0
        %1900 = vmatpush1.bf16.msra.mxu0 0
        %1901 = vmatprep.subr.bf16.mxu0 0
        %1902 = vmatpush1.bf16.msra.mxu0 0
        %1903 = vmatprep.subr.bf16.mxu0 0
        %1904 = vmatpush1.bf16.msra.mxu0 0
        %1905 = vmatprep.subr.bf16.mxu0 0
        %1906 = vmatpush1.bf16.msra.mxu0 0
        %1907 = vmatprep.subr.bf16.mxu0 0
        %1908 = vmatpush1.bf16.msra.mxu0 0
        %1909 = vmatprep.subr.bf16.mxu0 0
        %1910 = vmatpush1.bf16.msra.mxu0 0
        %1911 = vmatprep.subr.bf16.mxu0 0
        %1912 = vmatpush1.bf16.msra.mxu0 0
        %1913 = vmatprep.subr.bf16.mxu0 0
        %1914 = vmatpush1.bf16.msra.mxu0 0
        %1915 = vmatprep.subr.bf16.mxu0 0
        %1916 = vmatpush1.bf16.msra.mxu0 0
        %1917 = vmatprep.subr.bf16.mxu0 0
        %1918 = vmatpush1.bf16.msra.mxu0 0
        %1919 = vmatprep.subr.bf16.mxu0 0
        %1920 = vmatpush1.bf16.msra.mxu0 0
        %1921 = vmatprep.mubr.bf16.mxu0 0
        %1922 = vmatmul.mubr.bf16.gmra.mrb[0].mxu0 %v491
        %v1923 = vpop.f32.mrb[0].mxu0
        %v1924 = vadd.f32 %v1708, %v1923
        %v1925 = vpop.f32.mrb[0].mxu0
        %v1926 = vpop.f32.mrb[0].mxu0
        %v1927 = vpop.f32.mrb[0].mxu0
        %1928 = vdwg.mxu0
        %v1937 = vunpack.c.l.b16 %v1640
        %v1938 = vunpack.c.l.b16 %v1641
        %v1939 = vunpack.c.l.b16 %v1642
        %v1940 = vunpack.c.l.b16 %v1643
        %v1941 = vunpack.c.l.b16 %v1644
        %v1942 = vunpack.c.l.b16 %v1645
        %v1943 = vunpack.c.l.b16 %v1646
        %v1944 = vunpack.c.l.b16 %v1647
        %v1945 = vpack.c.b16 %v1938, %v1937
        %v1946 = vpack.c.b16 %v1940, %v1939
        %v1947 = vpack.c.b16 %v1942, %v1941
        %v1948 = vpack.c.b16 %v1944, %v1943
        %1953 = vmatprep.subr.bf16.mxu0 0
        %1954 = vmatpush1.bf16.msra.mxu0 %v1945
        %1955 = vmatprep.subr.bf16.mxu0 0
        %1956 = vmatpush1.bf16.msra.mxu0 %v1946
        %1957 = vmatprep.subr.bf16.mxu0 0
        %1958 = vmatpush1.bf16.msra.mxu0 %v1947
        %1959 = vmatprep.subr.bf16.mxu0 0
        %1960 = vmatpush1.bf16.msra.mxu0 %v1948
        %1961 = vmatprep.subr.bf16.mxu0 0
        %1962 = vmatpush1.bf16.msra.mxu0 0
        %1963 = vmatprep.subr.bf16.mxu0 0
        %1964 = vmatpush1.bf16.msra.mxu0 0
        %1965 = vmatprep.subr.bf16.mxu0 0
        %1966 = vmatpush1.bf16.msra.mxu0 0
        %1967 = vmatprep.subr.bf16.mxu0 0
        %1968 = vmatpush1.bf16.msra.mxu0 0
        %1969 = vmatprep.subr.bf16.mxu0 0
        %1970 = vmatpush1.bf16.msra.mxu0 0
        %1971 = vmatprep.subr.bf16.mxu0 0
        %1972 = vmatpush1.bf16.msra.mxu0 0
        %1973 = vmatprep.subr.bf16.mxu0 0
        %1974 = vmatpush1.bf16.msra.mxu0 0
        %1975 = vmatprep.subr.bf16.mxu0 0
        %1976 = vmatpush1.bf16.msra.mxu0 0
        %1977 = vmatprep.subr.bf16.mxu0 0
        %1978 = vmatpush1.bf16.msra.mxu0 0
        %1979 = vmatprep.subr.bf16.mxu0 0
        %1980 = vmatpush1.bf16.msra.mxu0 0
        %1981 = vmatprep.subr.bf16.mxu0 0
        %1982 = vmatpush1.bf16.msra.mxu0 0
        %1983 = vmatprep.subr.bf16.mxu0 0
        %1984 = vmatpush1.bf16.msra.mxu0 0
        %1985 = vmatprep.mubr.bf16.mxu0 0
        %1986 = vmatmul.mubr.bf16.gmra.mrb[0].mxu0 %v491
        %v1987 = vpop.f32.mrb[0].mxu0
        %v1988 = vadd.f32 %v1712, %v1987
        %v1989 = vpop.f32.mrb[0].mxu0
        %v1990 = vpop.f32.mrb[0].mxu0
        %v1991 = vpop.f32.mrb[0].mxu0
        %1992 = vdwg.mxu0
        %v2001 = vunpack.c.l.b16 %v1648
        %v2002 = vunpack.c.l.b16 %v1649
        %v2003 = vunpack.c.l.b16 %v1650
        %v2004 = vunpack.c.l.b16 %v1651
        %v2005 = vunpack.c.l.b16 %v1652
        %v2006 = vunpack.c.l.b16 %v1653
        %v2007 = vunpack.c.l.b16 %v1654
        %v2008 = vunpack.c.l.b16 %v1655
        %v2009 = vpack.c.b16 %v2002, %v2001
        %v2010 = vpack.c.b16 %v2004, %v2003
        %v2011 = vpack.c.b16 %v2006, %v2005
        %v2012 = vpack.c.b16 %v2008, %v2007
        %2017 = vmatprep.subr.bf16.mxu0 0
        %2018 = vmatpush1.bf16.msra.mxu0 %v2009
        %2019 = vmatprep.subr.bf16.mxu0 0
        %2020 = vmatpush1.bf16.msra.mxu0 %v2010
        %2021 = vmatprep.subr.bf16.mxu0 0
        %2022 = vmatpush1.bf16.msra.mxu0 %v2011
        %2023 = vmatprep.subr.bf16.mxu0 0
        %2024 = vmatpush1.bf16.msra.mxu0 %v2012
        %2025 = vmatprep.subr.bf16.mxu0 0
        %2026 = vmatpush1.bf16.msra.mxu0 0
        %2027 = vmatprep.subr.bf16.mxu0 0
        %2028 = vmatpush1.bf16.msra.mxu0 0
        %2029 = vmatprep.subr.bf16.mxu0 0
        %2030 = vmatpush1.bf16.msra.mxu0 0
        %2031 = vmatprep.subr.bf16.mxu0 0
        %2032 = vmatpush1.bf16.msra.mxu0 0
        %2033 = vmatprep.subr.bf16.mxu0 0
        %2034 = vmatpush1.bf16.msra.mxu0 0
        %2035 = vmatprep.subr.bf16.mxu0 0
        %2036 = vmatpush1.bf16.msra.mxu0 0
        %2037 = vmatprep.subr.bf16.mxu0 0
        %2038 = vmatpush1.bf16.msra.mxu0 0
        %2039 = vmatprep.subr.bf16.mxu0 0
        %2040 = vmatpush1.bf16.msra.mxu0 0
        %2041 = vmatprep.subr.bf16.mxu0 0
        %2042 = vmatpush1.bf16.msra.mxu0 0
        %2043 = vmatprep.subr.bf16.mxu0 0
        %2044 = vmatpush1.bf16.msra.mxu0 0
        %2045 = vmatprep.subr.bf16.mxu0 0
        %2046 = vmatpush1.bf16.msra.mxu0 0
        %2047 = vmatprep.subr.bf16.mxu0 0
        %2048 = vmatpush1.bf16.msra.mxu0 0
        %2049 = vmatprep.mubr.bf16.mxu0 0
        %2050 = vmatmul.mubr.bf16.gmra.mrb[0].mxu0 %v491
        %v2051 = vpop.f32.mrb[0].mxu0
        %v2052 = vadd.f32 %v1716, %v2051
        %v2053 = vpop.f32.mrb[0].mxu0
        %v2054 = vpop.f32.mrb[0].mxu0
        %v2055 = vpop.f32.mrb[0].mxu0
        %2056 = vdwg.mxu0
        %v2065 = vunpack.c.l.b16 %v1656
        %v2066 = vunpack.c.l.b16 %v1657
        %v2067 = vunpack.c.l.b16 %v1658
        %v2068 = vunpack.c.l.b16 %v1659
        %v2069 = vunpack.c.l.b16 %v1660
        %v2070 = vunpack.c.l.b16 %v1661
        %v2071 = vunpack.c.l.b16 %v1662
        %v2072 = vunpack.c.l.b16 %v1663
        %v2073 = vpack.c.b16 %v2066, %v2065
        %v2074 = vpack.c.b16 %v2068, %v2067
        %v2075 = vpack.c.b16 %v2070, %v2069
        %v2076 = vpack.c.b16 %v2072, %v2071
        %2081 = vmatprep.subr.bf16.mxu0 0
        %2082 = vmatpush1.bf16.msra.mxu0 %v2073
        %2083 = vmatprep.subr.bf16.mxu0 0
        %2084 = vmatpush1.bf16.msra.mxu0 %v2074
        %2085 = vmatprep.subr.bf16.mxu0 0
        %2086 = vmatpush1.bf16.msra.mxu0 %v2075
        %2087 = vmatprep.subr.bf16.mxu0 0
        %2088 = vmatpush1.bf16.msra.mxu0 %v2076
        %2089 = vmatprep.subr.bf16.mxu0 0
        %2090 = vmatpush1.bf16.msra.mxu0 0
        %2091 = vmatprep.subr.bf16.mxu0 0
        %2092 = vmatpush1.bf16.msra.mxu0 0
        %2093 = vmatprep.subr.bf16.mxu0 0
        %2094 = vmatpush1.bf16.msra.mxu0 0
        %2095 = vmatprep.subr.bf16.mxu0 0
        %2096 = vmatpush1.bf16.msra.mxu0 0
        %2097 = vmatprep.subr.bf16.mxu0 0
        %2098 = vmatpush1.bf16.msra.mxu0 0
        %2099 = vmatprep.subr.bf16.mxu0 0
        %2100 = vmatpush1.bf16.msra.mxu0 0
        %2101 = vmatprep.subr.bf16.mxu0 0
        %2102 = vmatpush1.bf16.msra.mxu0 0
        %2103 = vmatprep.subr.bf16.mxu0 0
        %2104 = vmatpush1.bf16.msra.mxu0 0
        %2105 = vmatprep.subr.bf16.mxu0 0
        %2106 = vmatpush1.bf16.msra.mxu0 0
        %2107 = vmatprep.subr.bf16.mxu0 0
        %2108 = vmatpush1.bf16.msra.mxu0 0
        %2109 = vmatprep.subr.bf16.mxu0 0
        %2110 = vmatpush1.bf16.msra.mxu0 0
        %2111 = vmatprep.subr.bf16.mxu0 0
        %2112 = vmatpush1.bf16.msra.mxu0 0
        %2113 = vmatprep.mubr.bf16.mxu0 0
        %2114 = vmatmul.mubr.bf16.gmra.mrb[0].mxu0 %v491
        %v2115 = vpop.f32.mrb[0].mxu0
        %v2116 = vadd.f32 %v1720, %v2115
        %v2117 = vpop.f32.mrb[0].mxu0
        %v2118 = vpop.f32.mrb[0].mxu0
        %v2119 = vpop.f32.mrb[0].mxu0
        %2120 = vdwg.mxu0
        %v2129 = vunpack.c.l.b16 %v1664
        %v2130 = vunpack.c.l.b16 %v1665
        %v2131 = vunpack.c.l.b16 %v1666
        %v2132 = vunpack.c.l.b16 %v1667
        %v2133 = vunpack.c.l.b16 %v1668
        %v2134 = vunpack.c.l.b16 %v1669
        %v2135 = vunpack.c.l.b16 %v1670
        %v2136 = vunpack.c.l.b16 %v1671
        %v2137 = vpack.c.b16 %v2130, %v2129
        %v2138 = vpack.c.b16 %v2132, %v2131
        %v2139 = vpack.c.b16 %v2134, %v2133
        %v2140 = vpack.c.b16 %v2136, %v2135
        %2145 = vmatprep.subr.bf16.mxu0 0
        %2146 = vmatpush1.bf16.msra.mxu0 %v2137
        %2147 = vmatprep.subr.bf16.mxu0 0
        %2148 = vmatpush1.bf16.msra.mxu0 %v2138
        %2149 = vmatprep.subr.bf16.mxu0 0
        %2150 = vmatpush1.bf16.msra.mxu0 %v2139
        %2151 = vmatprep.subr.bf16.mxu0 0
        %2152 = vmatpush1.bf16.msra.mxu0 %v2140
        %2153 = vmatprep.subr.bf16.mxu0 0
        %2154 = vmatpush1.bf16.msra.mxu0 0
        %2155 = vmatprep.subr.bf16.mxu0 0
        %2156 = vmatpush1.bf16.msra.mxu0 0
        %2157 = vmatprep.subr.bf16.mxu0 0
        %2158 = vmatpush1.bf16.msra.mxu0 0
        %2159 = vmatprep.subr.bf16.mxu0 0
        %2160 = vmatpush1.bf16.msra.mxu0 0
        %2161 = vmatprep.subr.bf16.mxu0 0
        %2162 = vmatpush1.bf16.msra.mxu0 0
        %2163 = vmatprep.subr.bf16.mxu0 0
        %2164 = vmatpush1.bf16.msra.mxu0 0
        %2165 = vmatprep.subr.bf16.mxu0 0
        %2166 = vmatpush1.bf16.msra.mxu0 0
        %2167 = vmatprep.subr.bf16.mxu0 0
        %2168 = vmatpush1.bf16.msra.mxu0 0
        %2169 = vmatprep.subr.bf16.mxu0 0
        %2170 = vmatpush1.bf16.msra.mxu0 0
        %2171 = vmatprep.subr.bf16.mxu0 0
        %2172 = vmatpush1.bf16.msra.mxu0 0
        %2173 = vmatprep.subr.bf16.mxu0 0
        %2174 = vmatpush1.bf16.msra.mxu0 0
        %2175 = vmatprep.subr.bf16.mxu0 0
        %2176 = vmatpush1.bf16.msra.mxu0 0
        %2177 = vmatprep.mubr.bf16.mxu0 0
        %2178 = vmatmul.mubr.bf16.gmra.mrb[0].mxu0 %v491
        %v2179 = vpop.f32.mrb[0].mxu0
        %v2180 = vadd.f32 %v1724, %v2179
        %v2181 = vpop.f32.mrb[0].mxu0
        %v2182 = vpop.f32.mrb[0].mxu0
        %v2183 = vpop.f32.mrb[0].mxu0
        %2184 = vdwg.mxu0
        %v2193 = vunpack.c.l.b16 %v1672
        %v2194 = vunpack.c.l.b16 %v1673
        %v2195 = vunpack.c.l.b16 %v1674
        %v2196 = vunpack.c.l.b16 %v1675
        %v2197 = vunpack.c.l.b16 %v1676
        %v2198 = vunpack.c.l.b16 %v1677
        %v2199 = vunpack.c.l.b16 %v1678
        %v2200 = vunpack.c.l.b16 %v1679
        %v2201 = vpack.c.b16 %v2194, %v2193
        %v2202 = vpack.c.b16 %v2196, %v2195
        %v2203 = vpack.c.b16 %v2198, %v2197
        %v2204 = vpack.c.b16 %v2200, %v2199
        %2209 = vmatprep.subr.bf16.mxu0 0
        %2210 = vmatpush1.bf16.msra.mxu0 %v2201
        %2211 = vmatprep.subr.bf16.mxu0 0
        %2212 = vmatpush1.bf16.msra.mxu0 %v2202
        %2213 = vmatprep.subr.bf16.mxu0 0
        %2214 = vmatpush1.bf16.msra.mxu0 %v2203
        %2215 = vmatprep.subr.bf16.mxu0 0
        %2216 = vmatpush1.bf16.msra.mxu0 %v2204
        %2217 = vmatprep.subr.bf16.mxu0 0
        %2218 = vmatpush1.bf16.msra.mxu0 0
        %2219 = vmatprep.subr.bf16.mxu0 0
        %2220 = vmatpush1.bf16.msra.mxu0 0
        %2221 = vmatprep.subr.bf16.mxu0 0
        %2222 = vmatpush1.bf16.msra.mxu0 0
        %2223 = vmatprep.subr.bf16.mxu0 0
        %2224 = vmatpush1.bf16.msra.mxu0 0
        %2225 = vmatprep.subr.bf16.mxu0 0
        %2226 = vmatpush1.bf16.msra.mxu0 0
        %2227 = vmatprep.subr.bf16.mxu0 0
        %2228 = vmatpush1.bf16.msra.mxu0 0
        %2229 = vmatprep.subr.bf16.mxu0 0
        %2230 = vmatpush1.bf16.msra.mxu0 0
        %2231 = vmatprep.subr.bf16.mxu0 0
        %2232 = vmatpush1.bf16.msra.mxu0 0
        %2233 = vmatprep.subr.bf16.mxu0 0
        %2234 = vmatpush1.bf16.msra.mxu0 0
        %2235 = vmatprep.subr.bf16.mxu0 0
        %2236 = vmatpush1.bf16.msra.mxu0 0
        %2237 = vmatprep.subr.bf16.mxu0 0
        %2238 = vmatpush1.bf16.msra.mxu0 0
        %2239 = vmatprep.subr.bf16.mxu0 0
        %2240 = vmatpush1.bf16.msra.mxu0 0
        %2241 = vmatprep.mubr.bf16.mxu0 0
        %2242 = vmatmul.mubr.bf16.gmra.mrb[0].mxu0 %v491
        %v2243 = vpop.f32.mrb[0].mxu0
        %v2244 = vadd.f32 %v1728, %v2243
        %v2245 = vpop.f32.mrb[0].mxu0
        %v2246 = vpop.f32.mrb[0].mxu0
        %v2247 = vpop.f32.mrb[0].mxu0
        %2248 = vdwg.mxu0
        %v2249 = vpack.c.bf16 %v528, %v528
        %v2250 = vpack.c.bf16 %v592, %v592
        %v2251 = vpack.c.bf16 %v656, %v656
        %v2252 = vpack.c.bf16 %v720, %v720
        %v2253 = vpack.c.bf16 %v784, %v784
        %v2254 = vpack.c.bf16 %v848, %v848
        %v2255 = vpack.c.bf16 %v912, %v912
        %v2256 = vpack.c.bf16 %v976, %v976
        %v2257 = vpack.c.bf16 %v1162, %v1162
        %v2258 = vpack.c.bf16 %v1226, %v1226
        %v2259 = vpack.c.bf16 %v1290, %v1290
        %v2260 = vpack.c.bf16 %v1354, %v1354
        %v2261 = vpack.c.bf16 %v1418, %v1418
        %v2262 = vpack.c.bf16 %v1482, %v1482
        %v2263 = vpack.c.bf16 %v1546, %v1546
        %v2264 = vpack.c.bf16 %v1610, %v1610
        %vm2265 = vcmask 64512
        %v2267 = vsel %vm2265, %v2249, 0
        %v2270 = vsel %vm2265, %v2257, 0
        %2272 = vmatprep.subr.bf16.mxu0 0
        %2273 = vmatpush1.bf16.xpose.msra.mxu0 %v2270
        %2274 = vmatprep.subr.bf16.mxu0 0
        %2275 = vmatpush1.bf16.xpose.msra.mxu0 0
        %2276 = vmatprep.subr.bf16.mxu0 0
        %2277 = vmatpush1.bf16.xpose.msra.mxu0 0
        %2278 = vmatprep.subr.bf16.mxu0 0
        %2279 = vmatpush1.bf16.xpose.msra.mxu0 0
        %2280 = vmatprep.subr.bf16.mxu0 0
        %2281 = vmatpush1.bf16.xpose.msra.mxu0 0
        %2282 = vmatprep.subr.bf16.mxu0 0
        %2283 = vmatpush1.bf16.xpose.msra.mxu0 0
        %2284 = vmatprep.subr.bf16.mxu0 0
        %2285 = vmatpush1.bf16.xpose.msra.mxu0 0
        %2286 = vmatprep.subr.bf16.mxu0 0
        %2287 = vmatpush1.bf16.xpose.msra.mxu0 0
        %2288 = vmatprep.subr.bf16.mxu0 0
        %2289 = vmatpush1.bf16.xpose.msra.mxu0 0
        %2290 = vmatprep.subr.bf16.mxu0 0
        %2291 = vmatpush1.bf16.xpose.msra.mxu0 0
        %2292 = vmatprep.subr.bf16.mxu0 0
        %2293 = vmatpush1.bf16.xpose.msra.mxu0 0
        %2294 = vmatprep.subr.bf16.mxu0 0
        %2295 = vmatpush1.bf16.xpose.msra.mxu0 0
        %2296 = vmatprep.subr.bf16.mxu0 0
        %2297 = vmatpush1.bf16.xpose.msra.mxu0 0
        %2298 = vmatprep.subr.bf16.mxu0 0
        %2299 = vmatpush1.bf16.xpose.msra.mxu0 0
        %2300 = vmatprep.subr.bf16.mxu0 0
        %2301 = vmatpush1.bf16.xpose.msra.mxu0 0
        %2302 = vmatprep.subr.bf16.mxu0 0
        %2303 = vmatpush1.bf16.xpose.msra.mxu0 0
        %2304 = vmatprep.mubr.bf16.mxu0 0
        %2305 = vmatmul.mubr.bf16.gmra.mrb[0].mxu0 %v2267
        %v2306 = vpop.f32.mrb[0].mxu0
        %v2307 = vadd.f32 0.0, %v2306
        %v2308 = vpop.f32.mrb[0].mxu0
        %v2309 = vpop.f32.mrb[0].mxu0
        %v2310 = vpop.f32.mrb[0].mxu0
        %2311 = vdwg.mxu0
        %v2313 = vsel %vm2265, %v2250, 0
        %v2316 = vsel %vm2265, %v2258, 0
        %2318 = vmatprep.subr.bf16.mxu0 0
        %2319 = vmatpush1.bf16.xpose.msra.mxu0 %v2316
        %2320 = vmatprep.subr.bf16.mxu0 0
        %2321 = vmatpush1.bf16.xpose.msra.mxu0 0
        %2322 = vmatprep.subr.bf16.mxu0 0
        %2323 = vmatpush1.bf16.xpose.msra.mxu0 0
        %2324 = vmatprep.subr.bf16.mxu0 0
        %2325 = vmatpush1.bf16.xpose.msra.mxu0 0
        %2326 = vmatprep.subr.bf16.mxu0 0
        %2327 = vmatpush1.bf16.xpose.msra.mxu0 0
        %2328 = vmatprep.subr.bf16.mxu0 0
        %2329 = vmatpush1.bf16.xpose.msra.mxu0 0
        %2330 = vmatprep.subr.bf16.mxu0 0
        %2331 = vmatpush1.bf16.xpose.msra.mxu0 0
        %2332 = vmatprep.subr.bf16.mxu0 0
        %2333 = vmatpush1.bf16.xpose.msra.mxu0 0
        %2334 = vmatprep.subr.bf16.mxu0 0
        %2335 = vmatpush1.bf16.xpose.msra.mxu0 0
        %2336 = vmatprep.subr.bf16.mxu0 0
        %2337 = vmatpush1.bf16.xpose.msra.mxu0 0
        %2338 = vmatprep.subr.bf16.mxu0 0
        %2339 = vmatpush1.bf16.xpose.msra.mxu0 0
        %2340 = vmatprep.subr.bf16.mxu0 0
        %2341 = vmatpush1.bf16.xpose.msra.mxu0 0
        %2342 = vmatprep.subr.bf16.mxu0 0
        %2343 = vmatpush1.bf16.xpose.msra.mxu0 0
        %2344 = vmatprep.subr.bf16.mxu0 0
        %2345 = vmatpush1.bf16.xpose.msra.mxu0 0
        %2346 = vmatprep.subr.bf16.mxu0 0
        %2347 = vmatpush1.bf16.xpose.msra.mxu0 0
        %2348 = vmatprep.subr.bf16.mxu0 0
        %2349 = vmatpush1.bf16.xpose.msra.mxu0 0
        %2350 = vmatprep.mubr.bf16.mxu0 0
        %2351 = vmatmul.mubr.bf16.gmra.mrb[0].mxu0 %v2313
        %v2352 = vpop.f32.mrb[0].mxu0
        %v2353 = vadd.f32 0.0, %v2352
        %v2354 = vpop.f32.mrb[0].mxu0
        %v2355 = vpop.f32.mrb[0].mxu0
        %v2356 = vpop.f32.mrb[0].mxu0
        %2357 = vdwg.mxu0
        %v2359 = vsel %vm2265, %v2251, 0
        %v2362 = vsel %vm2265, %v2259, 0
        %2364 = vmatprep.subr.bf16.mxu0 0
        %2365 = vmatpush1.bf16.xpose.msra.mxu0 %v2362
        %2366 = vmatprep.subr.bf16.mxu0 0
        %2367 = vmatpush1.bf16.xpose.msra.mxu0 0
        %2368 = vmatprep.subr.bf16.mxu0 0
        %2369 = vmatpush1.bf16.xpose.msra.mxu0 0
        %2370 = vmatprep.subr.bf16.mxu0 0
        %2371 = vmatpush1.bf16.xpose.msra.mxu0 0
        %2372 = vmatprep.subr.bf16.mxu0 0
        %2373 = vmatpush1.bf16.xpose.msra.mxu0 0
        %2374 = vmatprep.subr.bf16.mxu0 0
        %2375 = vmatpush1.bf16.xpose.msra.mxu0 0
        %2376 = vmatprep.subr.bf16.mxu0 0
        %2377 = vmatpush1.bf16.xpose.msra.mxu0 0
        %2378 = vmatprep.subr.bf16.mxu0 0
        %2379 = vmatpush1.bf16.xpose.msra.mxu0 0
        %2380 = vmatprep.subr.bf16.mxu0 0
        %2381 = vmatpush1.bf16.xpose.msra.mxu0 0
        %2382 = vmatprep.subr.bf16.mxu0 0
        %2383 = vmatpush1.bf16.xpose.msra.mxu0 0
        %2384 = vmatprep.subr.bf16.mxu0 0
        %2385 = vmatpush1.bf16.xpose.msra.mxu0 0
        %2386 = vmatprep.subr.bf16.mxu0 0
        %2387 = vmatpush1.bf16.xpose.msra.mxu0 0
        %2388 = vmatprep.subr.bf16.mxu0 0
        %2389 = vmatpush1.bf16.xpose.msra.mxu0 0
        %2390 = vmatprep.subr.bf16.mxu0 0
        %2391 = vmatpush1.bf16.xpose.msra.mxu0 0
        %2392 = vmatprep.subr.bf16.mxu0 0
        %2393 = vmatpush1.bf16.xpose.msra.mxu0 0
        %2394 = vmatprep.subr.bf16.mxu0 0
        %2395 = vmatpush1.bf16.xpose.msra.mxu0 0
        %2396 = vmatprep.mubr.bf16.mxu0 0
        %2397 = vmatmul.mubr.bf16.gmra.mrb[0].mxu0 %v2359
        %v2398 = vpop.f32.mrb[0].mxu0
        %v2399 = vadd.f32 0.0, %v2398
        %v2400 = vpop.f32.mrb[0].mxu0
        %v2401 = vpop.f32.mrb[0].mxu0
        %v2402 = vpop.f32.mrb[0].mxu0
        %2403 = vdwg.mxu0
        %v2405 = vsel %vm2265, %v2252, 0
        %v2408 = vsel %vm2265, %v2260, 0
        %2410 = vmatprep.subr.bf16.mxu0 0
        %2411 = vmatpush1.bf16.xpose.msra.mxu0 %v2408
        %2412 = vmatprep.subr.bf16.mxu0 0
        %2413 = vmatpush1.bf16.xpose.msra.mxu0 0
        %2414 = vmatprep.subr.bf16.mxu0 0
        %2415 = vmatpush1.bf16.xpose.msra.mxu0 0
        %2416 = vmatprep.subr.bf16.mxu0 0
        %2417 = vmatpush1.bf16.xpose.msra.mxu0 0
        %2418 = vmatprep.subr.bf16.mxu0 0
        %2419 = vmatpush1.bf16.xpose.msra.mxu0 0
        %2420 = vmatprep.subr.bf16.mxu0 0
        %2421 = vmatpush1.bf16.xpose.msra.mxu0 0
        %2422 = vmatprep.subr.bf16.mxu0 0
        %2423 = vmatpush1.bf16.xpose.msra.mxu0 0
        %2424 = vmatprep.subr.bf16.mxu0 0
        %2425 = vmatpush1.bf16.xpose.msra.mxu0 0
        %2426 = vmatprep.subr.bf16.mxu0 0
        %2427 = vmatpush1.bf16.xpose.msra.mxu0 0
        %2428 = vmatprep.subr.bf16.mxu0 0
        %2429 = vmatpush1.bf16.xpose.msra.mxu0 0
        %2430 = vmatprep.subr.bf16.mxu0 0
        %2431 = vmatpush1.bf16.xpose.msra.mxu0 0
        %2432 = vmatprep.subr.bf16.mxu0 0
        %2433 = vmatpush1.bf16.xpose.msra.mxu0 0
        %2434 = vmatprep.subr.bf16.mxu0 0
        %2435 = vmatpush1.bf16.xpose.msra.mxu0 0
        %2436 = vmatprep.subr.bf16.mxu0 0
        %2437 = vmatpush1.bf16.xpose.msra.mxu0 0
        %2438 = vmatprep.subr.bf16.mxu0 0
        %2439 = vmatpush1.bf16.xpose.msra.mxu0 0
        %2440 = vmatprep.subr.bf16.mxu0 0
        %2441 = vmatpush1.bf16.xpose.msra.mxu0 0
        %2442 = vmatprep.mubr.bf16.mxu0 0
        %2443 = vmatmul.mubr.bf16.gmra.mrb[0].mxu0 %v2405
        %v2444 = vpop.f32.mrb[0].mxu0
        %v2445 = vadd.f32 0.0, %v2444
        %v2446 = vpop.f32.mrb[0].mxu0
        %v2447 = vpop.f32.mrb[0].mxu0
        %v2448 = vpop.f32.mrb[0].mxu0
        %2449 = vdwg.mxu0
        %v2451 = vsel %vm2265, %v2253, 0
        %v2454 = vsel %vm2265, %v2261, 0
        %2456 = vmatprep.subr.bf16.mxu0 0
        %2457 = vmatpush1.bf16.xpose.msra.mxu0 %v2454
        %2458 = vmatprep.subr.bf16.mxu0 0
        %2459 = vmatpush1.bf16.xpose.msra.mxu0 0
        %2460 = vmatprep.subr.bf16.mxu0 0
        %2461 = vmatpush1.bf16.xpose.msra.mxu0 0
        %2462 = vmatprep.subr.bf16.mxu0 0
        %2463 = vmatpush1.bf16.xpose.msra.mxu0 0
        %2464 = vmatprep.subr.bf16.mxu0 0
        %2465 = vmatpush1.bf16.xpose.msra.mxu0 0
        %2466 = vmatprep.subr.bf16.mxu0 0
        %2467 = vmatpush1.bf16.xpose.msra.mxu0 0
        %2468 = vmatprep.subr.bf16.mxu0 0
        %2469 = vmatpush1.bf16.xpose.msra.mxu0 0
        %2470 = vmatprep.subr.bf16.mxu0 0
        %2471 = vmatpush1.bf16.xpose.msra.mxu0 0
        %2472 = vmatprep.subr.bf16.mxu0 0
        %2473 = vmatpush1.bf16.xpose.msra.mxu0 0
        %2474 = vmatprep.subr.bf16.mxu0 0
        %2475 = vmatpush1.bf16.xpose.msra.mxu0 0
        %2476 = vmatprep.subr.bf16.mxu0 0
        %2477 = vmatpush1.bf16.xpose.msra.mxu0 0
        %2478 = vmatprep.subr.bf16.mxu0 0
        %2479 = vmatpush1.bf16.xpose.msra.mxu0 0
        %2480 = vmatprep.subr.bf16.mxu0 0
        %2481 = vmatpush1.bf16.xpose.msra.mxu0 0
        %2482 = vmatprep.subr.bf16.mxu0 0
        %2483 = vmatpush1.bf16.xpose.msra.mxu0 0
        %2484 = vmatprep.subr.bf16.mxu0 0
        %2485 = vmatpush1.bf16.xpose.msra.mxu0 0
        %2486 = vmatprep.subr.bf16.mxu0 0
        %2487 = vmatpush1.bf16.xpose.msra.mxu0 0
        %2488 = vmatprep.mubr.bf16.mxu0 0
        %2489 = vmatmul.mubr.bf16.gmra.mrb[0].mxu0 %v2451
        %v2490 = vpop.f32.mrb[0].mxu0
        %v2491 = vadd.f32 0.0, %v2490
        %v2492 = vpop.f32.mrb[0].mxu0
        %v2493 = vpop.f32.mrb[0].mxu0
        %v2494 = vpop.f32.mrb[0].mxu0
        %2495 = vdwg.mxu0
        %v2497 = vsel %vm2265, %v2254, 0
        %v2500 = vsel %vm2265, %v2262, 0
        %2502 = vmatprep.subr.bf16.mxu0 0
        %2503 = vmatpush1.bf16.xpose.msra.mxu0 %v2500
        %2504 = vmatprep.subr.bf16.mxu0 0
        %2505 = vmatpush1.bf16.xpose.msra.mxu0 0
        %2506 = vmatprep.subr.bf16.mxu0 0
        %2507 = vmatpush1.bf16.xpose.msra.mxu0 0
        %2508 = vmatprep.subr.bf16.mxu0 0
        %2509 = vmatpush1.bf16.xpose.msra.mxu0 0
        %2510 = vmatprep.subr.bf16.mxu0 0
        %2511 = vmatpush1.bf16.xpose.msra.mxu0 0
        %2512 = vmatprep.subr.bf16.mxu0 0
        %2513 = vmatpush1.bf16.xpose.msra.mxu0 0
        %2514 = vmatprep.subr.bf16.mxu0 0
        %2515 = vmatpush1.bf16.xpose.msra.mxu0 0
        %2516 = vmatprep.subr.bf16.mxu0 0
        %2517 = vmatpush1.bf16.xpose.msra.mxu0 0
        %2518 = vmatprep.subr.bf16.mxu0 0
        %2519 = vmatpush1.bf16.xpose.msra.mxu0 0
        %2520 = vmatprep.subr.bf16.mxu0 0
        %2521 = vmatpush1.bf16.xpose.msra.mxu0 0
        %2522 = vmatprep.subr.bf16.mxu0 0
        %2523 = vmatpush1.bf16.xpose.msra.mxu0 0
        %2524 = vmatprep.subr.bf16.mxu0 0
        %2525 = vmatpush1.bf16.xpose.msra.mxu0 0
        %2526 = vmatprep.subr.bf16.mxu0 0
        %2527 = vmatpush1.bf16.xpose.msra.mxu0 0
        %2528 = vmatprep.subr.bf16.mxu0 0
        %2529 = vmatpush1.bf16.xpose.msra.mxu0 0
        %2530 = vmatprep.subr.bf16.mxu0 0
        %2531 = vmatpush1.bf16.xpose.msra.mxu0 0
        %2532 = vmatprep.subr.bf16.mxu0 0
        %2533 = vmatpush1.bf16.xpose.msra.mxu0 0
        %2534 = vmatprep.mubr.bf16.mxu0 0
        %2535 = vmatmul.mubr.bf16.gmra.mrb[0].mxu0 %v2497
        %v2536 = vpop.f32.mrb[0].mxu0
        %v2537 = vadd.f32 0.0, %v2536
        %v2538 = vpop.f32.mrb[0].mxu0
        %v2539 = vpop.f32.mrb[0].mxu0
        %v2540 = vpop.f32.mrb[0].mxu0
        %2541 = vdwg.mxu0
        %v2543 = vsel %vm2265, %v2255, 0
        %v2546 = vsel %vm2265, %v2263, 0
        %2548 = vmatprep.subr.bf16.mxu0 0
        %2549 = vmatpush1.bf16.xpose.msra.mxu0 %v2546
        %2550 = vmatprep.subr.bf16.mxu0 0
        %2551 = vmatpush1.bf16.xpose.msra.mxu0 0
        %2552 = vmatprep.subr.bf16.mxu0 0
        %2553 = vmatpush1.bf16.xpose.msra.mxu0 0
        %2554 = vmatprep.subr.bf16.mxu0 0
        %2555 = vmatpush1.bf16.xpose.msra.mxu0 0
        %2556 = vmatprep.subr.bf16.mxu0 0
        %2557 = vmatpush1.bf16.xpose.msra.mxu0 0
        %2558 = vmatprep.subr.bf16.mxu0 0
        %2559 = vmatpush1.bf16.xpose.msra.mxu0 0
        %2560 = vmatprep.subr.bf16.mxu0 0
        %2561 = vmatpush1.bf16.xpose.msra.mxu0 0
        %2562 = vmatprep.subr.bf16.mxu0 0
        %2563 = vmatpush1.bf16.xpose.msra.mxu0 0
        %2564 = vmatprep.subr.bf16.mxu0 0
        %2565 = vmatpush1.bf16.xpose.msra.mxu0 0
        %2566 = vmatprep.subr.bf16.mxu0 0
        %2567 = vmatpush1.bf16.xpose.msra.mxu0 0
        %2568 = vmatprep.subr.bf16.mxu0 0
        %2569 = vmatpush1.bf16.xpose.msra.mxu0 0
        %2570 = vmatprep.subr.bf16.mxu0 0
        %2571 = vmatpush1.bf16.xpose.msra.mxu0 0
        %2572 = vmatprep.subr.bf16.mxu0 0
        %2573 = vmatpush1.bf16.xpose.msra.mxu0 0
        %2574 = vmatprep.subr.bf16.mxu0 0
        %2575 = vmatpush1.bf16.xpose.msra.mxu0 0
        %2576 = vmatprep.subr.bf16.mxu0 0
        %2577 = vmatpush1.bf16.xpose.msra.mxu0 0
        %2578 = vmatprep.subr.bf16.mxu0 0
        %2579 = vmatpush1.bf16.xpose.msra.mxu0 0
        %2580 = vmatprep.mubr.bf16.mxu0 0
        %2581 = vmatmul.mubr.bf16.gmra.mrb[0].mxu0 %v2543
        %v2582 = vpop.f32.mrb[0].mxu0
        %v2583 = vadd.f32 0.0, %v2582
        %v2584 = vpop.f32.mrb[0].mxu0
        %v2585 = vpop.f32.mrb[0].mxu0
        %v2586 = vpop.f32.mrb[0].mxu0
        %2587 = vdwg.mxu0
        %v2589 = vsel %vm2265, %v2256, 0
        %v2592 = vsel %vm2265, %v2264, 0
        %2594 = vmatprep.subr.bf16.mxu0 0
        %2595 = vmatpush1.bf16.xpose.msra.mxu0 %v2592
        %2596 = vmatprep.subr.bf16.mxu0 0
        %2597 = vmatpush1.bf16.xpose.msra.mxu0 0
        %2598 = vmatprep.subr.bf16.mxu0 0
        %2599 = vmatpush1.bf16.xpose.msra.mxu0 0
        %2600 = vmatprep.subr.bf16.mxu0 0
        %2601 = vmatpush1.bf16.xpose.msra.mxu0 0
        %2602 = vmatprep.subr.bf16.mxu0 0
        %2603 = vmatpush1.bf16.xpose.msra.mxu0 0
        %2604 = vmatprep.subr.bf16.mxu0 0
        %2605 = vmatpush1.bf16.xpose.msra.mxu0 0
        %2606 = vmatprep.subr.bf16.mxu0 0
        %2607 = vmatpush1.bf16.xpose.msra.mxu0 0
        %2608 = vmatprep.subr.bf16.mxu0 0
        %2609 = vmatpush1.bf16.xpose.msra.mxu0 0
        %2610 = vmatprep.subr.bf16.mxu0 0
        %2611 = vmatpush1.bf16.xpose.msra.mxu0 0
        %2612 = vmatprep.subr.bf16.mxu0 0
        %2613 = vmatpush1.bf16.xpose.msra.mxu0 0
        %2614 = vmatprep.subr.bf16.mxu0 0
        %2615 = vmatpush1.bf16.xpose.msra.mxu0 0
        %2616 = vmatprep.subr.bf16.mxu0 0
        %2617 = vmatpush1.bf16.xpose.msra.mxu0 0
        %2618 = vmatprep.subr.bf16.mxu0 0
        %2619 = vmatpush1.bf16.xpose.msra.mxu0 0
        %2620 = vmatprep.subr.bf16.mxu0 0
        %2621 = vmatpush1.bf16.xpose.msra.mxu0 0
        %2622 = vmatprep.subr.bf16.mxu0 0
        %2623 = vmatpush1.bf16.xpose.msra.mxu0 0
        %2624 = vmatprep.subr.bf16.mxu0 0
        %2625 = vmatpush1.bf16.xpose.msra.mxu0 0
        %2626 = vmatprep.mubr.bf16.mxu0 0
        %2627 = vmatmul.mubr.bf16.gmra.mrb[0].mxu0 %v2589
        %v2628 = vpop.f32.mrb[0].mxu0
        %v2629 = vadd.f32 0.0, %v2628
        %v2630 = vpop.f32.mrb[0].mxu0
        %v2631 = vpop.f32.mrb[0].mxu0
        %v2632 = vpop.f32.mrb[0].mxu0
        %2633 = vdwg.mxu0
        %v2634 = vsel %vm2265, %v2307, -inf
        %2635 = vmax.xlane.f32.xlu0 %v2634
        %v2636 = vpop.xlane.xlu0 %2635
        %v2637 = vsel %vm2265, %v2353, -inf
        %2638 = vmax.xlane.f32.xlu0 %v2637
        %v2639 = vpop.xlane.xlu0 %2638
        %v2640 = vsel %vm2265, %v2399, -inf
        %2641 = vmax.xlane.f32.xlu0 %v2640
        %v2642 = vpop.xlane.xlu0 %2641
        %v2643 = vsel %vm2265, %v2445, -inf
        %2644 = vmax.xlane.f32.xlu0 %v2643
        %v2645 = vpop.xlane.xlu0 %2644
        %v2646 = vsel %vm2265, %v2491, -inf
        %2647 = vmax.xlane.f32.xlu0 %v2646
        %v2648 = vpop.xlane.xlu0 %2647
        %v2649 = vsel %vm2265, %v2537, -inf
        %2650 = vmax.xlane.f32.xlu0 %v2649
        %v2651 = vpop.xlane.xlu0 %2650
        %v2652 = vsel %vm2265, %v2583, -inf
        %2653 = vmax.xlane.f32.xlu0 %v2652
        %v2654 = vpop.xlane.xlu0 %2653
        %v2655 = vsel %vm2265, %v2629, -inf
        %2656 = vmax.xlane.f32.xlu0 %v2655
        %v2657 = vpop.xlane.xlu0 %2656
        %v2658 = vsub.f32 %v2307, %v2636
        %v2659 = vsub.f32 %v2353, %v2639
        %v2660 = vsub.f32 %v2399, %v2642
        %v2661 = vsub.f32 %v2445, %v2645
        %v2662 = vsub.f32 %v2491, %v2648
        %v2663 = vsub.f32 %v2537, %v2651
        %v2664 = vsub.f32 %v2583, %v2654
        %v2665 = vsub.f32 %v2629, %v2657
        %v2666 = vmul.f32 %v2658, 1.442695
        %v2667 = vpow.pop %v2666
        %v2668 = vmul.f32 %v2659, 1.442695
        %v2669 = vpow.pop %v2668
        %v2670 = vmul.f32 %v2660, 1.442695
        %v2671 = vpow.pop %v2670
        %v2672 = vmul.f32 %v2661, 1.442695
        %v2673 = vpow.pop %v2672
        %v2674 = vmul.f32 %v2662, 1.442695
        %v2675 = vpow.pop %v2674
        %v2676 = vmul.f32 %v2663, 1.442695
        %v2677 = vpow.pop %v2676
        %v2678 = vmul.f32 %v2664, 1.442695
        %v2679 = vpow.pop %v2678
        %v2680 = vmul.f32 %v2665, 1.442695
        %v2681 = vpow.pop %v2680
        %v2682 = vsel %vm2265, %v2667, 0.0
        %2683 = vadd.xlane.f32.xlu0 %v2682
        %v2684 = vpop.xlane.xlu0 %2683
        %v2685 = vsel %vm2265, %v2669, 0.0
        %2686 = vadd.xlane.f32.xlu0 %v2685
        %v2687 = vpop.xlane.xlu0 %2686
        %v2688 = vsel %vm2265, %v2671, 0.0
        %2689 = vadd.xlane.f32.xlu0 %v2688
        %v2690 = vpop.xlane.xlu0 %2689
        %v2691 = vsel %vm2265, %v2673, 0.0
        %2692 = vadd.xlane.f32.xlu0 %v2691
        %v2693 = vpop.xlane.xlu0 %2692
        %v2694 = vsel %vm2265, %v2675, 0.0
        %2695 = vadd.xlane.f32.xlu0 %v2694
        %v2696 = vpop.xlane.xlu0 %2695
        %v2697 = vsel %vm2265, %v2677, 0.0
        %2698 = vadd.xlane.f32.xlu0 %v2697
        %v2699 = vpop.xlane.xlu0 %2698
        %v2700 = vsel %vm2265, %v2679, 0.0
        %2701 = vadd.xlane.f32.xlu0 %v2700
        %v2702 = vpop.xlane.xlu0 %2701
        %v2703 = vsel %vm2265, %v2681, 0.0
        %2704 = vadd.xlane.f32.xlu0 %v2703
        %v2705 = vpop.xlane.xlu0 %2704
        %v2706 = vrcp.pop %v2684
        %v2707 = vmul.f32 %v2667, %v2706
        %v2708 = vrcp.pop %v2687
        %v2709 = vmul.f32 %v2669, %v2708
        %v2710 = vrcp.pop %v2690
        %v2711 = vmul.f32 %v2671, %v2710
        %v2712 = vrcp.pop %v2693
        %v2713 = vmul.f32 %v2673, %v2712
        %v2714 = vrcp.pop %v2696
        %v2715 = vmul.f32 %v2675, %v2714
        %v2716 = vrcp.pop %v2699
        %v2717 = vmul.f32 %v2677, %v2716
        %v2718 = vrcp.pop %v2702
        %v2719 = vmul.f32 %v2679, %v2718
        %v2720 = vrcp.pop %v2705
        %v2721 = vmul.f32 %v2681, %v2720
        %v2722 = vpack.c.bf16 %v2707, %v2707
        %v2723 = vpack.c.bf16 %v2709, %v2709
        %v2724 = vpack.c.bf16 %v2711, %v2711
        %v2725 = vpack.c.bf16 %v2713, %v2713
        %v2726 = vpack.c.bf16 %v2715, %v2715
        %v2727 = vpack.c.bf16 %v2717, %v2717
        %v2728 = vpack.c.bf16 %v2719, %v2719
        %v2729 = vpack.c.bf16 %v2721, %v2721
        %v2730 = vpack.c.bf16 %v1796, %v1796
        %v2731 = vpack.c.bf16 %v1860, %v1860
        %v2732 = vpack.c.bf16 %v1924, %v1924
        %v2733 = vpack.c.bf16 %v1988, %v1988
        %v2734 = vpack.c.bf16 %v2052, %v2052
        %v2735 = vpack.c.bf16 %v2116, %v2116
        %v2736 = vpack.c.bf16 %v2180, %v2180
        %v2737 = vpack.c.bf16 %v2244, %v2244
        %v2739 = vsel %vm2265, %v2722, 0
        %vm2741 = vcmask 1043456
        %v2743 = vsel %vm2741, %v2730, 0
        %2745 = vmatprep.subr.bf16.mxu0 0
        %2746 = vmatpush1.bf16.msra.mxu0 %v2743
        %2747 = vmatprep.subr.bf16.mxu0 0
        %2748 = vmatpush1.bf16.msra.mxu0 0
        %2749 = vmatprep.subr.bf16.mxu0 0
        %2750 = vmatpush1.bf16.msra.mxu0 0
        %2751 = vmatprep.subr.bf16.mxu0 0
        %2752 = vmatpush1.bf16.msra.mxu0 0
        %2753 = vmatprep.subr.bf16.mxu0 0
        %2754 = vmatpush1.bf16.msra.mxu0 0
        %2755 = vmatprep.subr.bf16.mxu0 0
        %2756 = vmatpush1.bf16.msra.mxu0 0
        %2757 = vmatprep.subr.bf16.mxu0 0
        %2758 = vmatpush1.bf16.msra.mxu0 0
        %2759 = vmatprep.subr.bf16.mxu0 0
        %2760 = vmatpush1.bf16.msra.mxu0 0
        %2761 = vmatprep.subr.bf16.mxu0 0
        %2762 = vmatpush1.bf16.msra.mxu0 0
        %2763 = vmatprep.subr.bf16.mxu0 0
        %2764 = vmatpush1.bf16.msra.mxu0 0
        %2765 = vmatprep.subr.bf16.mxu0 0
        %2766 = vmatpush1.bf16.msra.mxu0 0
        %2767 = vmatprep.subr.bf16.mxu0 0
        %2768 = vmatpush1.bf16.msra.mxu0 0
        %2769 = vmatprep.subr.bf16.mxu0 0
        %2770 = vmatpush1.bf16.msra.mxu0 0
        %2771 = vmatprep.subr.bf16.mxu0 0
        %2772 = vmatpush1.bf16.msra.mxu0 0
        %2773 = vmatprep.subr.bf16.mxu0 0
        %2774 = vmatpush1.bf16.msra.mxu0 0
        %2775 = vmatprep.subr.bf16.mxu0 0
        %2776 = vmatpush1.bf16.msra.mxu0 0
        %2777 = vmatprep.mubr.bf16.mxu0 0
        %2778 = vmatmul.mubr.bf16.gmra.mrb[0].mxu0 %v2739
        %v2779 = vpop.f32.mrb[0].mxu0
        %v2780 = vadd.f32 0.0, %v2779
        %v2781 = vpop.f32.mrb[0].mxu0
        %v2782 = vpop.f32.mrb[0].mxu0
        %v2783 = vpop.f32.mrb[0].mxu0
        %2784 = vdwg.mxu0
        %v2786 = vsel %vm2265, %v2723, 0
        %v2789 = vsel %vm2741, %v2731, 0
        %2791 = vmatprep.subr.bf16.mxu0 0
        %2792 = vmatpush1.bf16.msra.mxu0 %v2789
        %2793 = vmatprep.subr.bf16.mxu0 0
        %2794 = vmatpush1.bf16.msra.mxu0 0
        %2795 = vmatprep.subr.bf16.mxu0 0
        %2796 = vmatpush1.bf16.msra.mxu0 0
        %2797 = vmatprep.subr.bf16.mxu0 0
        %2798 = vmatpush1.bf16.msra.mxu0 0
        %2799 = vmatprep.subr.bf16.mxu0 0
        %2800 = vmatpush1.bf16.msra.mxu0 0
        %2801 = vmatprep.subr.bf16.mxu0 0
        %2802 = vmatpush1.bf16.msra.mxu0 0
        %2803 = vmatprep.subr.bf16.mxu0 0
        %2804 = vmatpush1.bf16.msra.mxu0 0
        %2805 = vmatprep.subr.bf16.mxu0 0
        %2806 = vmatpush1.bf16.msra.mxu0 0
        %2807 = vmatprep.subr.bf16.mxu0 0
        %2808 = vmatpush1.bf16.msra.mxu0 0
        %2809 = vmatprep.subr.bf16.mxu0 0
        %2810 = vmatpush1.bf16.msra.mxu0 0
        %2811 = vmatprep.subr.bf16.mxu0 0
        %2812 = vmatpush1.bf16.msra.mxu0 0
        %2813 = vmatprep.subr.bf16.mxu0 0
        %2814 = vmatpush1.bf16.msra.mxu0 0
        %2815 = vmatprep.subr.bf16.mxu0 0
        %2816 = vmatpush1.bf16.msra.mxu0 0
        %2817 = vmatprep.subr.bf16.mxu0 0
        %2818 = vmatpush1.bf16.msra.mxu0 0
        %2819 = vmatprep.subr.bf16.mxu0 0
        %2820 = vmatpush1.bf16.msra.mxu0 0
        %2821 = vmatprep.subr.bf16.mxu0 0
        %2822 = vmatpush1.bf16.msra.mxu0 0
        %2823 = vmatprep.mubr.bf16.mxu0 0
        %2824 = vmatmul.mubr.bf16.gmra.mrb[0].mxu0 %v2786
        %v2825 = vpop.f32.mrb[0].mxu0
        %v2826 = vadd.f32 0.0, %v2825
        %v2827 = vpop.f32.mrb[0].mxu0
        %v2828 = vpop.f32.mrb[0].mxu0
        %v2829 = vpop.f32.mrb[0].mxu0
        %2830 = vdwg.mxu0
        %v2832 = vsel %vm2265, %v2724, 0
        %v2835 = vsel %vm2741, %v2732, 0
        %2837 = vmatprep.subr.bf16.mxu0 0
        %2838 = vmatpush1.bf16.msra.mxu0 %v2835
        %2839 = vmatprep.subr.bf16.mxu0 0
        %2840 = vmatpush1.bf16.msra.mxu0 0
        %2841 = vmatprep.subr.bf16.mxu0 0
        %2842 = vmatpush1.bf16.msra.mxu0 0
        %2843 = vmatprep.subr.bf16.mxu0 0
        %2844 = vmatpush1.bf16.msra.mxu0 0
        %2845 = vmatprep.subr.bf16.mxu0 0
        %2846 = vmatpush1.bf16.msra.mxu0 0
        %2847 = vmatprep.subr.bf16.mxu0 0
        %2848 = vmatpush1.bf16.msra.mxu0 0
        %2849 = vmatprep.subr.bf16.mxu0 0
        %2850 = vmatpush1.bf16.msra.mxu0 0
        %2851 = vmatprep.subr.bf16.mxu0 0
        %2852 = vmatpush1.bf16.msra.mxu0 0
        %2853 = vmatprep.subr.bf16.mxu0 0
        %2854 = vmatpush1.bf16.msra.mxu0 0
        %2855 = vmatprep.subr.bf16.mxu0 0
        %2856 = vmatpush1.bf16.msra.mxu0 0
        %2857 = vmatprep.subr.bf16.mxu0 0
        %2858 = vmatpush1.bf16.msra.mxu0 0
        %2859 = vmatprep.subr.bf16.mxu0 0
        %2860 = vmatpush1.bf16.msra.mxu0 0
        %2861 = vmatprep.subr.bf16.mxu0 0
        %2862 = vmatpush1.bf16.msra.mxu0 0
        %2863 = vmatprep.subr.bf16.mxu0 0
        %2864 = vmatpush1.bf16.msra.mxu0 0
        %2865 = vmatprep.subr.bf16.mxu0 0
        %2866 = vmatpush1.bf16.msra.mxu0 0
        %2867 = vmatprep.subr.bf16.mxu0 0
        %2868 = vmatpush1.bf16.msra.mxu0 0
        %2869 = vmatprep.mubr.bf16.mxu0 0
        %2870 = vmatmul.mubr.bf16.gmra.mrb[0].mxu0 %v2832
        %v2871 = vpop.f32.mrb[0].mxu0
        %v2872 = vadd.f32 0.0, %v2871
        %v2873 = vpop.f32.mrb[0].mxu0
        %v2874 = vpop.f32.mrb[0].mxu0
        %v2875 = vpop.f32.mrb[0].mxu0
        %2876 = vdwg.mxu0
        %v2878 = vsel %vm2265, %v2725, 0
        %v2881 = vsel %vm2741, %v2733, 0
        %2883 = vmatprep.subr.bf16.mxu0 0
        %2884 = vmatpush1.bf16.msra.mxu0 %v2881
        %2885 = vmatprep.subr.bf16.mxu0 0
        %2886 = vmatpush1.bf16.msra.mxu0 0
        %2887 = vmatprep.subr.bf16.mxu0 0
        %2888 = vmatpush1.bf16.msra.mxu0 0
        %2889 = vmatprep.subr.bf16.mxu0 0
        %2890 = vmatpush1.bf16.msra.mxu0 0
        %2891 = vmatprep.subr.bf16.mxu0 0
        %2892 = vmatpush1.bf16.msra.mxu0 0
        %2893 = vmatprep.subr.bf16.mxu0 0
        %2894 = vmatpush1.bf16.msra.mxu0 0
        %2895 = vmatprep.subr.bf16.mxu0 0
        %2896 = vmatpush1.bf16.msra.mxu0 0
        %2897 = vmatprep.subr.bf16.mxu0 0
        %2898 = vmatpush1.bf16.msra.mxu0 0
        %2899 = vmatprep.subr.bf16.mxu0 0
        %2900 = vmatpush1.bf16.msra.mxu0 0
        %2901 = vmatprep.subr.bf16.mxu0 0
        %2902 = vmatpush1.bf16.msra.mxu0 0
        %2903 = vmatprep.subr.bf16.mxu0 0
        %2904 = vmatpush1.bf16.msra.mxu0 0
        %2905 = vmatprep.subr.bf16.mxu0 0
        %2906 = vmatpush1.bf16.msra.mxu0 0
        %2907 = vmatprep.subr.bf16.mxu0 0
        %2908 = vmatpush1.bf16.msra.mxu0 0
        %2909 = vmatprep.subr.bf16.mxu0 0
        %2910 = vmatpush1.bf16.msra.mxu0 0
        %2911 = vmatprep.subr.bf16.mxu0 0
        %2912 = vmatpush1.bf16.msra.mxu0 0
        %2913 = vmatprep.subr.bf16.mxu0 0
        %2914 = vmatpush1.bf16.msra.mxu0 0
        %2915 = vmatprep.mubr.bf16.mxu0 0
        %2916 = vmatmul.mubr.bf16.gmra.mrb[0].mxu0 %v2878
        %v2917 = vpop.f32.mrb[0].mxu0
        %v2918 = vadd.f32 0.0, %v2917
        %v2919 = vpop.f32.mrb[0].mxu0
        %v2920 = vpop.f32.mrb[0].mxu0
        %v2921 = vpop.f32.mrb[0].mxu0
        %2922 = vdwg.mxu0
        %v2924 = vsel %vm2265, %v2726, 0
        %v2927 = vsel %vm2741, %v2734, 0
        %2929 = vmatprep.subr.bf16.mxu0 0
        %2930 = vmatpush1.bf16.msra.mxu0 %v2927
        %2931 = vmatprep.subr.bf16.mxu0 0
        %2932 = vmatpush1.bf16.msra.mxu0 0
        %2933 = vmatprep.subr.bf16.mxu0 0
        %2934 = vmatpush1.bf16.msra.mxu0 0
        %2935 = vmatprep.subr.bf16.mxu0 0
        %2936 = vmatpush1.bf16.msra.mxu0 0
        %2937 = vmatprep.subr.bf16.mxu0 0
        %2938 = vmatpush1.bf16.msra.mxu0 0
        %2939 = vmatprep.subr.bf16.mxu0 0
        %2940 = vmatpush1.bf16.msra.mxu0 0
        %2941 = vmatprep.subr.bf16.mxu0 0
        %2942 = vmatpush1.bf16.msra.mxu0 0
        %2943 = vmatprep.subr.bf16.mxu0 0
        %2944 = vmatpush1.bf16.msra.mxu0 0
        %2945 = vmatprep.subr.bf16.mxu0 0
        %2946 = vmatpush1.bf16.msra.mxu0 0
        %2947 = vmatprep.subr.bf16.mxu0 0
        %2948 = vmatpush1.bf16.msra.mxu0 0
        %2949 = vmatprep.subr.bf16.mxu0 0
        %2950 = vmatpush1.bf16.msra.mxu0 0
        %2951 = vmatprep.subr.bf16.mxu0 0
        %2952 = vmatpush1.bf16.msra.mxu0 0
        %2953 = vmatprep.subr.bf16.mxu0 0
        %2954 = vmatpush1.bf16.msra.mxu0 0
        %2955 = vmatprep.subr.bf16.mxu0 0
        %2956 = vmatpush1.bf16.msra.mxu0 0
        %2957 = vmatprep.subr.bf16.mxu0 0
        %2958 = vmatpush1.bf16.msra.mxu0 0
        %2959 = vmatprep.subr.bf16.mxu0 0
        %2960 = vmatpush1.bf16.msra.mxu0 0
        %2961 = vmatprep.mubr.bf16.mxu0 0
        %2962 = vmatmul.mubr.bf16.gmra.mrb[0].mxu0 %v2924
        %v2963 = vpop.f32.mrb[0].mxu0
        %v2964 = vadd.f32 0.0, %v2963
        %v2965 = vpop.f32.mrb[0].mxu0
        %v2966 = vpop.f32.mrb[0].mxu0
        %v2967 = vpop.f32.mrb[0].mxu0
        %2968 = vdwg.mxu0
        %v2970 = vsel %vm2265, %v2727, 0
        %v2973 = vsel %vm2741, %v2735, 0
        %2975 = vmatprep.subr.bf16.mxu0 0
        %2976 = vmatpush1.bf16.msra.mxu0 %v2973
        %2977 = vmatprep.subr.bf16.mxu0 0
        %2978 = vmatpush1.bf16.msra.mxu0 0
        %2979 = vmatprep.subr.bf16.mxu0 0
        %2980 = vmatpush1.bf16.msra.mxu0 0
        %2981 = vmatprep.subr.bf16.mxu0 0
        %2982 = vmatpush1.bf16.msra.mxu0 0
        %2983 = vmatprep.subr.bf16.mxu0 0
        %2984 = vmatpush1.bf16.msra.mxu0 0
        %2985 = vmatprep.subr.bf16.mxu0 0
        %2986 = vmatpush1.bf16.msra.mxu0 0
        %2987 = vmatprep.subr.bf16.mxu0 0
        %2988 = vmatpush1.bf16.msra.mxu0 0
        %2989 = vmatprep.subr.bf16.mxu0 0
        %2990 = vmatpush1.bf16.msra.mxu0 0
        %2991 = vmatprep.subr.bf16.mxu0 0
        %2992 = vmatpush1.bf16.msra.mxu0 0
        %2993 = vmatprep.subr.bf16.mxu0 0
        %2994 = vmatpush1.bf16.msra.mxu0 0
        %2995 = vmatprep.subr.bf16.mxu0 0
        %2996 = vmatpush1.bf16.msra.mxu0 0
        %2997 = vmatprep.subr.bf16.mxu0 0
        %2998 = vmatpush1.bf16.msra.mxu0 0
        %2999 = vmatprep.subr.bf16.mxu0 0
        %3000 = vmatpush1.bf16.msra.mxu0 0
        %3001 = vmatprep.subr.bf16.mxu0 0
        %3002 = vmatpush1.bf16.msra.mxu0 0
        %3003 = vmatprep.subr.bf16.mxu0 0
        %3004 = vmatpush1.bf16.msra.mxu0 0
        %3005 = vmatprep.subr.bf16.mxu0 0
        %3006 = vmatpush1.bf16.msra.mxu0 0
        %3007 = vmatprep.mubr.bf16.mxu0 0
        %3008 = vmatmul.mubr.bf16.gmra.mrb[0].mxu0 %v2970
        %v3009 = vpop.f32.mrb[0].mxu0
        %v3010 = vadd.f32 0.0, %v3009
        %v3011 = vpop.f32.mrb[0].mxu0
        %v3012 = vpop.f32.mrb[0].mxu0
        %v3013 = vpop.f32.mrb[0].mxu0
        %3014 = vdwg.mxu0
        %v3016 = vsel %vm2265, %v2728, 0
        %v3019 = vsel %vm2741, %v2736, 0
        %3021 = vmatprep.subr.bf16.mxu0 0
        %3022 = vmatpush1.bf16.msra.mxu0 %v3019
        %3023 = vmatprep.subr.bf16.mxu0 0
        %3024 = vmatpush1.bf16.msra.mxu0 0
        %3025 = vmatprep.subr.bf16.mxu0 0
        %3026 = vmatpush1.bf16.msra.mxu0 0
        %3027 = vmatprep.subr.bf16.mxu0 0
        %3028 = vmatpush1.bf16.msra.mxu0 0
        %3029 = vmatprep.subr.bf16.mxu0 0
        %3030 = vmatpush1.bf16.msra.mxu0 0
        %3031 = vmatprep.subr.bf16.mxu0 0
        %3032 = vmatpush1.bf16.msra.mxu0 0
        %3033 = vmatprep.subr.bf16.mxu0 0
        %3034 = vmatpush1.bf16.msra.mxu0 0
        %3035 = vmatprep.subr.bf16.mxu0 0
        %3036 = vmatpush1.bf16.msra.mxu0 0
        %3037 = vmatprep.subr.bf16.mxu0 0
        %3038 = vmatpush1.bf16.msra.mxu0 0
        %3039 = vmatprep.subr.bf16.mxu0 0
        %3040 = vmatpush1.bf16.msra.mxu0 0
        %3041 = vmatprep.subr.bf16.mxu0 0
        %3042 = vmatpush1.bf16.msra.mxu0 0
        %3043 = vmatprep.subr.bf16.mxu0 0
        %3044 = vmatpush1.bf16.msra.mxu0 0
        %3045 = vmatprep.subr.bf16.mxu0 0
        %3046 = vmatpush1.bf16.msra.mxu0 0
        %3047 = vmatprep.subr.bf16.mxu0 0
        %3048 = vmatpush1.bf16.msra.mxu0 0
        %3049 = vmatprep.subr.bf16.mxu0 0
        %3050 = vmatpush1.bf16.msra.mxu0 0
        %3051 = vmatprep.subr.bf16.mxu0 0
        %3052 = vmatpush1.bf16.msra.mxu0 0
        %3053 = vmatprep.mubr.bf16.mxu0 0
        %3054 = vmatmul.mubr.bf16.gmra.mrb[0].mxu0 %v3016
        %v3055 = vpop.f32.mrb[0].mxu0
        %v3056 = vadd.f32 0.0, %v3055
        %v3057 = vpop.f32.mrb[0].mxu0
        %v3058 = vpop.f32.mrb[0].mxu0
        %v3059 = vpop.f32.mrb[0].mxu0
        %3060 = vdwg.mxu0
        %v3062 = vsel %vm2265, %v2729, 0
        %v3065 = vsel %vm2741, %v2737, 0
        %3067 = vmatprep.subr.bf16.mxu0 0
        %3068 = vmatpush1.bf16.msra.mxu0 %v3065
        %3069 = vmatprep.subr.bf16.mxu0 0
        %3070 = vmatpush1.bf16.msra.mxu0 0
        %3071 = vmatprep.subr.bf16.mxu0 0
        %3072 = vmatpush1.bf16.msra.mxu0 0
        %3073 = vmatprep.subr.bf16.mxu0 0
        %3074 = vmatpush1.bf16.msra.mxu0 0
        %3075 = vmatprep.subr.bf16.mxu0 0
        %3076 = vmatpush1.bf16.msra.mxu0 0
        %3077 = vmatprep.subr.bf16.mxu0 0
        %3078 = vmatpush1.bf16.msra.mxu0 0
        %3079 = vmatprep.subr.bf16.mxu0 0
        %3080 = vmatpush1.bf16.msra.mxu0 0
        %3081 = vmatprep.subr.bf16.mxu0 0
        %3082 = vmatpush1.bf16.msra.mxu0 0
        %3083 = vmatprep.subr.bf16.mxu0 0
        %3084 = vmatpush1.bf16.msra.mxu0 0
        %3085 = vmatprep.subr.bf16.mxu0 0
        %3086 = vmatpush1.bf16.msra.mxu0 0
        %3087 = vmatprep.subr.bf16.mxu0 0
        %3088 = vmatpush1.bf16.msra.mxu0 0
        %3089 = vmatprep.subr.bf16.mxu0 0
        %3090 = vmatpush1.bf16.msra.mxu0 0
        %3091 = vmatprep.subr.bf16.mxu0 0
        %3092 = vmatpush1.bf16.msra.mxu0 0
        %3093 = vmatprep.subr.bf16.mxu0 0
        %3094 = vmatpush1.bf16.msra.mxu0 0
        %3095 = vmatprep.subr.bf16.mxu0 0
        %3096 = vmatpush1.bf16.msra.mxu0 0
        %3097 = vmatprep.subr.bf16.mxu0 0
        %3098 = vmatpush1.bf16.msra.mxu0 0
        %3099 = vmatprep.mubr.bf16.mxu0 0
        %3100 = vmatmul.mubr.bf16.gmra.mrb[0].mxu0 %v3062
        %v3101 = vpop.f32.mrb[0].mxu0
        %v3102 = vadd.f32 0.0, %v3101
        %v3103 = vpop.f32.mrb[0].mxu0
        %v3104 = vpop.f32.mrb[0].mxu0
        %v3105 = vpop.f32.mrb[0].mxu0
        %3106 = vdwg.mxu0
        %v3107 = vpack.c.bf16 %v2780, %v2780
        %v3108 = vpack.c.bf16 %v2826, %v2826
        %v3109 = vpack.c.bf16 %v2872, %v2872
        %v3110 = vpack.c.bf16 %v2918, %v2918
        %v3111 = vpack.c.bf16 %v2964, %v2964
        %v3112 = vpack.c.bf16 %v3010, %v3010
        %v3113 = vpack.c.bf16 %v3056, %v3056
        %v3114 = vpack.c.bf16 %v3102, %v3102
        %v3115 = vld [vmem:[%s5] sm:$0xf]
        %v3116 = vld [vmem:[%s5 + $0x4] sm:$0xf]
        %v3117 = vld [vmem:[%s5 + $0x8] sm:$0xf]
        %v3118 = vld [vmem:[%s5 + $0xc] sm:$0xf]
        %v3119 = vld [vmem:[%s5 + $0x10] sm:$0xf]
        %v3120 = vld [vmem:[%s5 + $0x14] sm:$0xf]
        %v3121 = vld [vmem:[%s5 + $0x18] sm:$0xf]
        %v3122 = vld [vmem:[%s5 + $0x1c] sm:$0xf]
        %v3124 = vsel %vm2265, %v3107, 0
        %v3127 = vsel %vm2741, %v3115, 0
        %3129 = vmatprep.subr.bf16.mxu0 0
        %3130 = vmatpush1.bf16.msra.mxu0 %v3127
        %3131 = vmatprep.subr.bf16.mxu0 0
        %3132 = vmatpush1.bf16.msra.mxu0 0
        %3133 = vmatprep.subr.bf16.mxu0 0
        %3134 = vmatpush1.bf16.msra.mxu0 0
        %3135 = vmatprep.subr.bf16.mxu0 0
        %3136 = vmatpush1.bf16.msra.mxu0 0
        %3137 = vmatprep.subr.bf16.mxu0 0
        %3138 = vmatpush1.bf16.msra.mxu0 0
        %3139 = vmatprep.subr.bf16.mxu0 0
        %3140 = vmatpush1.bf16.msra.mxu0 0
        %3141 = vmatprep.subr.bf16.mxu0 0
        %3142 = vmatpush1.bf16.msra.mxu0 0
        %3143 = vmatprep.subr.bf16.mxu0 0
        %3144 = vmatpush1.bf16.msra.mxu0 0
        %3145 = vmatprep.subr.bf16.mxu0 0
        %3146 = vmatpush1.bf16.msra.mxu0 0
        %3147 = vmatprep.subr.bf16.mxu0 0
        %3148 = vmatpush1.bf16.msra.mxu0 0
        %3149 = vmatprep.subr.bf16.mxu0 0
        %3150 = vmatpush1.bf16.msra.mxu0 0
        %3151 = vmatprep.subr.bf16.mxu0 0
        %3152 = vmatpush1.bf16.msra.mxu0 0
        %3153 = vmatprep.subr.bf16.mxu0 0
        %3154 = vmatpush1.bf16.msra.mxu0 0
        %3155 = vmatprep.subr.bf16.mxu0 0
        %3156 = vmatpush1.bf16.msra.mxu0 0
        %3157 = vmatprep.subr.bf16.mxu0 0
        %3158 = vmatpush1.bf16.msra.mxu0 0
        %3159 = vmatprep.subr.bf16.mxu0 0
        %3160 = vmatpush1.bf16.msra.mxu0 0
        %3161 = vmatprep.mubr.bf16.mxu0 0
        %3162 = vmatmul.mubr.bf16.gmra.mrb[0].mxu0 %v3124
        %v3163 = vpop.f32.mrb[0].mxu0
        %v3164 = vadd.f32 0.0, %v3163
        %v3165 = vpop.f32.mrb[0].mxu0
        %v3166 = vpop.f32.mrb[0].mxu0
        %v3167 = vpop.f32.mrb[0].mxu0
        %3168 = vdwg.mxu0
        %v3170 = vsel %vm2265, %v3108, 0
        %v3173 = vsel %vm2741, %v3116, 0
        %3175 = vmatprep.subr.bf16.mxu0 0
        %3176 = vmatpush1.bf16.msra.mxu0 %v3173
        %3177 = vmatprep.subr.bf16.mxu0 0
        %3178 = vmatpush1.bf16.msra.mxu0 0
        %3179 = vmatprep.subr.bf16.mxu0 0
        %3180 = vmatpush1.bf16.msra.mxu0 0
        %3181 = vmatprep.subr.bf16.mxu0 0
        %3182 = vmatpush1.bf16.msra.mxu0 0
        %3183 = vmatprep.subr.bf16.mxu0 0
        %3184 = vmatpush1.bf16.msra.mxu0 0
        %3185 = vmatprep.subr.bf16.mxu0 0
        %3186 = vmatpush1.bf16.msra.mxu0 0
        %3187 = vmatprep.subr.bf16.mxu0 0
        %3188 = vmatpush1.bf16.msra.mxu0 0
        %3189 = vmatprep.subr.bf16.mxu0 0
        %3190 = vmatpush1.bf16.msra.mxu0 0
        %3191 = vmatprep.subr.bf16.mxu0 0
        %3192 = vmatpush1.bf16.msra.mxu0 0
        %3193 = vmatprep.subr.bf16.mxu0 0
        %3194 = vmatpush1.bf16.msra.mxu0 0
        %3195 = vmatprep.subr.bf16.mxu0 0
        %3196 = vmatpush1.bf16.msra.mxu0 0
        %3197 = vmatprep.subr.bf16.mxu0 0
        %3198 = vmatpush1.bf16.msra.mxu0 0
        %3199 = vmatprep.subr.bf16.mxu0 0
        %3200 = vmatpush1.bf16.msra.mxu0 0
        %3201 = vmatprep.subr.bf16.mxu0 0
        %3202 = vmatpush1.bf16.msra.mxu0 0
        %3203 = vmatprep.subr.bf16.mxu0 0
        %3204 = vmatpush1.bf16.msra.mxu0 0
        %3205 = vmatprep.subr.bf16.mxu0 0
        %3206 = vmatpush1.bf16.msra.mxu0 0
        %3207 = vmatprep.mubr.bf16.mxu0 0
        %3208 = vmatmul.mubr.bf16.gmra.mrb[0].mxu0 %v3170
        %v3209 = vpop.f32.mrb[0].mxu0
        %v3210 = vadd.f32 0.0, %v3209
        %v3211 = vpop.f32.mrb[0].mxu0
        %v3212 = vpop.f32.mrb[0].mxu0
        %v3213 = vpop.f32.mrb[0].mxu0
        %3214 = vdwg.mxu0
        %v3216 = vsel %vm2265, %v3109, 0
        %v3219 = vsel %vm2741, %v3117, 0
        %3221 = vmatprep.subr.bf16.mxu0 0
        %3222 = vmatpush1.bf16.msra.mxu0 %v3219
        %3223 = vmatprep.subr.bf16.mxu0 0
        %3224 = vmatpush1.bf16.msra.mxu0 0
        %3225 = vmatprep.subr.bf16.mxu0 0
        %3226 = vmatpush1.bf16.msra.mxu0 0
        %3227 = vmatprep.subr.bf16.mxu0 0
        %3228 = vmatpush1.bf16.msra.mxu0 0
        %3229 = vmatprep.subr.bf16.mxu0 0
        %3230 = vmatpush1.bf16.msra.mxu0 0
        %3231 = vmatprep.subr.bf16.mxu0 0
        %3232 = vmatpush1.bf16.msra.mxu0 0
        %3233 = vmatprep.subr.bf16.mxu0 0
        %3234 = vmatpush1.bf16.msra.mxu0 0
        %3235 = vmatprep.subr.bf16.mxu0 0
        %3236 = vmatpush1.bf16.msra.mxu0 0
        %3237 = vmatprep.subr.bf16.mxu0 0
        %3238 = vmatpush1.bf16.msra.mxu0 0
        %3239 = vmatprep.subr.bf16.mxu0 0
        %3240 = vmatpush1.bf16.msra.mxu0 0
        %3241 = vmatprep.subr.bf16.mxu0 0
        %3242 = vmatpush1.bf16.msra.mxu0 0
        %3243 = vmatprep.subr.bf16.mxu0 0
        %3244 = vmatpush1.bf16.msra.mxu0 0
        %3245 = vmatprep.subr.bf16.mxu0 0
        %3246 = vmatpush1.bf16.msra.mxu0 0
        %3247 = vmatprep.subr.bf16.mxu0 0
        %3248 = vmatpush1.bf16.msra.mxu0 0
        %3249 = vmatprep.subr.bf16.mxu0 0
        %3250 = vmatpush1.bf16.msra.mxu0 0
        %3251 = vmatprep.subr.bf16.mxu0 0
        %3252 = vmatpush1.bf16.msra.mxu0 0
        %3253 = vmatprep.mubr.bf16.mxu0 0
        %3254 = vmatmul.mubr.bf16.gmra.mrb[0].mxu0 %v3216
        %v3255 = vpop.f32.mrb[0].mxu0
        %v3256 = vadd.f32 0.0, %v3255
        %v3257 = vpop.f32.mrb[0].mxu0
        %v3258 = vpop.f32.mrb[0].mxu0
        %v3259 = vpop.f32.mrb[0].mxu0
        %3260 = vdwg.mxu0
        %v3262 = vsel %vm2265, %v3110, 0
        %v3265 = vsel %vm2741, %v3118, 0
        %3267 = vmatprep.subr.bf16.mxu0 0
        %3268 = vmatpush1.bf16.msra.mxu0 %v3265
        %3269 = vmatprep.subr.bf16.mxu0 0
        %3270 = vmatpush1.bf16.msra.mxu0 0
        %3271 = vmatprep.subr.bf16.mxu0 0
        %3272 = vmatpush1.bf16.msra.mxu0 0
        %3273 = vmatprep.subr.bf16.mxu0 0
        %3274 = vmatpush1.bf16.msra.mxu0 0
        %3275 = vmatprep.subr.bf16.mxu0 0
        %3276 = vmatpush1.bf16.msra.mxu0 0
        %3277 = vmatprep.subr.bf16.mxu0 0
        %3278 = vmatpush1.bf16.msra.mxu0 0
        %3279 = vmatprep.subr.bf16.mxu0 0
        %3280 = vmatpush1.bf16.msra.mxu0 0
        %3281 = vmatprep.subr.bf16.mxu0 0
        %3282 = vmatpush1.bf16.msra.mxu0 0
        %3283 = vmatprep.subr.bf16.mxu0 0
        %3284 = vmatpush1.bf16.msra.mxu0 0
        %3285 = vmatprep.subr.bf16.mxu0 0
        %3286 = vmatpush1.bf16.msra.mxu0 0
        %3287 = vmatprep.subr.bf16.mxu0 0
        %3288 = vmatpush1.bf16.msra.mxu0 0
        %3289 = vmatprep.subr.bf16.mxu0 0
        %3290 = vmatpush1.bf16.msra.mxu0 0
        %3291 = vmatprep.subr.bf16.mxu0 0
        %3292 = vmatpush1.bf16.msra.mxu0 0
        %3293 = vmatprep.subr.bf16.mxu0 0
        %3294 = vmatpush1.bf16.msra.mxu0 0
        %3295 = vmatprep.subr.bf16.mxu0 0
        %3296 = vmatpush1.bf16.msra.mxu0 0
        %3297 = vmatprep.subr.bf16.mxu0 0
        %3298 = vmatpush1.bf16.msra.mxu0 0
        %3299 = vmatprep.mubr.bf16.mxu0 0
        %3300 = vmatmul.mubr.bf16.gmra.mrb[0].mxu0 %v3262
        %v3301 = vpop.f32.mrb[0].mxu0
        %v3302 = vadd.f32 0.0, %v3301
        %v3303 = vpop.f32.mrb[0].mxu0
        %v3304 = vpop.f32.mrb[0].mxu0
        %v3305 = vpop.f32.mrb[0].mxu0
        %3306 = vdwg.mxu0
        %v3308 = vsel %vm2265, %v3111, 0
        %v3311 = vsel %vm2741, %v3119, 0
        %3313 = vmatprep.subr.bf16.mxu0 0
        %3314 = vmatpush1.bf16.msra.mxu0 %v3311
        %3315 = vmatprep.subr.bf16.mxu0 0
        %3316 = vmatpush1.bf16.msra.mxu0 0
        %3317 = vmatprep.subr.bf16.mxu0 0
        %3318 = vmatpush1.bf16.msra.mxu0 0
        %3319 = vmatprep.subr.bf16.mxu0 0
        %3320 = vmatpush1.bf16.msra.mxu0 0
        %3321 = vmatprep.subr.bf16.mxu0 0
        %3322 = vmatpush1.bf16.msra.mxu0 0
        %3323 = vmatprep.subr.bf16.mxu0 0
        %3324 = vmatpush1.bf16.msra.mxu0 0
        %3325 = vmatprep.subr.bf16.mxu0 0
        %3326 = vmatpush1.bf16.msra.mxu0 0
        %3327 = vmatprep.subr.bf16.mxu0 0
        %3328 = vmatpush1.bf16.msra.mxu0 0
        %3329 = vmatprep.subr.bf16.mxu0 0
        %3330 = vmatpush1.bf16.msra.mxu0 0
        %3331 = vmatprep.subr.bf16.mxu0 0
        %3332 = vmatpush1.bf16.msra.mxu0 0
        %3333 = vmatprep.subr.bf16.mxu0 0
        %3334 = vmatpush1.bf16.msra.mxu0 0
        %3335 = vmatprep.subr.bf16.mxu0 0
        %3336 = vmatpush1.bf16.msra.mxu0 0
        %3337 = vmatprep.subr.bf16.mxu0 0
        %3338 = vmatpush1.bf16.msra.mxu0 0
        %3339 = vmatprep.subr.bf16.mxu0 0
        %3340 = vmatpush1.bf16.msra.mxu0 0
        %3341 = vmatprep.subr.bf16.mxu0 0
        %3342 = vmatpush1.bf16.msra.mxu0 0
        %3343 = vmatprep.subr.bf16.mxu0 0
        %3344 = vmatpush1.bf16.msra.mxu0 0
        %3345 = vmatprep.mubr.bf16.mxu0 0
        %3346 = vmatmul.mubr.bf16.gmra.mrb[0].mxu0 %v3308
        %v3347 = vpop.f32.mrb[0].mxu0
        %v3348 = vadd.f32 0.0, %v3347
        %v3349 = vpop.f32.mrb[0].mxu0
        %v3350 = vpop.f32.mrb[0].mxu0
        %v3351 = vpop.f32.mrb[0].mxu0
        %3352 = vdwg.mxu0
        %v3354 = vsel %vm2265, %v3112, 0
        %v3357 = vsel %vm2741, %v3120, 0
        %3359 = vmatprep.subr.bf16.mxu0 0
        %3360 = vmatpush1.bf16.msra.mxu0 %v3357
        %3361 = vmatprep.subr.bf16.mxu0 0
        %3362 = vmatpush1.bf16.msra.mxu0 0
        %3363 = vmatprep.subr.bf16.mxu0 0
        %3364 = vmatpush1.bf16.msra.mxu0 0
        %3365 = vmatprep.subr.bf16.mxu0 0
        %3366 = vmatpush1.bf16.msra.mxu0 0
        %3367 = vmatprep.subr.bf16.mxu0 0
        %3368 = vmatpush1.bf16.msra.mxu0 0
        %3369 = vmatprep.subr.bf16.mxu0 0
        %3370 = vmatpush1.bf16.msra.mxu0 0
        %3371 = vmatprep.subr.bf16.mxu0 0
        %3372 = vmatpush1.bf16.msra.mxu0 0
        %3373 = vmatprep.subr.bf16.mxu0 0
        %3374 = vmatpush1.bf16.msra.mxu0 0
        %3375 = vmatprep.subr.bf16.mxu0 0
        %3376 = vmatpush1.bf16.msra.mxu0 0
        %3377 = vmatprep.subr.bf16.mxu0 0
        %3378 = vmatpush1.bf16.msra.mxu0 0
        %3379 = vmatprep.subr.bf16.mxu0 0
        %3380 = vmatpush1.bf16.msra.mxu0 0
        %3381 = vmatprep.subr.bf16.mxu0 0
        %3382 = vmatpush1.bf16.msra.mxu0 0
        %3383 = vmatprep.subr.bf16.mxu0 0
        %3384 = vmatpush1.bf16.msra.mxu0 0
        %3385 = vmatprep.subr.bf16.mxu0 0
        %3386 = vmatpush1.bf16.msra.mxu0 0
        %3387 = vmatprep.subr.bf16.mxu0 0
        %3388 = vmatpush1.bf16.msra.mxu0 0
        %3389 = vmatprep.subr.bf16.mxu0 0
        %3390 = vmatpush1.bf16.msra.mxu0 0
        %3391 = vmatprep.mubr.bf16.mxu0 0
        %3392 = vmatmul.mubr.bf16.gmra.mrb[0].mxu0 %v3354
        %v3393 = vpop.f32.mrb[0].mxu0
        %v3394 = vadd.f32 0.0, %v3393
        %v3395 = vpop.f32.mrb[0].mxu0
        %v3396 = vpop.f32.mrb[0].mxu0
        %v3397 = vpop.f32.mrb[0].mxu0
        %3398 = vdwg.mxu0
        %v3400 = vsel %vm2265, %v3113, 0
        %v3403 = vsel %vm2741, %v3121, 0
        %3405 = vmatprep.subr.bf16.mxu0 0
        %3406 = vmatpush1.bf16.msra.mxu0 %v3403
        %3407 = vmatprep.subr.bf16.mxu0 0
        %3408 = vmatpush1.bf16.msra.mxu0 0
        %3409 = vmatprep.subr.bf16.mxu0 0
        %3410 = vmatpush1.bf16.msra.mxu0 0
        %3411 = vmatprep.subr.bf16.mxu0 0
        %3412 = vmatpush1.bf16.msra.mxu0 0
        %3413 = vmatprep.subr.bf16.mxu0 0
        %3414 = vmatpush1.bf16.msra.mxu0 0
        %3415 = vmatprep.subr.bf16.mxu0 0
        %3416 = vmatpush1.bf16.msra.mxu0 0
        %3417 = vmatprep.subr.bf16.mxu0 0
        %3418 = vmatpush1.bf16.msra.mxu0 0
        %3419 = vmatprep.subr.bf16.mxu0 0
        %3420 = vmatpush1.bf16.msra.mxu0 0
        %3421 = vmatprep.subr.bf16.mxu0 0
        %3422 = vmatpush1.bf16.msra.mxu0 0
        %3423 = vmatprep.subr.bf16.mxu0 0
        %3424 = vmatpush1.bf16.msra.mxu0 0
        %3425 = vmatprep.subr.bf16.mxu0 0
        %3426 = vmatpush1.bf16.msra.mxu0 0
        %3427 = vmatprep.subr.bf16.mxu0 0
        %3428 = vmatpush1.bf16.msra.mxu0 0
        %3429 = vmatprep.subr.bf16.mxu0 0
        %3430 = vmatpush1.bf16.msra.mxu0 0
        %3431 = vmatprep.subr.bf16.mxu0 0
        %3432 = vmatpush1.bf16.msra.mxu0 0
        %3433 = vmatprep.subr.bf16.mxu0 0
        %3434 = vmatpush1.bf16.msra.mxu0 0
        %3435 = vmatprep.subr.bf16.mxu0 0
        %3436 = vmatpush1.bf16.msra.mxu0 0
        %3437 = vmatprep.mubr.bf16.mxu0 0
        %3438 = vmatmul.mubr.bf16.gmra.mrb[0].mxu0 %v3400
        %v3439 = vpop.f32.mrb[0].mxu0
        %v3440 = vadd.f32 0.0, %v3439
        %v3441 = vpop.f32.mrb[0].mxu0
        %v3442 = vpop.f32.mrb[0].mxu0
        %v3443 = vpop.f32.mrb[0].mxu0
        %3444 = vdwg.mxu0
        %v3446 = vsel %vm2265, %v3114, 0
        %v3449 = vsel %vm2741, %v3122, 0
        %3451 = vmatprep.subr.bf16.mxu0 0
        %3452 = vmatpush1.bf16.msra.mxu0 %v3449
        %3453 = vmatprep.subr.bf16.mxu0 0
        %3454 = vmatpush1.bf16.msra.mxu0 0
        %3455 = vmatprep.subr.bf16.mxu0 0
        %3456 = vmatpush1.bf16.msra.mxu0 0
        %3457 = vmatprep.subr.bf16.mxu0 0
        %3458 = vmatpush1.bf16.msra.mxu0 0
        %3459 = vmatprep.subr.bf16.mxu0 0
        %3460 = vmatpush1.bf16.msra.mxu0 0
        %3461 = vmatprep.subr.bf16.mxu0 0
        %3462 = vmatpush1.bf16.msra.mxu0 0
        %3463 = vmatprep.subr.bf16.mxu0 0
        %3464 = vmatpush1.bf16.msra.mxu0 0
        %3465 = vmatprep.subr.bf16.mxu0 0
        %3466 = vmatpush1.bf16.msra.mxu0 0
        %3467 = vmatprep.subr.bf16.mxu0 0
        %3468 = vmatpush1.bf16.msra.mxu0 0
        %3469 = vmatprep.subr.bf16.mxu0 0
        %3470 = vmatpush1.bf16.msra.mxu0 0
        %3471 = vmatprep.subr.bf16.mxu0 0
        %3472 = vmatpush1.bf16.msra.mxu0 0
        %3473 = vmatprep.subr.bf16.mxu0 0
        %3474 = vmatpush1.bf16.msra.mxu0 0
        %3475 = vmatprep.subr.bf16.mxu0 0
        %3476 = vmatpush1.bf16.msra.mxu0 0
        %3477 = vmatprep.subr.bf16.mxu0 0
        %3478 = vmatpush1.bf16.msra.mxu0 0
        %3479 = vmatprep.subr.bf16.mxu0 0
        %3480 = vmatpush1.bf16.msra.mxu0 0
        %3481 = vmatprep.subr.bf16.mxu0 0
        %3482 = vmatpush1.bf16.msra.mxu0 0
        %3483 = vmatprep.mubr.bf16.mxu0 0
        %3484 = vmatmul.mubr.bf16.gmra.mrb[0].mxu0 %v3446
        %v3485 = vpop.f32.mrb[0].mxu0
        %v3486 = vadd.f32 0.0, %v3485
        %v3487 = vpop.f32.mrb[0].mxu0
        %v3488 = vpop.f32.mrb[0].mxu0
        %v3489 = vpop.f32.mrb[0].mxu0
        %3490 = vdwg.mxu0
        %v3491 = vadd.f32 %v3164, %v3210
        %v3492 = vadd.f32 %v3491, %v3256
        %v3493 = vadd.f32 %v3492, %v3302
        %v3494 = vadd.f32 %v3493, %v3348
        %v3495 = vadd.f32 %v3494, %v3394
        %v3496 = vadd.f32 %v3495, %v3440
        %v3497 = vadd.f32 %v3496, %v3486
        %v3498 = vld [vmem:[%s6] sm:$0x1]
        %v3500 = vlaneseq
        %v3501 = vshrl.u32 %v3500, 7
        %v3502 = vsub.s32 0, %v3501
        %v3503 = vrot.slane %v3498, %v3502
        %v3505 = vadd.f32 %v3497, %v3503
        %3506 = vst [vmem:[%s269] sm:$0xff] %v3505
        %s3507 = sand.u32 %s181, 1
        %s3508 = scalar_lea.sflag [#allocation3], %s3507
        %s3509 = sand.u32 %s181, 1
        %s3510 = smul.addr %s3509, 8
        %s3511 = scalar_lea.vmem [#allocation2], %s3510
        // Predicated region
        $region49: #{tpu_custom_call.1} parent=47 // pred_check
          %p3512 = pneg %p191
        $region50: #{tpu_custom_call.1} parent=47 // pred_check_branch
          %3514 = sbr.rel (%p3512) target = $region52
        $region51: #{tpu_custom_call.1} parent=47 // pred_region
          %s3516 = ssub.s32 128, 128
          %3517 = vsyncadd %s3508, %s3516
          %s3518 = smul.addr %s21, 128
          %s3519 = scalar_lea.hbm %s7, %s3518
          %s3521 = sshll.u32 %s3511, 4
          %s3522 = int_to_ptr.vmem [resolvable:$true] %s3521
          %3524 = dma.vmem_to_hbm [thread:$0]  %s3522, 128, %s3519, %s3508
        $region52: #{tpu_custom_call.1} parent=47 // pred_fallthru
          _
      $region48: #{tpu_custom_call.1} parent=5 // pred_fallthru
        _
      %p3525 = scmp.le.s32.totalorder 2, %s16
      // Predicated region
      $region53: #{tpu_custom_call.1} parent=5 // pred_check
        %p3526 = pneg %p3525
      $region54: #{tpu_custom_call.1} parent=5 // pred_check_branch
        %3528 = sbr.rel (%p3526) target = $region56
      $region55: #{tpu_custom_call.1} parent=5 // pred_region
        %s3529 = ssub.s32 %s16, 2
        // Predicated region
        $region57: #{tpu_custom_call.1} parent=55 // pred_check
          %p3530 = pneg %p197
        $region58: #{tpu_custom_call.1} parent=55 // pred_check_branch
          %3532 = sbr.rel (%p3530) target = $region60
        $region59: #{tpu_custom_call.1} parent=55 // pred_region
          %s3533 = sand.u32 %s182, 1
          %s3534 = scalar_lea.sflag [#allocation3], %s3533
          %s3535 = sand.u32 %s182, 1
          %s3536 = smul.addr %s3535, 8
          %s3537 = scalar_lea.vmem [#allocation2], %s3536
          %3538 = dma.done %s3534, 128
        $region60: #{tpu_custom_call.1} parent=55 // pred_fallthru
          _
      $region56: #{tpu_custom_call.1} parent=5 // pred_fallthru
        _
    $region6: #{tpu_custom_call.1} parent=1 // loop_footer
      %s20 = sadd.s32 1, %s16
    $region7: #{tpu_custom_call.1} parent=1 // loop_footer_branch
      %15 = sbr.rel target = $region3
    $region8: #{tpu_custom_call.1} parent=1 // loop_exit
      _
    %3539 = vsyncpa [#allocation3], 1
    %s3540 = scalar_lea.sflag [#allocation3], 1
    %3541 = vsyncpa %s3540, 1

</llo_original>
